<compile_context>
chip_gen: v7x
topology: tpu7x:2x2x1
jax: 0.10.0
libtpu: 0.0.40
codegen_flags: <defaults>
</compile_context>

<pallas_src>
import functools

import jax
import jax.numpy as jnp
from jax.experimental import pallas as pl
from jax.experimental.pallas import tpu as pltpu


def _ceil_to(v, m):
    return (v + m - 1) // m * m


def _pick_strip(rows, cols, target_m=256):
    """Rows per strip so the flattened matmul M dim is >= target_m when possible."""
    if rows <= 0:
        return 1
    s = max(1, -(-target_m // max(cols, 1)))   # ceil(target_m / cols)
    return min(rows, s)


# ---------------------------------------------------------------------------
# Fused MBConv kernel (one grid step == one image)
# ---------------------------------------------------------------------------

def _fused_mbconv_kernel(*refs, k, stride, h, w, pad, hp, wp, h_out, w_out,
                         has_expand, use_se, use_res):
    # refs = (*inputs, out_ref, expanded_scratch_ref, dwconv_scratch_ref)
    *in_refs, o_ref, e_ref, d_ref = refs

    idx = 0
    x_ref = in_refs[idx]; idx += 1                                  # (1, h, w, cin) unpadded
    if has_expand:
        ew_ref, es_ref, eb_ref = in_refs[idx:idx + 3]; idx += 3
    dw_ref, ds_ref, db_ref = in_refs[idx:idx + 3]; idx += 3
    if use_se:
        w1_ref, b1_ref, w2_ref, b2_ref = in_refs[idx:idx + 4]; idx += 4
    pw_ref, ps_ref, pb_ref = in_refs[idx:idx + 3]; idx += 3

    cin = x_ref.shape[-1]
    cexp = e_ref.shape[-1]
    cout = o_ref.shape[-1]
    f32 = jnp.float32

    # ---- Hoisted invariant loads (avoid re-emitting broadcasts inside unrolled loops)
    ds_vec, db_vec = ds_ref[0, :], db_ref[0, :]
    ps_vec, pb_vec = ps_ref[0, :], pb_ref[0, :]
    pw = pw_ref[...]
    if has_expand:
        ew = ew_ref[...]
        es_vec, eb_vec = es_ref[0, :], eb_ref[0, :]

    # ---- Stage 0: zero ONLY the halo of the padded expanded scratch (once) ----------
    if pad > 0:
        e_ref[0:pad, :, :] = jnp.zeros((pad, wp, cexp), f32)
        e_ref[pad + h:hp, :, :] = jnp.zeros((hp - pad - h, wp, cexp), f32)
        e_ref[:, 0:pad, :] = jnp.zeros((hp, pad, cexp), f32)
        e_ref[:, pad + w:wp, :] = jnp.zeros((hp, pad, cexp), f32)

    # ---- Stage 1: expand 1x1 conv + folded BN + ReLU, strip-sized matmuls ------------
    strip_in = _pick_strip(h, w)
    for r0 in range(0, h, strip_in):
        r1 = min(r0 + strip_in, h)
        rows = r1 - r0
        x_strip = x_ref[0, r0:r1, :, :].astype(f32)                 # (rows, w, cin)
        if has_expand:
            y = jnp.dot(x_strip.reshape(rows * w, cin), ew,
                        preferred_element_type=f32)                 # (rows*w, cexp)
            y = jnp.maximum(y * es_vec + eb_vec, 0.0)
            e_ref[pad + r0:pad + r1, pad:pad + w, :] = y.reshape(rows, w, cexp)
        else:
            e_ref[pad + r0:pad + r1, pad:pad + w, :] = x_strip

    # ---- Stage 2: depthwise kxk conv, taps accumulated into the VMEM d-scratch ------
    first = True
    for kh in range(k):
        for kw in range(k):
            if stride == 1:
                patch = e_ref[kh:kh + h_out, kw:kw + w_out, :]
            else:
                sub = e_ref[kh:kh + (h_out - 1) * stride + 1,
                            kw:kw + (w_out - 1) * stride + 1, :]
                patch = jax.lax.slice(sub, (0, 0, 0), sub.shape,
                                      (stride, stride, 1))
            tap = dw_ref[kh, kw, :]                                 # (cexp,)
            if first:
                d_ref[...] = patch * tap
                first = False
            else:
                d_ref[...] = d_ref[...] + patch * tap

    strip_out = _pick_strip(h_out, w_out)

    # ---- Stage 3: SqueezeExcitation — only the (1, cexp) gate is materialised -------
    if use_se:
        se_sum = jnp.zeros((1, cexp), f32)
        for r0 in range(0, h_out, strip_out):
            r1 = min(r0 + strip_out, h_out)
            dd = jnp.maximum(d_ref[r0:r1] * ds_vec + db_vec, 0.0)
            se_sum = se_sum + jnp.sum(dd, axis=(0, 1)).reshape(1, cexp)
        pooled = se_sum * (1.0 / float(h_out * w_out))
        s = jnp.dot(pooled, w1_ref[...], preferred_element_type=f32) + b1_ref[...]
        s = jnp.maximum(s, 0.0)
        s = jnp.dot(s, w2_ref[...], preferred_element_type=f32) + b2_ref[...]
        gate = jax.nn.sigmoid(s)[0, :]                              # (cexp,)

    # ---- Stage 4: project 1x1 conv + folded BN (+ residual), strip matmuls + slab store
    for r0 in range(0, h_out, strip_out):
        r1 = min(r0 + strip_out, h_out)
        rows = r1 - r0
        dd = jnp.maximum(d_ref[r0:r1] * ds_vec + db_vec, 0.0)       # dwconv BN + ReLU
        if use_se:
            dd = dd * gate
        y = jnp.dot(dd.reshape(rows * w_out, cexp), pw,
                    preferred_element_type=f32)                     # (rows*w_out, cout)
        y = y * ps_vec + pb_vec
        if use_res:  # stride == 1 and cin == cout  =>  h_out == h, w_out == w
            y = y + x_ref[0, r0:r1, :, :].astype(f32).reshape(rows * w, cin)
        o_ref[0, r0:r1, :, :] = y.reshape(rows, w_out, cout).astype(o_ref.dtype)


# ---------------------------------------------------------------------------
# Full InvertedResidual forward — one pallas_call
# ---------------------------------------------------------------------------

def inverted_residual_forward_nhwc(x, params, cfg):
    n, h, w, cin = x.shape
    cexp, cout = cfg["expanded_c"], cfg["out_c"]
    k, stride = cfg["kernel"], cfg["stride"]
    pad = (k - 1) // 2
    hp, wp = h + 2 * pad, w + 2 * pad
    h_out = (hp - k) // stride + 1
    w_out = (wp - k) // stride + 1
    has_expand = cexp != cin
    use_se = bool(cfg["use_se"])
    use_res = (stride == 1) and (cin == cout)

    def rep(shape):  # replicated (reused every grid step) operand
        nd = len(shape)
        return pl.BlockSpec(shape, lambda i, _n=nd: (0,) * _n)

    args = [x]
    in_specs = [pl.BlockSpec((1, h, w, cin), lambda i: (i, 0, 0, 0))]
    if has_expand:
        args += [params["expand_w"], params["expand_scale"], params["expand_bias"]]
        in_specs += [rep((cin, cexp)), rep((1, cexp)), rep((1, cexp))]
    args += [params["dw_w"], params["dw_scale"], params["dw_bias"]]
    in_specs += [rep((k, k, cexp)), rep((1, cexp)), rep((1, cexp))]
    if use_se:
        csq = params["se_w1"].shape[1]
        args += [params["se_w1"], params["se_b1"], params["se_w2"], params["se_b2"]]
        in_specs += [rep((cexp, csq)), rep((1, csq)), rep((csq, cexp)), rep((1, cexp))]
    args += [params["proj_w"], params["proj_scale"], params["proj_bias"]]
    in_specs += [rep((cexp, cout)), rep((1, cout)), rep((1, cout))]

    kernel = functools.partial(
        _fused_mbconv_kernel, k=k, stride=stride, h=h, w=w, pad=pad,
        hp=hp, wp=wp, h_out=h_out, w_out=w_out,
        has_expand=has_expand, use_se=use_se, use_res=use_res)

    # Scoped-VMEM budget: scratches + double-buffered I/O blocks + replicated weights.
    def arr_bytes(shape):
        b = 4
        for i, s in enumerate(shape):
            if i == len(shape) - 1:
                b *= _ceil_to(s, 128)       # lane padding
            elif i == len(shape) - 2:
                b *= _ceil_to(s, 8)         # sublane padding
            else:
                b *= s
        return b

    est = (arr_bytes((hp, wp, cexp)) + arr_bytes((h_out, w_out, cexp))
           + 2 * (arr_bytes((1, h, w, cin)) + arr_bytes((1, h_out, w_out, cout)))
           + 2 * sum(arr_bytes(a.shape) for a in args[1:]))
    vmem_limit = int(min(64 * 1024 * 1024, max(24 * 1024 * 1024, 2 * est)))

    out = pl.pallas_call(
        kernel,
        out_shape=jax.ShapeDtypeStruct((n, h_out, w_out, cout), x.dtype),
        grid=(n,),
        in_specs=in_specs,
        out_specs=pl.BlockSpec((1, h_out, w_out, cout), lambda i: (i, 0, 0, 0)),
        scratch_shapes=[pltpu.VMEM((hp, wp, cexp), jnp.float32),
                        pltpu.VMEM((h_out, w_out, cexp), jnp.float32)],
        compiler_params=pltpu.CompilerParams(
            dimension_semantics=("parallel",),
            vmem_limit_bytes=vmem_limit),
    )(*args)
    return out


def inverted_residual_forward(x_nchw, params, cfg):
    # TODO(synk): keep activations NHWC across consecutive MBConv blocks; these boundary
    # transposes exist only to match PyTorch-style NCHW I/O in this standalone test.
    x = jnp.transpose(x_nchw, (0, 2, 3, 1))                         # NCHW -> NHWC
    out = inverted_residual_forward_nhwc(x, params, cfg)
    # TODO(synk): DropPath (stochastic depth) is training-only; identity at inference.
    return jnp.transpose(out, (0, 3, 1, 2))                         # NHWC -> NCHW


# ---------------------------------------------------------------------------
# Pure-JAX reference (for verification)
# ---------------------------------------------------------------------------

def reference_forward(x_nchw, params, cfg):
    x = jnp.transpose(x_nchw, (0, 2, 3, 1)).astype(jnp.float32)
    n, h, w, cin = x.shape
    cexp, cout = cfg["expanded_c"], cfg["out_c"]

    h_cur = x
    if cexp != cin:
        y = jnp.einsum("nhwc,cd->nhwd", h_cur, params["expand_w"])
        y = y * params["expand_scale"][0] + params["expand_bias"][0]
        h_cur = jnp.maximum(y, 0.0)

    pad = (cfg["kernel"] - 1) // 2
    dw = params["dw_w"].reshape(cfg["kernel"], cfg["kernel"], 1, cexp)
    y = jax.lax.conv_general_dilated(
        h_cur, dw, window_strides=(cfg["stride"], cfg["stride"]),
        padding=((pad, pad), (pad, pad)),
        dimension_numbers=("NHWC", "HWIO", "NHWC"),
        feature_group_count=cexp)
    y = y * params["dw_scale"][0] + params["dw_bias"][0]
    h_cur = jnp.maximum(y, 0.0)

    if cfg["use_se"]:
        pooled = jnp.mean(h_cur, axis=(1, 2))                       # (N, Cexp)
        s = jnp.maximum(pooled @ params["se_w1"] + params["se_b1"][0], 0.0)
        s = jax.nn.sigmoid(s @ params["se_w2"] + params["se_b2"][0])
        h_cur = h_cur * s[:, None, None, :]

    y = jnp.einsum("nhwc,cd->nhwd", h_cur, params["proj_w"])
    y = y * params["proj_scale"][0] + params["proj_bias"][0]
    if cfg["stride"] == 1 and cin == cout:
        y = y + x
    return jnp.transpose(y, (0, 3, 1, 2))


# ---------------------------------------------------------------------------
# Deterministic parameter init (folded BN) + main
# ---------------------------------------------------------------------------

def _make_bn(key, c, eps=1e-3):
    k1, k2, k3, k4 = jax.random.split(key, 4)
    gamma = 1.0 + 0.1 * jax.random.normal(k1, (c,), jnp.float32)
    beta = 0.1 * jax.random.normal(k2, (c,), jnp.float32)
    mean = 0.1 * jax.random.normal(k3, (c,), jnp.float32)
    var = 1.0 + 0.1 * jnp.abs(jax.random.normal(k4, (c,), jnp.float32))
    scale = gamma / jnp.sqrt(var + eps)
    bias = beta - mean * scale
    return scale.reshape(1, c), bias.reshape(1, c)


if __name__ == "__main__":
    # InvertedResidualConfig(kernel=3, input_c=16, out_c=16, expanded_ratio=4,
    #                        stride=1, use_se=True, drop_rate=0.2, width_coeff=1.0)
    # -> input_c=16, expanded_c=64, out_c=16, squeeze_c = input_c // 4 = 4
    cfg = dict(kernel=3, input_c=16, expanded_c=64, out_c=16, stride=1, use_se=True)
    cin, cexp, cout = cfg["input_c"], cfg["expanded_c"], cfg["out_c"]
    csq = cfg["input_c"] // 4
    k = cfg["kernel"]

    key = jax.random.PRNGKey(0)
    keys = jax.random.split(key, 12)

    params = {}
    params["expand_w"] = 0.1 * jax.random.normal(keys[1], (cin, cexp), jnp.float32)
    params["expand_scale"], params["expand_bias"] = _make_bn(keys[2], cexp)
    params["dw_w"] = 0.1 * jax.random.normal(keys[3], (k, k, cexp), jnp.float32)
    params["dw_scale"], params["dw_bias"] = _make_bn(keys[4], cexp)
    params["se_w1"] = 0.1 * jax.random.normal(keys[5], (cexp, csq), jnp.float32)
    params["se_b1"] = 0.1 * jax.random.normal(keys[6], (1, csq), jnp.float32)
    params["se_w2"] = 0.1 * jax.random.normal(keys[7], (csq, cexp), jnp.float32)
    params["se_b2"] = 0.1 * jax.random.normal(keys[8], (1, cexp), jnp.float32)
    params["proj_w"] = 0.1 * jax.random.normal(keys[9], (cexp, cout), jnp.float32)
    params["proj_scale"], params["proj_bias"] = _make_bn(keys[10], cout)

    # input: NCHW like PyTorch: (batch=2, C=16, H=16, W=16)
    x = jax.random.normal(keys[0], (2, cin, 16, 16), jnp.float32)

    out = inverted_residual_forward(x, params, cfg)
    out = jax.block_until_ready(out)

    ref = reference_forward(x, params, cfg)
    assert out.shape == ref.shape, (out.shape, ref.shape)
    assert jnp.allclose(out, ref, rtol=1e-4, atol=1e-4), float(jnp.max(jnp.abs(out - ref)))

    print("KERNEL_OK")
</pallas_src>

<mosaic_0001>
module attributes {stable_mosaic.version = 11 : i64} {
  func.func @_fused_mbconv_kernel(%arg0: i32, %arg1: memref<1x16x16x16xf32, #tpu.memory_space<vmem>>, %arg2: memref<16x64xf32, #tpu.memory_space<vmem>>, %arg3: memref<1x64xf32, #tpu.memory_space<vmem>>, %arg4: memref<1x64xf32, #tpu.memory_space<vmem>>, %arg5: memref<3x3x64xf32, #tpu.memory_space<vmem>>, %arg6: memref<1x64xf32, #tpu.memory_space<vmem>>, %arg7: memref<1x64xf32, #tpu.memory_space<vmem>>, %arg8: memref<64x4xf32, #tpu.memory_space<vmem>>, %arg9: memref<1x4xf32, #tpu.memory_space<vmem>>, %arg10: memref<4x64xf32, #tpu.memory_space<vmem>>, %arg11: memref<1x64xf32, #tpu.memory_space<vmem>>, %arg12: memref<64x16xf32, #tpu.memory_space<vmem>>, %arg13: memref<1x16xf32, #tpu.memory_space<vmem>>, %arg14: memref<1x16xf32, #tpu.memory_space<vmem>>, %arg15: memref<1x16x16x16xf32, #tpu.memory_space<vmem>>, %arg16: memref<18x18x64xf32, #tpu.memory_space<vmem>>, %arg17: memref<16x16x64xf32, #tpu.memory_space<vmem>>) attributes {dimension_semantics = [#tpu.dimension_semantics<parallel>], iteration_bounds = array<i64: 2>, scalar_prefetch = 0 : i64, scratch_operands = 2 : i64, tpu.core_type = #tpu.core_type<tc>, window_params = [{transform_indices = @transform_0, window_bounds = array<i64: 1, 16, 16, 16>}, {pipeline_mode = #tpu.pipeline_mode<synchronous>, transform_indices = @transform_1, window_bounds = array<i64: 16, 64>}, {pipeline_mode = #tpu.pipeline_mode<synchronous>, transform_indices = @transform_2, window_bounds = array<i64: 1, 64>}, {pipeline_mode = #tpu.pipeline_mode<synchronous>, transform_indices = @transform_3, window_bounds = array<i64: 1, 64>}, {pipeline_mode = #tpu.pipeline_mode<synchronous>, transform_indices = @transform_4, window_bounds = array<i64: 3, 3, 64>}, {pipeline_mode = #tpu.pipeline_mode<synchronous>, transform_indices = @transform_5, window_bounds = array<i64: 1, 64>}, {pipeline_mode = #tpu.pipeline_mode<synchronous>, transform_indices = @transform_6, window_bounds = array<i64: 1, 64>}, {pipeline_mode = #tpu.pipeline_mode<synchronous>, transform_indices = @transform_7, window_bounds = array<i64: 64, 4>}, {pipeline_mode = #tpu.pipeline_mode<synchronous>, transform_indices = @transform_8, window_bounds = array<i64: 1, 4>}, {pipeline_mode = #tpu.pipeline_mode<synchronous>, transform_indices = @transform_9, window_bounds = array<i64: 4, 64>}, {pipeline_mode = #tpu.pipeline_mode<synchronous>, transform_indices = @transform_10, window_bounds = array<i64: 1, 64>}, {pipeline_mode = #tpu.pipeline_mode<synchronous>, transform_indices = @transform_11, window_bounds = array<i64: 64, 16>}, {pipeline_mode = #tpu.pipeline_mode<synchronous>, transform_indices = @transform_12, window_bounds = array<i64: 1, 16>}, {pipeline_mode = #tpu.pipeline_mode<synchronous>, transform_indices = @transform_13, window_bounds = array<i64: 1, 16>}, {transform_indices = @transform_14, window_bounds = array<i64: 1, 16, 16, 16>}]} {
    %c0 = arith.constant 0 : index
    %c0_0 = arith.constant 0 : index
    %0 = vector.load %arg6[%c0, %c0_0] : memref<1x64xf32, #tpu.memory_space<vmem>>, vector<1x64xf32>
    %1 = vector.shape_cast %0 : vector<1x64xf32> to vector<64xf32>
    %c0_1 = arith.constant 0 : index
    %c0_2 = arith.constant 0 : index
    %2 = vector.load %arg7[%c0_1, %c0_2] : memref<1x64xf32, #tpu.memory_space<vmem>>, vector<1x64xf32>
    %3 = vector.shape_cast %2 : vector<1x64xf32> to vector<64xf32>
    %c0_3 = arith.constant 0 : index
    %c0_4 = arith.constant 0 : index
    %4 = vector.load %arg13[%c0_3, %c0_4] : memref<1x16xf32, #tpu.memory_space<vmem>>, vector<1x16xf32>
    %5 = vector.shape_cast %4 : vector<1x16xf32> to vector<16xf32>
    %c0_5 = arith.constant 0 : index
    %c0_6 = arith.constant 0 : index
    %6 = vector.load %arg14[%c0_5, %c0_6] : memref<1x16xf32, #tpu.memory_space<vmem>>, vector<1x16xf32>
    %7 = vector.shape_cast %6 : vector<1x16xf32> to vector<16xf32>
    %c0_7 = arith.constant 0 : index
    %c0_8 = arith.constant 0 : index
    %8 = vector.load %arg12[%c0_7, %c0_8] : memref<64x16xf32, #tpu.memory_space<vmem>>, vector<64x16xf32>
    %c0_9 = arith.constant 0 : index
    %c0_10 = arith.constant 0 : index
    %9 = vector.load %arg2[%c0_9, %c0_10] : memref<16x64xf32, #tpu.memory_space<vmem>>, vector<16x64xf32>
    %c0_11 = arith.constant 0 : index
    %c0_12 = arith.constant 0 : index
    %10 = vector.load %arg3[%c0_11, %c0_12] : memref<1x64xf32, #tpu.memory_space<vmem>>, vector<1x64xf32>
    %11 = vector.shape_cast %10 : vector<1x64xf32> to vector<64xf32>
    %c0_13 = arith.constant 0 : index
    %c0_14 = arith.constant 0 : index
    %12 = vector.load %arg4[%c0_13, %c0_14] : memref<1x64xf32, #tpu.memory_space<vmem>>, vector<1x64xf32>
    %13 = vector.shape_cast %12 : vector<1x64xf32> to vector<64xf32>
    %cst = arith.constant 0.000000e+00 : f32
    %14 = vector.broadcast %cst : f32 to vector<1x18x64xf32>
    %c0_15 = arith.constant 0 : index
    %c0_16 = arith.constant 0 : index
    %c0_17 = arith.constant 0 : index
    %15 = vector.load %arg16[%c0_15, %c0_16, %c0_17] : memref<18x18x64xf32, #tpu.memory_space<vmem>>, vector<1x18x64xf32>
    tpu.vector_store %arg16[%c0_15, %c0_16, %c0_17], %14 {strides = array<i32>} : memref<18x18x64xf32, #tpu.memory_space<vmem>>, vector<1x18x64xf32>,
    %cst_18 = arith.constant 0.000000e+00 : f32
    %16 = vector.broadcast %cst_18 : f32 to vector<1x18x64xf32>
    %c17 = arith.constant 17 : index
    %c0_19 = arith.constant 0 : index
    %c0_20 = arith.constant 0 : index
    %17 = vector.load %arg16[%c17, %c0_19, %c0_20] : memref<18x18x64xf32, #tpu.memory_space<vmem>>, vector<1x18x64xf32>
    tpu.vector_store %arg16[%c17, %c0_19, %c0_20], %16 {strides = array<i32>} : memref<18x18x64xf32, #tpu.memory_space<vmem>>, vector<1x18x64xf32>,
    %cst_21 = arith.constant 0.000000e+00 : f32
    %18 = vector.broadcast %cst_21 : f32 to vector<18x1x64xf32>
    %c0_22 = arith.constant 0 : index
    %c0_23 = arith.constant 0 : index
    %c0_24 = arith.constant 0 : index
    %19 = vector.load %arg16[%c0_22, %c0_23, %c0_24] : memref<18x18x64xf32, #tpu.memory_space<vmem>>, vector<18x1x64xf32>
    tpu.vector_store %arg16[%c0_22, %c0_23, %c0_24], %18 {strides = array<i32>} : memref<18x18x64xf32, #tpu.memory_space<vmem>>, vector<18x1x64xf32>,
    %cst_25 = arith.constant 0.000000e+00 : f32
    %20 = vector.broadcast %cst_25 : f32 to vector<18x1x64xf32>
    %c0_26 = arith.constant 0 : index
    %c17_27 = arith.constant 17 : index
    %c0_28 = arith.constant 0 : index
    %21 = vector.load %arg16[%c0_26, %c17_27, %c0_28] : memref<18x18x64xf32, #tpu.memory_space<vmem>>, vector<18x1x64xf32>
    tpu.vector_store %arg16[%c0_26, %c17_27, %c0_28], %20 {strides = array<i32>} : memref<18x18x64xf32, #tpu.memory_space<vmem>>, vector<18x1x64xf32>,
    %c0_29 = arith.constant 0 : index
    %c0_30 = arith.constant 0 : index
    %c0_31 = arith.constant 0 : index
    %c0_32 = arith.constant 0 : index
    %22 = vector.load %arg1[%c0_29, %c0_30, %c0_31, %c0_32] : memref<1x16x16x16xf32, #tpu.memory_space<vmem>>, vector<1x16x16x16xf32>
    %23 = vector.shape_cast %22 : vector<1x16x16x16xf32> to vector<16x16x16xf32>
    %24 = vector.shape_cast %23 : vector<16x16x16xf32> to vector<256x16xf32>
    %cst_33 = arith.constant dense<0.000000e+00> : vector<256x64xf32>
    %25 = tpu.matmul %24, %9, %cst_33 {dimension_numbers = #tpu.dot_dimension_numbers<[1], [0], [0], [1], [0, 0, 1, 1], [], []>} : vector<256x16xf32>, vector<16x64xf32>, vector<256x64xf32> -> vector<256x64xf32>
    %26 = vector.shape_cast %11 : vector<64xf32> to vector<1x64xf32>
    %27 = vector.broadcast %26 : vector<1x64xf32> to vector<256x64xf32>
    %28 = arith.mulf %25, %27 : vector<256x64xf32>
    %29 = vector.shape_cast %13 : vector<64xf32> to vector<1x64xf32>
    %30 = vector.broadcast %29 : vector<1x64xf32> to vector<256x64xf32>
    %31 = arith.addf %28, %30 : vector<256x64xf32>
    %cst_34 = arith.constant 0.000000e+00 : f32
    %32 = vector.broadcast %cst_34 : f32 to vector<256x64xf32>
    %33 = arith.maximumf %31, %32 : vector<256x64xf32>
    %34 = vector.shape_cast %33 : vector<256x64xf32> to vector<16x16x64xf32>
    %c1 = arith.constant 1 : index
    %c1_35 = arith.constant 1 : index
    %c0_36 = arith.constant 0 : index
    %35 = vector.load %arg16[%c1, %c1_35, %c0_36] : memref<18x18x64xf32, #tpu.memory_space<vmem>>, vector<16x16x64xf32>
    tpu.vector_store %arg16[%c1, %c1_35, %c0_36], %34 {strides = array<i32>} : memref<18x18x64xf32, #tpu.memory_space<vmem>>, vector<16x16x64xf32>,
    %c0_37 = arith.constant 0 : index
    %c0_38 = arith.constant 0 : index
    %c0_39 = arith.constant 0 : index
    %36 = vector.load %arg16[%c0_37, %c0_38, %c0_39] : memref<18x18x64xf32, #tpu.memory_space<vmem>>, vector<16x16x64xf32>
    %c0_40 = arith.constant 0 : index
    %c0_41 = arith.constant 0 : index
    %c0_42 = arith.constant 0 : index
    %37 = vector.load %arg5[%c0_40, %c0_41, %c0_42] : memref<3x3x64xf32, #tpu.memory_space<vmem>>, vector<1x1x64xf32>
    %38 = vector.shape_cast %37 : vector<1x1x64xf32> to vector<64xf32>
    %39 = vector.shape_cast %38 : vector<64xf32> to vector<1x1x64xf32>
    %40 = vector.broadcast %39 : vector<1x1x64xf32> to vector<16x16x64xf32>
    %41 = arith.mulf %36, %40 : vector<16x16x64xf32>
    %c0_43 = arith.constant 0 : index
    %c0_44 = arith.constant 0 : index
    %c0_45 = arith.constant 0 : index
    %42 = vector.load %arg17[%c0_43, %c0_44, %c0_45] : memref<16x16x64xf32, #tpu.memory_space<vmem>>, vector<16x16x64xf32>
    tpu.vector_store %arg17[%c0_43, %c0_44, %c0_45], %41 {strides = array<i32>} : memref<16x16x64xf32, #tpu.memory_space<vmem>>, vector<16x16x64xf32>,
    %c0_46 = arith.constant 0 : index
    %c1_47 = arith.constant 1 : index
    %c0_48 = arith.constant 0 : index
    %43 = vector.load %arg16[%c0_46, %c1_47, %c0_48] : memref<18x18x64xf32, #tpu.memory_space<vmem>>, vector<16x16x64xf32>
    %c0_49 = arith.constant 0 : index
    %c1_50 = arith.constant 1 : index
    %c0_51 = arith.constant 0 : index
    %44 = vector.load %arg5[%c0_49, %c1_50, %c0_51] : memref<3x3x64xf32, #tpu.memory_space<vmem>>, vector<1x1x64xf32>
    %45 = vector.shape_cast %44 : vector<1x1x64xf32> to vector<64xf32>
    %c0_52 = arith.constant 0 : index
    %c0_53 = arith.constant 0 : index
    %c0_54 = arith.constant 0 : index
    %46 = vector.load %arg17[%c0_52, %c0_53, %c0_54] : memref<16x16x64xf32, #tpu.memory_space<vmem>>, vector<16x16x64xf32>
    %47 = vector.shape_cast %45 : vector<64xf32> to vector<1x1x64xf32>
    %48 = vector.broadcast %47 : vector<1x1x64xf32> to vector<16x16x64xf32>
    %49 = arith.mulf %43, %48 : vector<16x16x64xf32>
    %50 = arith.addf %46, %49 : vector<16x16x64xf32>
    %c0_55 = arith.constant 0 : index
    %c0_56 = arith.constant 0 : index
    %c0_57 = arith.constant 0 : index
    %51 = vector.load %arg17[%c0_55, %c0_56, %c0_57] : memref<16x16x64xf32, #tpu.memory_space<vmem>>, vector<16x16x64xf32>
    tpu.vector_store %arg17[%c0_55, %c0_56, %c0_57], %50 {strides = array<i32>} : memref<16x16x64xf32, #tpu.memory_space<vmem>>, vector<16x16x64xf32>,
    %c0_58 = arith.constant 0 : index
    %c2 = arith.constant 2 : index
    %c0_59 = arith.constant 0 : index
    %52 = vector.load %arg16[%c0_58, %c2, %c0_59] : memref<18x18x64xf32, #tpu.memory_space<vmem>>, vector<16x16x64xf32>
    %c0_60 = arith.constant 0 : index
    %c2_61 = arith.constant 2 : index
    %c0_62 = arith.constant 0 : index
    %53 = vector.load %arg5[%c0_60, %c2_61, %c0_62] : memref<3x3x64xf32, #tpu.memory_space<vmem>>, vector<1x1x64xf32>
    %54 = vector.shape_cast %53 : vector<1x1x64xf32> to vector<64xf32>
    %c0_63 = arith.constant 0 : index
    %c0_64 = arith.constant 0 : index
    %c0_65 = arith.constant 0 : index
    %55 = vector.load %arg17[%c0_63, %c0_64, %c0_65] : memref<16x16x64xf32, #tpu.memory_space<vmem>>, vector<16x16x64xf32>
    %56 = vector.shape_cast %54 : vector<64xf32> to vector<1x1x64xf32>
    %57 = vector.broadcast %56 : vector<1x1x64xf32> to vector<16x16x64xf32>
    %58 = arith.mulf %52, %57 : vector<16x16x64xf32>
    %59 = arith.addf %55, %58 : vector<16x16x64xf32>
    %c0_66 = arith.constant 0 : index
    %c0_67 = arith.constant 0 : index
    %c0_68 = arith.constant 0 : index
    %60 = vector.load %arg17[%c0_66, %c0_67, %c0_68] : memref<16x16x64xf32, #tpu.memory_space<vmem>>, vector<16x16x64xf32>
    tpu.vector_store %arg17[%c0_66, %c0_67, %c0_68], %59 {strides = array<i32>} : memref<16x16x64xf32, #tpu.memory_space<vmem>>, vector<16x16x64xf32>,
    %c1_69 = arith.constant 1 : index
    %c0_70 = arith.constant 0 : index
    %c0_71 = arith.constant 0 : index
    %61 = vector.load %arg16[%c1_69, %c0_70, %c0_71] : memref<18x18x64xf32, #tpu.memory_space<vmem>>, vector<16x16x64xf32>
    %c1_72 = arith.constant 1 : index
    %c0_73 = arith.constant 0 : index
    %c0_74 = arith.constant 0 : index
    %62 = vector.load %arg5[%c1_72, %c0_73, %c0_74] : memref<3x3x64xf32, #tpu.memory_space<vmem>>, vector<1x1x64xf32>
    %63 = vector.shape_cast %62 : vector<1x1x64xf32> to vector<64xf32>
    %c0_75 = arith.constant 0 : index
    %c0_76 = arith.constant 0 : index
    %c0_77 = arith.constant 0 : index
    %64 = vector.load %arg17[%c0_75, %c0_76, %c0_77] : memref<16x16x64xf32, #tpu.memory_space<vmem>>, vector<16x16x64xf32>
    %65 = vector.shape_cast %63 : vector<64xf32> to vector<1x1x64xf32>
    %66 = vector.broadcast %65 : vector<1x1x64xf32> to vector<16x16x64xf32>
    %67 = arith.mulf %61, %66 : vector<16x16x64xf32>
    %68 = arith.addf %64, %67 : vector<16x16x64xf32>
    %c0_78 = arith.constant 0 : index
    %c0_79 = arith.constant 0 : index
    %c0_80 = arith.constant 0 : index
    %69 = vector.load %arg17[%c0_78, %c0_79, %c0_80] : memref<16x16x64xf32, #tpu.memory_space<vmem>>, vector<16x16x64xf32>
    tpu.vector_store %arg17[%c0_78, %c0_79, %c0_80], %68 {strides = array<i32>} : memref<16x16x64xf32, #tpu.memory_space<vmem>>, vector<16x16x64xf32>,
    %c1_81 = arith.constant 1 : index
    %c1_82 = arith.constant 1 : index
    %c0_83 = arith.constant 0 : index
    %70 = vector.load %arg16[%c1_81, %c1_82, %c0_83] : memref<18x18x64xf32, #tpu.memory_space<vmem>>, vector<16x16x64xf32>
    %c1_84 = arith.constant 1 : index
    %c1_85 = arith.constant 1 : index
    %c0_86 = arith.constant 0 : index
    %71 = vector.load %arg5[%c1_84, %c1_85, %c0_86] : memref<3x3x64xf32, #tpu.memory_space<vmem>>, vector<1x1x64xf32>
    %72 = vector.shape_cast %71 : vector<1x1x64xf32> to vector<64xf32>
    %c0_87 = arith.constant 0 : index
    %c0_88 = arith.constant 0 : index
    %c0_89 = arith.constant 0 : index
    %73 = vector.load %arg17[%c0_87, %c0_88, %c0_89] : memref<16x16x64xf32, #tpu.memory_space<vmem>>, vector<16x16x64xf32>
    %74 = vector.shape_cast %72 : vector<64xf32> to vector<1x1x64xf32>
    %75 = vector.broadcast %74 : vector<1x1x64xf32> to vector<16x16x64xf32>
    %76 = arith.mulf %70, %75 : vector<16x16x64xf32>
    %77 = arith.addf %73, %76 : vector<16x16x64xf32>
    %c0_90 = arith.constant 0 : index
    %c0_91 = arith.constant 0 : index
    %c0_92 = arith.constant 0 : index
    %78 = vector.load %arg17[%c0_90, %c0_91, %c0_92] : memref<16x16x64xf32, #tpu.memory_space<vmem>>, vector<16x16x64xf32>
    tpu.vector_store %arg17[%c0_90, %c0_91, %c0_92], %77 {strides = array<i32>} : memref<16x16x64xf32, #tpu.memory_space<vmem>>, vector<16x16x64xf32>,
    %c1_93 = arith.constant 1 : index
    %c2_94 = arith.constant 2 : index
    %c0_95 = arith.constant 0 : index
    %79 = vector.load %arg16[%c1_93, %c2_94, %c0_95] : memref<18x18x64xf32, #tpu.memory_space<vmem>>, vector<16x16x64xf32>
    %c1_96 = arith.constant 1 : index
    %c2_97 = arith.constant 2 : index
    %c0_98 = arith.constant 0 : index
    %80 = vector.load %arg5[%c1_96, %c2_97, %c0_98] : memref<3x3x64xf32, #tpu.memory_space<vmem>>, vector<1x1x64xf32>
    %81 = vector.shape_cast %80 : vector<1x1x64xf32> to vector<64xf32>
    %c0_99 = arith.constant 0 : index
    %c0_100 = arith.constant 0 : index
    %c0_101 = arith.constant 0 : index
    %82 = vector.load %arg17[%c0_99, %c0_100, %c0_101] : memref<16x16x64xf32, #tpu.memory_space<vmem>>, vector<16x16x64xf32>
    %83 = vector.shape_cast %81 : vector<64xf32> to vector<1x1x64xf32>
    %84 = vector.broadcast %83 : vector<1x1x64xf32> to vector<16x16x64xf32>
    %85 = arith.mulf %79, %84 : vector<16x16x64xf32>
    %86 = arith.addf %82, %85 : vector<16x16x64xf32>
    %c0_102 = arith.constant 0 : index
    %c0_103 = arith.constant 0 : index
    %c0_104 = arith.constant 0 : index
    %87 = vector.load %arg17[%c0_102, %c0_103, %c0_104] : memref<16x16x64xf32, #tpu.memory_space<vmem>>, vector<16x16x64xf32>
    tpu.vector_store %arg17[%c0_102, %c0_103, %c0_104], %86 {strides = array<i32>} : memref<16x16x64xf32, #tpu.memory_space<vmem>>, vector<16x16x64xf32>,
    %c2_105 = arith.constant 2 : index
    %c0_106 = arith.constant 0 : index
    %c0_107 = arith.constant 0 : index
    %88 = vector.load %arg16[%c2_105, %c0_106, %c0_107] : memref<18x18x64xf32, #tpu.memory_space<vmem>>, vector<16x16x64xf32>
    %c2_108 = arith.constant 2 : index
    %c0_109 = arith.constant 0 : index
    %c0_110 = arith.constant 0 : index
    %89 = vector.load %arg5[%c2_108, %c0_109, %c0_110] : memref<3x3x64xf32, #tpu.memory_space<vmem>>, vector<1x1x64xf32>
    %90 = vector.shape_cast %89 : vector<1x1x64xf32> to vector<64xf32>
    %c0_111 = arith.constant 0 : index
    %c0_112 = arith.constant 0 : index
    %c0_113 = arith.constant 0 : index
    %91 = vector.load %arg17[%c0_111, %c0_112, %c0_113] : memref<16x16x64xf32, #tpu.memory_space<vmem>>, vector<16x16x64xf32>
    %92 = vector.shape_cast %90 : vector<64xf32> to vector<1x1x64xf32>
    %93 = vector.broadcast %92 : vector<1x1x64xf32> to vector<16x16x64xf32>
    %94 = arith.mulf %88, %93 : vector<16x16x64xf32>
    %95 = arith.addf %91, %94 : vector<16x16x64xf32>
    %c0_114 = arith.constant 0 : index
    %c0_115 = arith.constant 0 : index
    %c0_116 = arith.constant 0 : index
    %96 = vector.load %arg17[%c0_114, %c0_115, %c0_116] : memref<16x16x64xf32, #tpu.memory_space<vmem>>, vector<16x16x64xf32>
    tpu.vector_store %arg17[%c0_114, %c0_115, %c0_116], %95 {strides = array<i32>} : memref<16x16x64xf32, #tpu.memory_space<vmem>>, vector<16x16x64xf32>,
    %c2_117 = arith.constant 2 : index
    %c1_118 = arith.constant 1 : index
    %c0_119 = arith.constant 0 : index
    %97 = vector.load %arg16[%c2_117, %c1_118, %c0_119] : memref<18x18x64xf32, #tpu.memory_space<vmem>>, vector<16x16x64xf32>
    %c2_120 = arith.constant 2 : index
    %c1_121 = arith.constant 1 : index
    %c0_122 = arith.constant 0 : index
    %98 = vector.load %arg5[%c2_120, %c1_121, %c0_122] : memref<3x3x64xf32, #tpu.memory_space<vmem>>, vector<1x1x64xf32>
    %99 = vector.shape_cast %98 : vector<1x1x64xf32> to vector<64xf32>
    %c0_123 = arith.constant 0 : index
    %c0_124 = arith.constant 0 : index
    %c0_125 = arith.constant 0 : index
    %100 = vector.load %arg17[%c0_123, %c0_124, %c0_125] : memref<16x16x64xf32, #tpu.memory_space<vmem>>, vector<16x16x64xf32>
    %101 = vector.shape_cast %99 : vector<64xf32> to vector<1x1x64xf32>
    %102 = vector.broadcast %101 : vector<1x1x64xf32> to vector<16x16x64xf32>
    %103 = arith.mulf %97, %102 : vector<16x16x64xf32>
    %104 = arith.addf %100, %103 : vector<16x16x64xf32>
    %c0_126 = arith.constant 0 : index
    %c0_127 = arith.constant 0 : index
    %c0_128 = arith.constant 0 : index
    %105 = vector.load %arg17[%c0_126, %c0_127, %c0_128] : memref<16x16x64xf32, #tpu.memory_space<vmem>>, vector<16x16x64xf32>
    tpu.vector_store %arg17[%c0_126, %c0_127, %c0_128], %104 {strides = array<i32>} : memref<16x16x64xf32, #tpu.memory_space<vmem>>, vector<16x16x64xf32>,
    %c2_129 = arith.constant 2 : index
    %c2_130 = arith.constant 2 : index
    %c0_131 = arith.constant 0 : index
    %106 = vector.load %arg16[%c2_129, %c2_130, %c0_131] : memref<18x18x64xf32, #tpu.memory_space<vmem>>, vector<16x16x64xf32>
    %c2_132 = arith.constant 2 : index
    %c2_133 = arith.constant 2 : index
    %c0_134 = arith.constant 0 : index
    %107 = vector.load %arg5[%c2_132, %c2_133, %c0_134] : memref<3x3x64xf32, #tpu.memory_space<vmem>>, vector<1x1x64xf32>
    %108 = vector.shape_cast %107 : vector<1x1x64xf32> to vector<64xf32>
    %c0_135 = arith.constant 0 : index
    %c0_136 = arith.constant 0 : index
    %c0_137 = arith.constant 0 : index
    %109 = vector.load %arg17[%c0_135, %c0_136, %c0_137] : memref<16x16x64xf32, #tpu.memory_space<vmem>>, vector<16x16x64xf32>
    %110 = vector.shape_cast %108 : vector<64xf32> to vector<1x1x64xf32>
    %111 = vector.broadcast %110 : vector<1x1x64xf32> to vector<16x16x64xf32>
    %112 = arith.mulf %106, %111 : vector<16x16x64xf32>
    %113 = arith.addf %109, %112 : vector<16x16x64xf32>
    %c0_138 = arith.constant 0 : index
    %c0_139 = arith.constant 0 : index
    %c0_140 = arith.constant 0 : index
    %114 = vector.load %arg17[%c0_138, %c0_139, %c0_140] : memref<16x16x64xf32, #tpu.memory_space<vmem>>, vector<16x16x64xf32>
    tpu.vector_store %arg17[%c0_138, %c0_139, %c0_140], %113 {strides = array<i32>} : memref<16x16x64xf32, #tpu.memory_space<vmem>>, vector<16x16x64xf32>,
    %cst_141 = arith.constant 0.000000e+00 : f32
    %115 = vector.broadcast %cst_141 : f32 to vector<1x64xf32>
    %c0_142 = arith.constant 0 : index
    %c0_143 = arith.constant 0 : index
    %c0_144 = arith.constant 0 : index
    %116 = vector.load %arg17[%c0_142, %c0_143, %c0_144] : memref<16x16x64xf32, #tpu.memory_space<vmem>>, vector<16x16x64xf32>
    %117 = vector.shape_cast %1 : vector<64xf32> to vector<1x1x64xf32>
    %118 = vector.broadcast %117 : vector<1x1x64xf32> to vector<16x16x64xf32>
    %119 = arith.mulf %116, %118 : vector<16x16x64xf32>
    %120 = vector.shape_cast %3 : vector<64xf32> to vector<1x1x64xf32>
    %121 = vector.broadcast %120 : vector<1x1x64xf32> to vector<16x16x64xf32>
    %122 = arith.addf %119, %121 : vector<16x16x64xf32>
    %cst_145 = arith.constant 0.000000e+00 : f32
    %123 = vector.broadcast %cst_145 : f32 to vector<16x16x64xf32>
    %124 = arith.maximumf %122, %123 : vector<16x16x64xf32>
    %cst_146 = arith.constant dense<0.000000e+00> : vector<64xf32>
    %125 = vector.multi_reduction <add>, %124, %cst_146 [0, 1] : vector<16x16x64xf32> to vector<64xf32>
    %126 = vector.shape_cast %125 : vector<64xf32> to vector<1x64xf32>
    %127 = arith.addf %115, %126 : vector<1x64xf32>
    %cst_147 = arith.constant 3.906250e-03 : f32
    %128 = vector.broadcast %cst_147 : f32 to vector<1x64xf32>
    %129 = arith.mulf %127, %128 : vector<1x64xf32>
    %c0_148 = arith.constant 0 : index
    %c0_149 = arith.constant 0 : index
    %130 = vector.load %arg8[%c0_148, %c0_149] : memref<64x4xf32, #tpu.memory_space<vmem>>, vector<64x4xf32>
    %cst_150 = arith.constant dense<0.000000e+00> : vector<1x4xf32>
    %131 = tpu.matmul %129, %130, %cst_150 {dimension_numbers = #tpu.dot_dimension_numbers<[1], [0], [0], [1], [0, 0, 1, 1], [], []>} : vector<1x64xf32>, vector<64x4xf32>, vector<1x4xf32> -> vector<1x4xf32>
    %c0_151 = arith.constant 0 : index
    %c0_152 = arith.constant 0 : index
    %132 = vector.load %arg9[%c0_151, %c0_152] : memref<1x4xf32, #tpu.memory_space<vmem>>, vector<1x4xf32>
    %133 = arith.addf %131, %132 : vector<1x4xf32>
    %cst_153 = arith.constant 0.000000e+00 : f32
    %134 = vector.broadcast %cst_153 : f32 to vector<1x4xf32>
    %135 = arith.maximumf %133, %134 : vector<1x4xf32>
    %c0_154 = arith.constant 0 : index
    %c0_155 = arith.constant 0 : index
    %136 = vector.load %arg10[%c0_154, %c0_155] : memref<4x64xf32, #tpu.memory_space<vmem>>, vector<4x64xf32>
    %cst_156 = arith.constant dense<0.000000e+00> : vector<1x64xf32>
    %137 = tpu.matmul %135, %136, %cst_156 {dimension_numbers = #tpu.dot_dimension_numbers<[1], [0], [0], [1], [0, 0, 1, 1], [], []>} : vector<1x4xf32>, vector<4x64xf32>, vector<1x64xf32> -> vector<1x64xf32>
    %c0_157 = arith.constant 0 : index
    %c0_158 = arith.constant 0 : index
    %138 = vector.load %arg11[%c0_157, %c0_158] : memref<1x64xf32, #tpu.memory_space<vmem>>, vector<1x64xf32>
    %139 = arith.addf %137, %138 : vector<1x64xf32>
    %140 = arith.negf %139 : vector<1x64xf32>
    %141 = math.exp %140 : vector<1x64xf32>
    %cst_159 = arith.constant 1.000000e+00 : f32
    %142 = vector.broadcast %cst_159 : f32 to vector<1x64xf32>
    %143 = arith.addf %142, %141 : vector<1x64xf32>
    %144 = arith.divf %142, %143 : vector<1x64xf32>
    %145 = vector.shape_cast %144 : vector<1x64xf32> to vector<64xf32>
    %c0_160 = arith.constant 0 : index
    %c0_161 = arith.constant 0 : index
    %c0_162 = arith.constant 0 : index
    %146 = vector.load %arg17[%c0_160, %c0_161, %c0_162] : memref<16x16x64xf32, #tpu.memory_space<vmem>>, vector<16x16x64xf32>
    %147 = vector.shape_cast %1 : vector<64xf32> to vector<1x1x64xf32>
    %148 = vector.broadcast %147 : vector<1x1x64xf32> to vector<16x16x64xf32>
    %149 = arith.mulf %146, %148 : vector<16x16x64xf32>
    %150 = vector.shape_cast %3 : vector<64xf32> to vector<1x1x64xf32>
    %151 = vector.broadcast %150 : vector<1x1x64xf32> to vector<16x16x64xf32>
    %152 = arith.addf %149, %151 : vector<16x16x64xf32>
    %cst_163 = arith.constant 0.000000e+00 : f32
    %153 = vector.broadcast %cst_163 : f32 to vector<16x16x64xf32>
    %154 = arith.maximumf %152, %153 : vector<16x16x64xf32>
    %155 = vector.shape_cast %145 : vector<64xf32> to vector<1x1x64xf32>
    %156 = vector.broadcast %155 : vector<1x1x64xf32> to vector<16x16x64xf32>
    %157 = arith.mulf %154, %156 : vector<16x16x64xf32>
    %158 = vector.shape_cast %157 : vector<16x16x64xf32> to vector<256x64xf32>
    %cst_164 = arith.constant dense<0.000000e+00> : vector<256x16xf32>
    %159 = tpu.matmul %158, %8, %cst_164 {dimension_numbers = #tpu.dot_dimension_numbers<[1], [0], [0], [1], [0, 0, 1, 1], [], []>} : vector<256x64xf32>, vector<64x16xf32>, vector<256x16xf32> -> vector<256x16xf32>
    %160 = vector.shape_cast %5 : vector<16xf32> to vector<1x16xf32>
    %161 = vector.broadcast %160 : vector<1x16xf32> to vector<256x16xf32>
    %162 = arith.mulf %159, %161 : vector<256x16xf32>
    %163 = vector.shape_cast %7 : vector<16xf32> to vector<1x16xf32>
    %164 = vector.broadcast %163 : vector<1x16xf32> to vector<256x16xf32>
    %165 = arith.addf %162, %164 : vector<256x16xf32>
    %c0_165 = arith.constant 0 : index
    %c0_166 = arith.constant 0 : index
    %c0_167 = arith.constant 0 : index
    %c0_168 = arith.constant 0 : index
    %166 = vector.load %arg1[%c0_165, %c0_166, %c0_167, %c0_168] : memref<1x16x16x16xf32, #tpu.memory_space<vmem>>, vector<1x16x16x16xf32>
    %167 = vector.shape_cast %166 : vector<1x16x16x16xf32> to vector<16x16x16xf32>
    %168 = vector.shape_cast %167 : vector<16x16x16xf32> to vector<256x16xf32>
    %169 = arith.addf %165, %168 : vector<256x16xf32>
    %170 = vector.shape_cast %169 : vector<256x16xf32> to vector<16x16x16xf32>
    %c0_169 = arith.constant 0 : index
    %c0_170 = arith.constant 0 : index
    %c0_171 = arith.constant 0 : index
    %c0_172 = arith.constant 0 : index
    %171 = vector.load %arg15[%c0_169, %c0_170, %c0_171, %c0_172] : memref<1x16x16x16xf32, #tpu.memory_space<vmem>>, vector<1x16x16x16xf32>
    %172 = vector.shape_cast %171 : vector<1x16x16x16xf32> to vector<16x16x16xf32>
    %173 = vector.shape_cast %170 : vector<16x16x16xf32> to vector<1x16x16x16xf32>
    tpu.vector_store %arg15[%c0_169, %c0_170, %c0_171, %c0_172], %173 {strides = array<i32>} : memref<1x16x16x16xf32, #tpu.memory_space<vmem>>, vector<1x16x16x16xf32>,
    return
  }
  func.func @transform_0(%arg0: i32) -> (i32, i32, i32, i32) {
    %c0_i32 = arith.constant 0 : i32
    %c0_i32_0 = arith.constant 0 : i32
    %c0_i32_1 = arith.constant 0 : i32
    %c0_i32_2 = arith.constant 0 : i32
    return %arg0, %c0_i32, %c0_i32_0, %c0_i32_1 : i32, i32, i32, i32
  }
  func.func @transform_1(%arg0: i32) -> (i32, i32) {
    %c0_i32 = arith.constant 0 : i32
    %c0_i32_0 = arith.constant 0 : i32
    %c0_i32_1 = arith.constant 0 : i32
    return %c0_i32, %c0_i32_0 : i32, i32
  }
  func.func @transform_2(%arg0: i32) -> (i32, i32) {
    %c0_i32 = arith.constant 0 : i32
    %c0_i32_0 = arith.constant 0 : i32
    %c0_i32_1 = arith.constant 0 : i32
    return %c0_i32, %c0_i32_0 : i32, i32
  }
  func.func @transform_3(%arg0: i32) -> (i32, i32) {
    %c0_i32 = arith.constant 0 : i32
    %c0_i32_0 = arith.constant 0 : i32
    %c0_i32_1 = arith.constant 0 : i32
    return %c0_i32, %c0_i32_0 : i32, i32
  }
  func.func @transform_4(%arg0: i32) -> (i32, i32, i32) {
    %c0_i32 = arith.constant 0 : i32
    %c0_i32_0 = arith.constant 0 : i32
    %c0_i32_1 = arith.constant 0 : i32
    %c0_i32_2 = arith.constant 0 : i32
    return %c0_i32, %c0_i32_0, %c0_i32_1 : i32, i32, i32
  }
  func.func @transform_5(%arg0: i32) -> (i32, i32) {
    %c0_i32 = arith.constant 0 : i32
    %c0_i32_0 = arith.constant 0 : i32
    %c0_i32_1 = arith.constant 0 : i32
    return %c0_i32, %c0_i32_0 : i32, i32
  }
  func.func @transform_6(%arg0: i32) -> (i32, i32) {
    %c0_i32 = arith.constant 0 : i32
    %c0_i32_0 = arith.constant 0 : i32
    %c0_i32_1 = arith.constant 0 : i32
    return %c0_i32, %c0_i32_0 : i32, i32
  }
  func.func @transform_7(%arg0: i32) -> (i32, i32) {
    %c0_i32 = arith.constant 0 : i32
    %c0_i32_0 = arith.constant 0 : i32
    %c0_i32_1 = arith.constant 0 : i32
    return %c0_i32, %c0_i32_0 : i32, i32
  }
  func.func @transform_8(%arg0: i32) -> (i32, i32) {
    %c0_i32 = arith.constant 0 : i32
    %c0_i32_0 = arith.constant 0 : i32
    %c0_i32_1 = arith.constant 0 : i32
    return %c0_i32, %c0_i32_0 : i32, i32
  }
  func.func @transform_9(%arg0: i32) -> (i32, i32) {
    %c0_i32 = arith.constant 0 : i32
    %c0_i32_0 = arith.constant 0 : i32
    %c0_i32_1 = arith.constant 0 : i32
    return %c0_i32, %c0_i32_0 : i32, i32
  }
  func.func @transform_10(%arg0: i32) -> (i32, i32) {
    %c0_i32 = arith.constant 0 : i32
    %c0_i32_0 = arith.constant 0 : i32
    %c0_i32_1 = arith.constant 0 : i32
    return %c0_i32, %c0_i32_0 : i32, i32
  }
  func.func @transform_11(%arg0: i32) -> (i32, i32) {
    %c0_i32 = arith.constant 0 : i32
    %c0_i32_0 = arith.constant 0 : i32
    %c0_i32_1 = arith.constant 0 : i32
    return %c0_i32, %c0_i32_0 : i32, i32
  }
  func.func @transform_12(%arg0: i32) -> (i32, i32) {
    %c0_i32 = arith.constant 0 : i32
    %c0_i32_0 = arith.constant 0 : i32
    %c0_i32_1 = arith.constant 0 : i32
    return %c0_i32, %c0_i32_0 : i32, i32
  }
  func.func @transform_13(%arg0: i32) -> (i32, i32) {
    %c0_i32 = arith.constant 0 : i32
    %c0_i32_0 = arith.constant 0 : i32
    %c0_i32_1 = arith.constant 0 : i32
    return %c0_i32, %c0_i32_0 : i32, i32
  }
  func.func @transform_14(%arg0: i32) -> (i32, i32, i32, i32) {
    %c0_i32 = arith.constant 0 : i32
    %c0_i32_0 = arith.constant 0 : i32
    %c0_i32_1 = arith.constant 0 : i32
    %c0_i32_2 = arith.constant 0 : i32
    return %arg0, %c0_i32, %c0_i32_0, %c0_i32_1 : i32, i32, i32, i32
  }
}

</mosaic_0001>

<llo_original>
// kernel: tpu_custom_call.1
$region0: #{tpu_custom_call.1}
  #allocation0 [shape = 'u32[]', space=smem, size = 0x4, offset = 0x4, fixed_abs, tag = 'smem constant byte address 0x4 - core index']
  #allocation1 [shape = 'u32[144,128]{1,0:T(1,128)}', space=vmem, size = 0x12000, scoped, tag = 'internal scratch']
  #allocation2 [shape = 'f32[18,18,64]{2,1,0:T(8,128)}', space=vmem, size = 0x36000, scoped, tag = 'scratch operand']
  #allocation3 [shape = 'f32[16,16,64]{2,1,0:T(8,128)}', space=vmem, size = 0x20000, scoped, tag = 'scratch operand']
  %s0 = inlined_call_operand.hbm [shape: f32[2,16,16,16], index: 0, kind: input, shape index: {}]
  %s1 = inlined_call_operand.vmem [shape: f32[16,64], index: 1, kind: input, shape index: {}]
  %s2 = inlined_call_operand.vmem [shape: f32[1,64], index: 2, kind: input, shape index: {}]
  %s3 = inlined_call_operand.vmem [shape: f32[1,64], index: 3, kind: input, shape index: {}]
  %s4 = inlined_call_operand.vmem [shape: f32[3,3,64], index: 4, kind: input, shape index: {}]
  %s5 = inlined_call_operand.vmem [shape: f32[1,64], index: 5, kind: input, shape index: {}]
  %s6 = inlined_call_operand.vmem [shape: f32[1,64], index: 6, kind: input, shape index: {}]
  %s7 = inlined_call_operand.vmem [shape: f32[64,4], index: 7, kind: input, shape index: {}]
  %s8 = inlined_call_operand.vmem [shape: f32[1,4], index: 8, kind: input, shape index: {}]
  %s9 = inlined_call_operand.vmem [shape: f32[4,64], index: 9, kind: input, shape index: {}]
  %s10 = inlined_call_operand.vmem [shape: f32[1,64], index: 10, kind: input, shape index: {}]
  %s11 = inlined_call_operand.vmem [shape: f32[64,16], index: 11, kind: input, shape index: {}]
  %s12 = inlined_call_operand.vmem [shape: f32[1,16], index: 12, kind: input, shape index: {}]
  %s13 = inlined_call_operand.vmem [shape: f32[1,16], index: 13, kind: input, shape index: {}]
  %s14 = inlined_call_operand.hbm [shape: f32[2,16,16,16], index: 14, kind: output, shape index: {}]
  %s15 = sld [smem:[#allocation0]]
  $region93: #{tpu_custom_call.1} parent=0
    _
  %s17 = ssub.s32 1, %s15
  %s18 = scalar_select 0, %s17, %s15
  $region1: #{tpu_custom_call.1} parent=0
    #allocation4 [shape = 'u8[262144]{0}', space=vmem, size = 0x40000, scoped, tag = 'input window, operand 0']
    #allocation5 [shape = 's32[2]{0}', space=sflag, size = 0x8, scoped, tag = 'scoped memory for tpu_custom_call.1']
    #allocation6 [shape = 's32[2]{0}', space=sflag, size = 0x8, scoped, tag = 'scoped memory for tpu_custom_call.1']
    #allocation7 [shape = 'u8[262144]{0}', space=vmem, size = 0x40000, scoped, tag = 'output window, operand 0']
    %19 = vsyncpa [#allocation5], 0
    %s20 = scalar_lea.sflag [#allocation5], 1
    %21 = vsyncpa %s20, 0
    %22 = vsyncpa [#allocation6], 0
    %s23 = scalar_lea.sflag [#allocation6], 1
    %24 = vsyncpa %s23, 0
    loop: start=0, step=1, limit=4
    $region2: #{tpu_custom_call.1} parent=1 // loop_pre_header
      _
    $region3: #{tpu_custom_call.1} parent=1 // loop_header
      %s26 = sphi 0, %s30
      %p27 = scmp.ge.s32.totalorder %s26, 4
      %s36 = sphi 0, %s38
      %s39 = sphi 0, %s36
      %s40 = sphi 0, %s39
      %s56 = sphi 0, %s40
      %s60 = sphi 0, %s60
      %s62 = sphi 0, %s60
      %s63 = sphi 0, %s62
      %s77 = sphi 0, %s63
      %s81 = sphi 0, %s81
      %s83 = sphi 0, %s81
      %s84 = sphi 0, %s83
      %s98 = sphi 0, %s84
      %s102 = sphi 0, %s102
      %s104 = sphi 0, %s102
      %s105 = sphi 0, %s104
      %s119 = sphi 0, %s105
      %s123 = sphi 0, %s123
      %s125 = sphi 0, %s123
      %s126 = sphi 0, %s125
      %s140 = sphi 0, %s126
      %s144 = sphi 0, %s144
      %s146 = sphi 0, %s144
      %s147 = sphi 0, %s146
      %s161 = sphi 0, %s147
      %s165 = sphi 0, %s165
      %s167 = sphi 0, %s165
      %s168 = sphi 0, %s167
      %s182 = sphi 0, %s168
      %s186 = sphi 0, %s186
      %s188 = sphi 0, %s186
      %s189 = sphi 0, %s188
      %s203 = sphi 0, %s189
      %s207 = sphi 0, %s207
      %s209 = sphi 0, %s207
      %s210 = sphi 0, %s209
      %s224 = sphi 0, %s210
      %s228 = sphi 0, %s228
      %s230 = sphi 0, %s228
      %s231 = sphi 0, %s230
      %s245 = sphi 0, %s231
      %s249 = sphi 0, %s249
      %s251 = sphi 0, %s249
      %s252 = sphi 0, %s251
      %s266 = sphi 0, %s252
      %s270 = sphi 0, %s270
      %s272 = sphi 0, %s270
      %s273 = sphi 0, %s272
      %s287 = sphi 0, %s273
      %s291 = sphi 0, %s291
      %s293 = sphi 0, %s291
      %s294 = sphi 0, %s293
      %s308 = sphi 0, %s294
      %s312 = sphi 0, %s312
      %s314 = sphi 0, %s312
      %s315 = sphi 0, %s314
      %s329 = sphi 0, %s315
      %s335 = sphi 0, %s337
      %s338 = sphi 0, %s335
      %s339 = sphi 0, %s338
      %s355 = sphi 0, %s339
    $region4: #{tpu_custom_call.1} parent=1 // loop_header_branch
      %29 = sbr.rel (%p27) target = $region8
    $region5: #{tpu_custom_call.1} parent=1 // loop_body
      %s31 = ssub.s32 %s26, 1
      %s32 = ssub.s32 %s26, 2
      %s33 = sadd.s32 %s26, 1
      %s34 = ssub.s32 %s26, %s33
      %p35 = scmp.eq.s32.totalorder %s34, 0
      %s37 = sadd.s32 %s36, 1
      %s38 = scalar_select %p35, %s36, %s37
      %p41 = pneg %p35
      %p42 = scmp.eq.s32.totalorder %s26, 1
      %p43 = por %p41, %p42
      %p44 = scmp.ne.s32.totalorder %s36, %s39
      %p45 = scmp.eq.s32.totalorder %s26, 0
      %p46 = por %p44, %p45
      %p47 = scmp.ne.s32.totalorder %s36, %s39
      %p48 = scmp.eq.s32.totalorder %s31, 1
      %p49 = por %p47, %p48
      %p50 = scmp.ne.s32.totalorder %s39, %s40
      %p51 = scmp.eq.s32.totalorder %s31, 0
      %p52 = por %p50, %p51
      %p53 = scmp.ne.s32.totalorder %s39, %s40
      %p54 = scmp.eq.s32.totalorder %s32, 1
      %p55 = por %p53, %p54
      %p57 = scmp.ne.s32.totalorder %s40, %s56
      %p58 = scmp.eq.s32.totalorder %s32, 0
      %p59 = por %p57, %p58
      %s61 = sadd.s32 %s60, 1
      %p64 = scmp.eq.s32.totalorder %s26, 1
      %p65 = scmp.ne.s32.totalorder %s60, %s62
      %p66 = scmp.eq.s32.totalorder %s26, 0
      %p67 = por %p65, %p66
      %p68 = scmp.ne.s32.totalorder %s60, %s62
      %p69 = scmp.eq.s32.totalorder %s31, 1
      %p70 = por %p68, %p69
      %p71 = scmp.ne.s32.totalorder %s62, %s63
      %p72 = scmp.eq.s32.totalorder %s31, 0
      %p73 = por %p71, %p72
      %p74 = scmp.ne.s32.totalorder %s62, %s63
      %p75 = scmp.eq.s32.totalorder %s32, 1
      %p76 = por %p74, %p75
      %p78 = scmp.ne.s32.totalorder %s63, %s77
      %p79 = scmp.eq.s32.totalorder %s32, 0
      %p80 = por %p78, %p79
      %s82 = sadd.s32 %s81, 1
      %p85 = scmp.eq.s32.totalorder %s26, 1
      %p86 = scmp.ne.s32.totalorder %s81, %s83
      %p87 = scmp.eq.s32.totalorder %s26, 0
      %p88 = por %p86, %p87
      %p89 = scmp.ne.s32.totalorder %s81, %s83
      %p90 = scmp.eq.s32.totalorder %s31, 1
      %p91 = por %p89, %p90
      %p92 = scmp.ne.s32.totalorder %s83, %s84
      %p93 = scmp.eq.s32.totalorder %s31, 0
      %p94 = por %p92, %p93
      %p95 = scmp.ne.s32.totalorder %s83, %s84
      %p96 = scmp.eq.s32.totalorder %s32, 1
      %p97 = por %p95, %p96
      %p99 = scmp.ne.s32.totalorder %s84, %s98
      %p100 = scmp.eq.s32.totalorder %s32, 0
      %p101 = por %p99, %p100
      %s103 = sadd.s32 %s102, 1
      %p106 = scmp.eq.s32.totalorder %s26, 1
      %p107 = scmp.ne.s32.totalorder %s102, %s104
      %p108 = scmp.eq.s32.totalorder %s26, 0
      %p109 = por %p107, %p108
      %p110 = scmp.ne.s32.totalorder %s102, %s104
      %p111 = scmp.eq.s32.totalorder %s31, 1
      %p112 = por %p110, %p111
      %p113 = scmp.ne.s32.totalorder %s104, %s105
      %p114 = scmp.eq.s32.totalorder %s31, 0
      %p115 = por %p113, %p114
      %p116 = scmp.ne.s32.totalorder %s104, %s105
      %p117 = scmp.eq.s32.totalorder %s32, 1
      %p118 = por %p116, %p117
      %p120 = scmp.ne.s32.totalorder %s105, %s119
      %p121 = scmp.eq.s32.totalorder %s32, 0
      %p122 = por %p120, %p121
      %s124 = sadd.s32 %s123, 1
      %p127 = scmp.eq.s32.totalorder %s26, 1
      %p128 = scmp.ne.s32.totalorder %s123, %s125
      %p129 = scmp.eq.s32.totalorder %s26, 0
      %p130 = por %p128, %p129
      %p131 = scmp.ne.s32.totalorder %s123, %s125
      %p132 = scmp.eq.s32.totalorder %s31, 1
      %p133 = por %p131, %p132
      %p134 = scmp.ne.s32.totalorder %s125, %s126
      %p135 = scmp.eq.s32.totalorder %s31, 0
      %p136 = por %p134, %p135
      %p137 = scmp.ne.s32.totalorder %s125, %s126
      %p138 = scmp.eq.s32.totalorder %s32, 1
      %p139 = por %p137, %p138
      %p141 = scmp.ne.s32.totalorder %s126, %s140
      %p142 = scmp.eq.s32.totalorder %s32, 0
      %p143 = por %p141, %p142
      %s145 = sadd.s32 %s144, 1
      %p148 = scmp.eq.s32.totalorder %s26, 1
      %p149 = scmp.ne.s32.totalorder %s144, %s146
      %p150 = scmp.eq.s32.totalorder %s26, 0
      %p151 = por %p149, %p150
      %p152 = scmp.ne.s32.totalorder %s144, %s146
      %p153 = scmp.eq.s32.totalorder %s31, 1
      %p154 = por %p152, %p153
      %p155 = scmp.ne.s32.totalorder %s146, %s147
      %p156 = scmp.eq.s32.totalorder %s31, 0
      %p157 = por %p155, %p156
      %p158 = scmp.ne.s32.totalorder %s146, %s147
      %p159 = scmp.eq.s32.totalorder %s32, 1
      %p160 = por %p158, %p159
      %p162 = scmp.ne.s32.totalorder %s147, %s161
      %p163 = scmp.eq.s32.totalorder %s32, 0
      %p164 = por %p162, %p163
      %s166 = sadd.s32 %s165, 1
      %p169 = scmp.eq.s32.totalorder %s26, 1
      %p170 = scmp.ne.s32.totalorder %s165, %s167
      %p171 = scmp.eq.s32.totalorder %s26, 0
      %p172 = por %p170, %p171
      %p173 = scmp.ne.s32.totalorder %s165, %s167
      %p174 = scmp.eq.s32.totalorder %s31, 1
      %p175 = por %p173, %p174
      %p176 = scmp.ne.s32.totalorder %s167, %s168
      %p177 = scmp.eq.s32.totalorder %s31, 0
      %p178 = por %p176, %p177
      %p179 = scmp.ne.s32.totalorder %s167, %s168
      %p180 = scmp.eq.s32.totalorder %s32, 1
      %p181 = por %p179, %p180
      %p183 = scmp.ne.s32.totalorder %s168, %s182
      %p184 = scmp.eq.s32.totalorder %s32, 0
      %p185 = por %p183, %p184
      %s187 = sadd.s32 %s186, 1
      %p190 = scmp.eq.s32.totalorder %s26, 1
      %p191 = scmp.ne.s32.totalorder %s186, %s188
      %p192 = scmp.eq.s32.totalorder %s26, 0
      %p193 = por %p191, %p192
      %p194 = scmp.ne.s32.totalorder %s186, %s188
      %p195 = scmp.eq.s32.totalorder %s31, 1
      %p196 = por %p194, %p195
      %p197 = scmp.ne.s32.totalorder %s188, %s189
      %p198 = scmp.eq.s32.totalorder %s31, 0
      %p199 = por %p197, %p198
      %p200 = scmp.ne.s32.totalorder %s188, %s189
      %p201 = scmp.eq.s32.totalorder %s32, 1
      %p202 = por %p200, %p201
      %p204 = scmp.ne.s32.totalorder %s189, %s203
      %p205 = scmp.eq.s32.totalorder %s32, 0
      %p206 = por %p204, %p205
      %s208 = sadd.s32 %s207, 1
      %p211 = scmp.eq.s32.totalorder %s26, 1
      %p212 = scmp.ne.s32.totalorder %s207, %s209
      %p213 = scmp.eq.s32.totalorder %s26, 0
      %p214 = por %p212, %p213
      %p215 = scmp.ne.s32.totalorder %s207, %s209
      %p216 = scmp.eq.s32.totalorder %s31, 1
      %p217 = por %p215, %p216
      %p218 = scmp.ne.s32.totalorder %s209, %s210
      %p219 = scmp.eq.s32.totalorder %s31, 0
      %p220 = por %p218, %p219
      %p221 = scmp.ne.s32.totalorder %s209, %s210
      %p222 = scmp.eq.s32.totalorder %s32, 1
      %p223 = por %p221, %p222
      %p225 = scmp.ne.s32.totalorder %s210, %s224
      %p226 = scmp.eq.s32.totalorder %s32, 0
      %p227 = por %p225, %p226
      %s229 = sadd.s32 %s228, 1
      %p232 = scmp.eq.s32.totalorder %s26, 1
      %p233 = scmp.ne.s32.totalorder %s228, %s230
      %p234 = scmp.eq.s32.totalorder %s26, 0
      %p235 = por %p233, %p234
      %p236 = scmp.ne.s32.totalorder %s228, %s230
      %p237 = scmp.eq.s32.totalorder %s31, 1
      %p238 = por %p236, %p237
      %p239 = scmp.ne.s32.totalorder %s230, %s231
      %p240 = scmp.eq.s32.totalorder %s31, 0
      %p241 = por %p239, %p240
      %p242 = scmp.ne.s32.totalorder %s230, %s231
      %p243 = scmp.eq.s32.totalorder %s32, 1
      %p244 = por %p242, %p243
      %p246 = scmp.ne.s32.totalorder %s231, %s245
      %p247 = scmp.eq.s32.totalorder %s32, 0
      %p248 = por %p246, %p247
      %s250 = sadd.s32 %s249, 1
      %p253 = scmp.eq.s32.totalorder %s26, 1
      %p254 = scmp.ne.s32.totalorder %s249, %s251
      %p255 = scmp.eq.s32.totalorder %s26, 0
      %p256 = por %p254, %p255
      %p257 = scmp.ne.s32.totalorder %s249, %s251
      %p258 = scmp.eq.s32.totalorder %s31, 1
      %p259 = por %p257, %p258
      %p260 = scmp.ne.s32.totalorder %s251, %s252
      %p261 = scmp.eq.s32.totalorder %s31, 0
      %p262 = por %p260, %p261
      %p263 = scmp.ne.s32.totalorder %s251, %s252
      %p264 = scmp.eq.s32.totalorder %s32, 1
      %p265 = por %p263, %p264
      %p267 = scmp.ne.s32.totalorder %s252, %s266
      %p268 = scmp.eq.s32.totalorder %s32, 0
      %p269 = por %p267, %p268
      %s271 = sadd.s32 %s270, 1
      %p274 = scmp.eq.s32.totalorder %s26, 1
      %p275 = scmp.ne.s32.totalorder %s270, %s272
      %p276 = scmp.eq.s32.totalorder %s26, 0
      %p277 = por %p275, %p276
      %p278 = scmp.ne.s32.totalorder %s270, %s272
      %p279 = scmp.eq.s32.totalorder %s31, 1
      %p280 = por %p278, %p279
      %p281 = scmp.ne.s32.totalorder %s272, %s273
      %p282 = scmp.eq.s32.totalorder %s31, 0
      %p283 = por %p281, %p282
      %p284 = scmp.ne.s32.totalorder %s272, %s273
      %p285 = scmp.eq.s32.totalorder %s32, 1
      %p286 = por %p284, %p285
      %p288 = scmp.ne.s32.totalorder %s273, %s287
      %p289 = scmp.eq.s32.totalorder %s32, 0
      %p290 = por %p288, %p289
      %s292 = sadd.s32 %s291, 1
      %p295 = scmp.eq.s32.totalorder %s26, 1
      %p296 = scmp.ne.s32.totalorder %s291, %s293
      %p297 = scmp.eq.s32.totalorder %s26, 0
      %p298 = por %p296, %p297
      %p299 = scmp.ne.s32.totalorder %s291, %s293
      %p300 = scmp.eq.s32.totalorder %s31, 1
      %p301 = por %p299, %p300
      %p302 = scmp.ne.s32.totalorder %s293, %s294
      %p303 = scmp.eq.s32.totalorder %s31, 0
      %p304 = por %p302, %p303
      %p305 = scmp.ne.s32.totalorder %s293, %s294
      %p306 = scmp.eq.s32.totalorder %s32, 1
      %p307 = por %p305, %p306
      %p309 = scmp.ne.s32.totalorder %s294, %s308
      %p310 = scmp.eq.s32.totalorder %s32, 0
      %p311 = por %p309, %p310
      %s313 = sadd.s32 %s312, 1
      %p316 = scmp.eq.s32.totalorder %s26, 1
      %p317 = scmp.ne.s32.totalorder %s312, %s314
      %p318 = scmp.eq.s32.totalorder %s26, 0
      %p319 = por %p317, %p318
      %p320 = scmp.ne.s32.totalorder %s312, %s314
      %p321 = scmp.eq.s32.totalorder %s31, 1
      %p322 = por %p320, %p321
      %p323 = scmp.ne.s32.totalorder %s314, %s315
      %p324 = scmp.eq.s32.totalorder %s31, 0
      %p325 = por %p323, %p324
      %p326 = scmp.ne.s32.totalorder %s314, %s315
      %p327 = scmp.eq.s32.totalorder %s32, 1
      %p328 = por %p326, %p327
      %p330 = scmp.ne.s32.totalorder %s315, %s329
      %p331 = scmp.eq.s32.totalorder %s32, 0
      %p332 = por %p330, %p331
      %s333 = ssub.s32 %s26, %s33
      %p334 = scmp.eq.s32.totalorder %s333, 0
      %s336 = sadd.s32 %s335, 1
      %s337 = scalar_select %p334, %s335, %s336
      %p340 = pneg %p334
      %p341 = scmp.eq.s32.totalorder %s26, 1
      %p342 = por %p340, %p341
      %p343 = scmp.ne.s32.totalorder %s335, %s338
      %p344 = scmp.eq.s32.totalorder %s26, 0
      %p345 = por %p343, %p344
      %p346 = scmp.ne.s32.totalorder %s335, %s338
      %p347 = scmp.eq.s32.totalorder %s31, 1
      %p348 = por %p346, %p347
      %p349 = scmp.ne.s32.totalorder %s338, %s339
      %p350 = scmp.eq.s32.totalorder %s31, 0
      %p351 = por %p349, %p350
      %p352 = scmp.ne.s32.totalorder %s338, %s339
      %p353 = scmp.eq.s32.totalorder %s32, 1
      %p354 = por %p352, %p353
      %p356 = scmp.ne.s32.totalorder %s339, %s355
      %p357 = scmp.eq.s32.totalorder %s32, 0
      %p358 = por %p356, %p357
      %p359 = scmp.le.s32.totalorder 1, %s26
      %p360 = scmp.lt.s32.totalorder %s26, 3
      %p361 = pnand %p359, %p360
      %p362 = pneg %p361
      // Predicated region
      $region9: #{tpu_custom_call.1} parent=5 // pred_check
        _
      $region10: #{tpu_custom_call.1} parent=5 // pred_check_branch
        %364 = sbr.rel (%p361) target = $region12
      $region11: #{tpu_custom_call.1} parent=5 // pred_region
        %s365 = ssub.s32 %s26, 1
        // Predicated region
        $region13: #{tpu_custom_call.1} parent=11 // pred_check
          %p366 = pneg %p73
        $region14: #{tpu_custom_call.1} parent=11 // pred_check_branch
          %368 = sbr.rel (%p366) target = $region16
        $region15: #{tpu_custom_call.1} parent=11 // pred_region
          _
        $region16: #{tpu_custom_call.1} parent=11 // pred_fallthru
          _
        // Predicated region
        $region17: #{tpu_custom_call.1} parent=11 // pred_check
          %p369 = pneg %p94
        $region18: #{tpu_custom_call.1} parent=11 // pred_check_branch
          %371 = sbr.rel (%p369) target = $region20
        $region19: #{tpu_custom_call.1} parent=11 // pred_region
          _
        $region20: #{tpu_custom_call.1} parent=11 // pred_fallthru
          _
        // Predicated region
        $region21: #{tpu_custom_call.1} parent=11 // pred_check
          %p372 = pneg %p115
        $region22: #{tpu_custom_call.1} parent=11 // pred_check_branch
          %374 = sbr.rel (%p372) target = $region24
        $region23: #{tpu_custom_call.1} parent=11 // pred_region
          _
        $region24: #{tpu_custom_call.1} parent=11 // pred_fallthru
          _
        // Predicated region
        $region25: #{tpu_custom_call.1} parent=11 // pred_check
          %p375 = pneg %p136
        $region26: #{tpu_custom_call.1} parent=11 // pred_check_branch
          %377 = sbr.rel (%p375) target = $region28
        $region27: #{tpu_custom_call.1} parent=11 // pred_region
          _
        $region28: #{tpu_custom_call.1} parent=11 // pred_fallthru
          _
        // Predicated region
        $region29: #{tpu_custom_call.1} parent=11 // pred_check
          %p378 = pneg %p157
        $region30: #{tpu_custom_call.1} parent=11 // pred_check_branch
          %380 = sbr.rel (%p378) target = $region32
        $region31: #{tpu_custom_call.1} parent=11 // pred_region
          _
        $region32: #{tpu_custom_call.1} parent=11 // pred_fallthru
          _
        // Predicated region
        $region33: #{tpu_custom_call.1} parent=11 // pred_check
          %p381 = pneg %p178
        $region34: #{tpu_custom_call.1} parent=11 // pred_check_branch
          %383 = sbr.rel (%p381) target = $region36
        $region35: #{tpu_custom_call.1} parent=11 // pred_region
          _
        $region36: #{tpu_custom_call.1} parent=11 // pred_fallthru
          _
        // Predicated region
        $region37: #{tpu_custom_call.1} parent=11 // pred_check
          %p384 = pneg %p199
        $region38: #{tpu_custom_call.1} parent=11 // pred_check_branch
          %386 = sbr.rel (%p384) target = $region40
        $region39: #{tpu_custom_call.1} parent=11 // pred_region
          _
        $region40: #{tpu_custom_call.1} parent=11 // pred_fallthru
          _
        // Predicated region
        $region41: #{tpu_custom_call.1} parent=11 // pred_check
          %p387 = pneg %p220
        $region42: #{tpu_custom_call.1} parent=11 // pred_check_branch
          %389 = sbr.rel (%p387) target = $region44
        $region43: #{tpu_custom_call.1} parent=11 // pred_region
          _
        $region44: #{tpu_custom_call.1} parent=11 // pred_fallthru
          _
        // Predicated region
        $region45: #{tpu_custom_call.1} parent=11 // pred_check
          %p390 = pneg %p241
        $region46: #{tpu_custom_call.1} parent=11 // pred_check_branch
          %392 = sbr.rel (%p390) target = $region48
        $region47: #{tpu_custom_call.1} parent=11 // pred_region
          _
        $region48: #{tpu_custom_call.1} parent=11 // pred_fallthru
          _
        // Predicated region
        $region49: #{tpu_custom_call.1} parent=11 // pred_check
          %p393 = pneg %p262
        $region50: #{tpu_custom_call.1} parent=11 // pred_check_branch
          %395 = sbr.rel (%p393) target = $region52
        $region51: #{tpu_custom_call.1} parent=11 // pred_region
          _
        $region52: #{tpu_custom_call.1} parent=11 // pred_fallthru
          _
        // Predicated region
        $region53: #{tpu_custom_call.1} parent=11 // pred_check
          %p396 = pneg %p283
        $region54: #{tpu_custom_call.1} parent=11 // pred_check_branch
          %398 = sbr.rel (%p396) target = $region56
        $region55: #{tpu_custom_call.1} parent=11 // pred_region
          _
        $region56: #{tpu_custom_call.1} parent=11 // pred_fallthru
          _
        // Predicated region
        $region57: #{tpu_custom_call.1} parent=11 // pred_check
          %p399 = pneg %p304
        $region58: #{tpu_custom_call.1} parent=11 // pred_check_branch
          %401 = sbr.rel (%p399) target = $region60
        $region59: #{tpu_custom_call.1} parent=11 // pred_region
          _
        $region60: #{tpu_custom_call.1} parent=11 // pred_fallthru
          _
        // Predicated region
        $region61: #{tpu_custom_call.1} parent=11 // pred_check
          %p402 = pneg %p325
        $region62: #{tpu_custom_call.1} parent=11 // pred_check_branch
          %404 = sbr.rel (%p402) target = $region64
        $region63: #{tpu_custom_call.1} parent=11 // pred_region
          _
        $region64: #{tpu_custom_call.1} parent=11 // pred_fallthru
          _
      $region12: #{tpu_custom_call.1} parent=5 // pred_fallthru
        _
      %p405 = scmp.lt.s32.totalorder %s26, 2
      // Predicated region
      $region65: #{tpu_custom_call.1} parent=5 // pred_check
        %p406 = pneg %p405
      $region66: #{tpu_custom_call.1} parent=5 // pred_check_branch
        %408 = sbr.rel (%p406) target = $region68
      $region67: #{tpu_custom_call.1} parent=5 // pred_region
        // Predicated region
        $region69: #{tpu_custom_call.1} parent=67 // pred_check
          %p409 = pneg %p46
        $region70: #{tpu_custom_call.1} parent=67 // pred_check_branch
          %411 = sbr.rel (%p409) target = $region72
        $region71: #{tpu_custom_call.1} parent=67 // pred_region
          %s412 = sand.u32 %s36, 1
          %s413 = scalar_lea.sflag [#allocation5], %s412
          %s414 = sand.u32 %s36, 1
          %s415 = smul.addr %s414, 256
          %s416 = scalar_lea.vmem [#allocation4], %s415
          %s418 = ssub.s32 4096, 4096
          %419 = vsyncadd %s413, %s418
          %s420 = smul.addr %s26, 32
          %s421 = smul.addr %s420, 128
          %s422 = scalar_lea.hbm %s0, %s421
          %s423 = sshll.u32 %s416, 4
          %s424 = int_to_ptr.vmem [resolvable:$true] %s423
          %429 = dma.hbm_to_vmem [thread:$0]  %s422, 4096, %s424, %s413, 128, 128, 8
        $region72: #{tpu_custom_call.1} parent=67 // pred_fallthru
          _
      $region68: #{tpu_custom_call.1} parent=5 // pred_fallthru
        _
      %p430 = scmp.le.s32.totalorder 1, %s26
      %p431 = scmp.lt.s32.totalorder %s26, 3
      %p432 = pnand %p430, %p431
      %p433 = pneg %p432
      // Predicated region
      $region73: #{tpu_custom_call.1} parent=5 // pred_check
        _
      $region74: #{tpu_custom_call.1} parent=5 // pred_check_branch
        %435 = sbr.rel (%p432) target = $region76
      $region75: #{tpu_custom_call.1} parent=5 // pred_region
        %s436 = ssub.s32 %s26, 1
        %s437 = sand.u32 %s39, 1
        %s438 = scalar_lea.sflag [#allocation5], %s437
        %s439 = sand.u32 %s39, 1
        %s440 = smul.addr %s439, 256
        %s441 = scalar_lea.vmem [#allocation4], %s440
        // Predicated region
        $region77: #{tpu_custom_call.1} parent=75 // pred_check
          %p442 = pneg %p52
        $region78: #{tpu_custom_call.1} parent=75 // pred_check_branch
          %444 = sbr.rel (%p442) target = $region80
        $region79: #{tpu_custom_call.1} parent=75 // pred_region
          %445 = dma.done %s438, 4096
        $region80: #{tpu_custom_call.1} parent=75 // pred_fallthru
          _
        %s446 = sand.u32 %s39, 1
        %s447 = scalar_lea.sflag [#allocation5], %s446
        %s448 = sand.u32 %s39, 1
        %s449 = smul.addr %s448, 256
        %s450 = scalar_lea.vmem [#allocation4], %s449
        %p451 = pneg %p52
        %p452 = pneg %p49
        %p453 = pneg %p73
        %p454 = pneg %p70
        %p455 = pneg %p94
        %p456 = pneg %p91
        %p457 = pneg %p115
        %p458 = pneg %p112
        %p459 = pneg %p136
        %p460 = pneg %p133
        %p461 = pneg %p157
        %p462 = pneg %p154
        %p463 = pneg %p178
        %p464 = pneg %p175
        %p465 = pneg %p199
        %p466 = pneg %p196
        %p467 = pneg %p220
        %p468 = pneg %p217
        %p469 = pneg %p241
        %p470 = pneg %p238
        %p471 = pneg %p262
        %p472 = pneg %p259
        %p473 = pneg %p283
        %p474 = pneg %p280
        %p475 = pneg %p304
        %p476 = pneg %p301
        %p477 = pneg %p325
        %p478 = pneg %p322
        %p479 = pneg %p351
        %p480 = pneg %p348
        %s481 = sand.u32 %s338, 1
        %s482 = scalar_lea.sflag [#allocation6], %s481
        %s483 = sand.u32 %s338, 1
        %s484 = smul.addr %s483, 256
        %s485 = scalar_lea.vmem [#allocation7], %s484
        %v486 = vld [vmem:[%s5] sm:$0x1]
        %v487 = vld [vmem:[%s6] sm:$0x1]
        %v488 = vld [vmem:[%s12] sm:$0x1]
        %v489 = vld [vmem:[%s13] sm:$0x1]
        %v490 = vld [vmem:[%s11] sm:$0xff]
        %v491 = vld [vmem:[%s11 + $0x8] sm:$0xff]
        %v492 = vld [vmem:[%s11 + $0x10] sm:$0xff]
        %v493 = vld [vmem:[%s11 + $0x18] sm:$0xff]
        %v494 = vld [vmem:[%s11 + $0x20] sm:$0xff]
        %v495 = vld [vmem:[%s11 + $0x28] sm:$0xff]
        %v496 = vld [vmem:[%s11 + $0x30] sm:$0xff]
        %v497 = vld [vmem:[%s11 + $0x38] sm:$0xff]
        %v498 = vld [vmem:[%s1] sm:$0xff]
        %v499 = vld [vmem:[%s1 + $0x8] sm:$0xff]
        %v500 = vld [vmem:[%s2] sm:$0x1]
        %v501 = vld [vmem:[%s3] sm:$0x1]
        %vm502 = vcmask 523264
        %503 = vst.msk [vmem:[#allocation2] sm:$0xff] %vm502, 0.0
        %504 = vst.msk [vmem:[#allocation2 + $0x8] sm:$0xff] %vm502, 0.0
        %vm505 = vcmask 517120
        %506 = vst.msk [vmem:[#allocation2 + $0x10] sm:$0x3] %vm505, 0.0
        %s507 = scalar_lea.vmem [#allocation2], 408
        %508 = vst.msk [vmem:[%s507] sm:$0xff] %vm502, 0.0
        %509 = vst.msk [vmem:[%s507 + $0x8] sm:$0xff] %vm502, 0.0
        %510 = vst.msk [vmem:[%s507 + $0x10] sm:$0x3] %vm505, 0.0
        %vm511 = vcmask 516096
        %512 = vst.msk [vmem:[#allocation2] sm:$0x1] %vm511, 0.0
        %513 = vst.msk [vmem:[#allocation2 + $0x18] sm:$0x1] %vm511, 0.0
        %514 = vst.msk [vmem:[#allocation2 + $0x30] sm:$0x1] %vm511, 0.0
        %515 = vst.msk [vmem:[#allocation2 + $0x48] sm:$0x1] %vm511, 0.0
        %516 = vst.msk [vmem:[#allocation2 + $0x60] sm:$0x1] %vm511, 0.0
        %517 = vst.msk [vmem:[#allocation2 + $0x78] sm:$0x1] %vm511, 0.0
        %518 = vst.msk [vmem:[#allocation2 + $0x90] sm:$0x1] %vm511, 0.0
        %519 = vst.msk [vmem:[#allocation2 + $0xa8] sm:$0x1] %vm511, 0.0
        %520 = vst.msk [vmem:[#allocation2 + $0xc0] sm:$0x1] %vm511, 0.0
        %521 = vst.msk [vmem:[#allocation2 + $0xd8] sm:$0x1] %vm511, 0.0
        %522 = vst.msk [vmem:[#allocation2 + $0xf0] sm:$0x1] %vm511, 0.0
        %523 = vst.msk [vmem:[#allocation2 + $0x108] sm:$0x1] %vm511, 0.0
        %524 = vst.msk [vmem:[#allocation2 + $0x120] sm:$0x1] %vm511, 0.0
        %525 = vst.msk [vmem:[#allocation2 + $0x138] sm:$0x1] %vm511, 0.0
        %526 = vst.msk [vmem:[#allocation2 + $0x150] sm:$0x1] %vm511, 0.0
        %527 = vst.msk [vmem:[#allocation2 + $0x168] sm:$0x1] %vm511, 0.0
        %528 = vst.msk [vmem:[#allocation2 + $0x180] sm:$0x1] %vm511, 0.0
        %529 = vst.msk [vmem:[#allocation2 + $0x198] sm:$0x1] %vm511, 0.0
        %530 = vst.msk [vmem:[#allocation2 + $0x11] sm:$0x1] %vm511, 0.0
        %531 = vst.msk [vmem:[#allocation2 + $0x29] sm:$0x1] %vm511, 0.0
        %532 = vst.msk [vmem:[#allocation2 + $0x41] sm:$0x1] %vm511, 0.0
        %533 = vst.msk [vmem:[#allocation2 + $0x59] sm:$0x1] %vm511, 0.0
        %534 = vst.msk [vmem:[#allocation2 + $0x71] sm:$0x1] %vm511, 0.0
        %535 = vst.msk [vmem:[#allocation2 + $0x89] sm:$0x1] %vm511, 0.0
        %536 = vst.msk [vmem:[#allocation2 + $0xa1] sm:$0x1] %vm511, 0.0
        %537 = vst.msk [vmem:[#allocation2 + $0xb9] sm:$0x1] %vm511, 0.0
        %538 = vst.msk [vmem:[#allocation2 + $0xd1] sm:$0x1] %vm511, 0.0
        %539 = vst.msk [vmem:[#allocation2 + $0xe9] sm:$0x1] %vm511, 0.0
        %540 = vst.msk [vmem:[#allocation2 + $0x101] sm:$0x1] %vm511, 0.0
        %541 = vst.msk [vmem:[#allocation2 + $0x119] sm:$0x1] %vm511, 0.0
        %542 = vst.msk [vmem:[#allocation2 + $0x131] sm:$0x1] %vm511, 0.0
        %543 = vst.msk [vmem:[#allocation2 + $0x149] sm:$0x1] %vm511, 0.0
        %544 = vst.msk [vmem:[#allocation2 + $0x161] sm:$0x1] %vm511, 0.0
        %545 = vst.msk [vmem:[#allocation2 + $0x179] sm:$0x1] %vm511, 0.0
        %546 = vst.msk [vmem:[#allocation2 + $0x191] sm:$0x1] %vm511, 0.0
        %547 = vst.msk [vmem:[#allocation2 + $0x1a9] sm:$0x1] %vm511, 0.0
        %v548 = vld [vmem:[%s441] sm:$0xff]
        %v549 = vld [vmem:[%s441 + $0x8] sm:$0xff]
        %v550 = vld [vmem:[%s441 + $0x10] sm:$0xff]
        %v551 = vld [vmem:[%s441 + $0x18] sm:$0xff]
        %v552 = vld [vmem:[%s441 + $0x20] sm:$0xff]
        %v553 = vld [vmem:[%s441 + $0x28] sm:$0xff]
        %v554 = vld [vmem:[%s441 + $0x30] sm:$0xff]
        %v555 = vld [vmem:[%s441 + $0x38] sm:$0xff]
        %v556 = vld [vmem:[%s441 + $0x40] sm:$0xff]
        %v557 = vld [vmem:[%s441 + $0x48] sm:$0xff]
        %v558 = vld [vmem:[%s441 + $0x50] sm:$0xff]
        %v559 = vld [vmem:[%s441 + $0x58] sm:$0xff]
        %v560 = vld [vmem:[%s441 + $0x60] sm:$0xff]
        %v561 = vld [vmem:[%s441 + $0x68] sm:$0xff]
        %v562 = vld [vmem:[%s441 + $0x70] sm:$0xff]
        %v563 = vld [vmem:[%s441 + $0x78] sm:$0xff]
        %v564 = vld [vmem:[%s441 + $0x80] sm:$0xff]
        %v565 = vld [vmem:[%s441 + $0x88] sm:$0xff]
        %v566 = vld [vmem:[%s441 + $0x90] sm:$0xff]
        %v567 = vld [vmem:[%s441 + $0x98] sm:$0xff]
        %v568 = vld [vmem:[%s441 + $0xa0] sm:$0xff]
        %v569 = vld [vmem:[%s441 + $0xa8] sm:$0xff]
        %v570 = vld [vmem:[%s441 + $0xb0] sm:$0xff]
        %v571 = vld [vmem:[%s441 + $0xb8] sm:$0xff]
        %v572 = vld [vmem:[%s441 + $0xc0] sm:$0xff]
        %v573 = vld [vmem:[%s441 + $0xc8] sm:$0xff]
        %v574 = vld [vmem:[%s441 + $0xd0] sm:$0xff]
        %v575 = vld [vmem:[%s441 + $0xd8] sm:$0xff]
        %v576 = vld [vmem:[%s441 + $0xe0] sm:$0xff]
        %v577 = vld [vmem:[%s441 + $0xe8] sm:$0xff]
        %v578 = vld [vmem:[%s441 + $0xf0] sm:$0xff]
        %v579 = vld [vmem:[%s441 + $0xf8] sm:$0xff]
        %vm580 = vcmask 130048
        %v582 = vsel %vm580, %v548, 0
        %v585 = vsel %vm580, %v549, 0
        %v588 = vsel %vm580, %v550, 0
        %v591 = vsel %vm580, %v551, 0
        %v594 = vsel %vm580, %v552, 0
        %v597 = vsel %vm580, %v553, 0
        %v600 = vsel %vm580, %v554, 0
        %v603 = vsel %vm580, %v555, 0
        %v606 = vsel %vm580, %v556, 0
        %v609 = vsel %vm580, %v557, 0
        %v612 = vsel %vm580, %v558, 0
        %v615 = vsel %vm580, %v559, 0
        %v618 = vsel %vm580, %v560, 0
        %v621 = vsel %vm580, %v561, 0
        %v624 = vsel %vm580, %v562, 0
        %v627 = vsel %vm580, %v563, 0
        %v630 = vsel %vm580, %v564, 0
        %v633 = vsel %vm580, %v565, 0
        %v636 = vsel %vm580, %v566, 0
        %v639 = vsel %vm580, %v567, 0
        %v642 = vsel %vm580, %v568, 0
        %v645 = vsel %vm580, %v569, 0
        %v648 = vsel %vm580, %v570, 0
        %v651 = vsel %vm580, %v571, 0
        %v654 = vsel %vm580, %v572, 0
        %v657 = vsel %vm580, %v573, 0
        %v660 = vsel %vm580, %v574, 0
        %v663 = vsel %vm580, %v575, 0
        %v666 = vsel %vm580, %v576, 0
        %v669 = vsel %vm580, %v577, 0
        %v672 = vsel %vm580, %v578, 0
        %v675 = vsel %vm580, %v579, 0
        %677 = vmatprep.subr.mxu0 0.0
        %678 = vmatpush1.msra.mxu0 %v498
        %679 = vmatprep.subr.mxu0 0.0
        %680 = vmatpush1.msra.mxu0 %v499
        %681 = vmatprep.subr.mxu0 0.0
        %682 = vmatpush1.msra.mxu0 0.0
        %683 = vmatprep.subr.mxu0 0.0
        %684 = vmatpush1.msra.mxu0 0.0
        %685 = vmatprep.subr.mxu0 0.0
        %686 = vmatpush1.msra.mxu0 0.0
        %687 = vmatprep.subr.mxu0 0.0
        %688 = vmatpush1.msra.mxu0 0.0
        %689 = vmatprep.subr.mxu0 0.0
        %690 = vmatpush1.msra.mxu0 0.0
        %691 = vmatprep.subr.mxu0 0.0
        %692 = vmatpush1.msra.mxu0 0.0
        %693 = vmatprep.subr.mxu0 0.0
        %694 = vmatpush1.msra.mxu0 0.0
        %695 = vmatprep.subr.mxu0 0.0
        %696 = vmatpush1.msra.mxu0 0.0
        %697 = vmatprep.subr.mxu0 0.0
        %698 = vmatpush1.msra.mxu0 0.0
        %699 = vmatprep.subr.mxu0 0.0
        %700 = vmatpush1.msra.mxu0 0.0
        %701 = vmatprep.subr.mxu0 0.0
        %702 = vmatpush1.msra.mxu0 0.0
        %703 = vmatprep.subr.mxu0 0.0
        %704 = vmatpush1.msra.mxu0 0.0
        %705 = vmatprep.subr.mxu0 0.0
        %706 = vmatpush1.msra.mxu0 0.0
        %707 = vmatprep.subr.mxu0 0.0
        %708 = vmatpush1.msra.mxu0 0.0
        %709 = vmatprep.subr.mxu0 0.0
        %710 = vmatpush1.msra.mxu0 0.0
        %711 = vmatprep.subr.mxu0 0.0
        %712 = vmatpush1.msra.mxu0 0.0
        %713 = vmatprep.subr.mxu0 0.0
        %714 = vmatpush1.msra.mxu0 0.0
        %715 = vmatprep.subr.mxu0 0.0
        %716 = vmatpush1.msra.mxu0 0.0
        %717 = vmatprep.subr.mxu0 0.0
        %718 = vmatpush1.msra.mxu0 0.0
        %719 = vmatprep.subr.mxu0 0.0
        %720 = vmatpush1.msra.mxu0 0.0
        %721 = vmatprep.subr.mxu0 0.0
        %722 = vmatpush1.msra.mxu0 0.0
        %723 = vmatprep.subr.mxu0 0.0
        %724 = vmatpush1.msra.mxu0 0.0
        %725 = vmatprep.subr.mxu0 0.0
        %726 = vmatpush1.msra.mxu0 0.0
        %727 = vmatprep.subr.mxu0 0.0
        %728 = vmatpush1.msra.mxu0 0.0
        %729 = vmatprep.subr.mxu0 0.0
        %730 = vmatpush1.msra.mxu0 0.0
        %731 = vmatprep.subr.mxu0 0.0
        %732 = vmatpush1.msra.mxu0 0.0
        %733 = vmatprep.subr.mxu0 0.0
        %734 = vmatpush1.msra.mxu0 0.0
        %735 = vmatprep.subr.mxu0 0.0
        %736 = vmatpush1.msra.mxu0 0.0
        %737 = vmatprep.subr.mxu0 0.0
        %738 = vmatpush1.msra.mxu0 0.0
        %739 = vmatprep.subr.mxu0 0.0
        %740 = vmatpush1.msra.mxu0 0.0
        %741 = vmatprep.mubr.f32.mxu0 0.0
        %742 = vmatmul.mubr.f32.gmra.mrb[0].mxu0 %v582
        %v743 = vpop.f32.mrb[0].mxu0
        %v744 = vadd.f32 0.0, %v743
        %v745 = vpop.f32.mrb[0].mxu0
        %746 = vmatprep.mubr.f32.mxu0 0.0
        %747 = vmatmul.mubr.f32.gmra.mrb[0].mxu0 %v585
        %v748 = vpop.f32.mrb[0].mxu0
        %v749 = vadd.f32 0.0, %v748
        %v750 = vpop.f32.mrb[0].mxu0
        %751 = vmatprep.mubr.f32.mxu0 0.0
        %752 = vmatmul.mubr.f32.gmra.mrb[0].mxu0 %v588
        %v753 = vpop.f32.mrb[0].mxu0
        %v754 = vadd.f32 0.0, %v753
        %v755 = vpop.f32.mrb[0].mxu0
        %756 = vmatprep.mubr.f32.mxu0 0.0
        %757 = vmatmul.mubr.f32.gmra.mrb[0].mxu0 %v591
        %v758 = vpop.f32.mrb[0].mxu0
        %v759 = vadd.f32 0.0, %v758
        %v760 = vpop.f32.mrb[0].mxu0
        %761 = vmatprep.mubr.f32.mxu0 0.0
        %762 = vmatmul.mubr.f32.gmra.mrb[0].mxu0 %v594
        %v763 = vpop.f32.mrb[0].mxu0
        %v764 = vadd.f32 0.0, %v763
        %v765 = vpop.f32.mrb[0].mxu0
        %766 = vmatprep.mubr.f32.mxu0 0.0
        %767 = vmatmul.mubr.f32.gmra.mrb[0].mxu0 %v597
        %v768 = vpop.f32.mrb[0].mxu0
        %v769 = vadd.f32 0.0, %v768
        %v770 = vpop.f32.mrb[0].mxu0
        %771 = vmatprep.mubr.f32.mxu0 0.0
        %772 = vmatmul.mubr.f32.gmra.mrb[0].mxu0 %v600
        %v773 = vpop.f32.mrb[0].mxu0
        %v774 = vadd.f32 0.0, %v773
        %v775 = vpop.f32.mrb[0].mxu0
        %776 = vmatprep.mubr.f32.mxu0 0.0
        %777 = vmatmul.mubr.f32.gmra.mrb[0].mxu0 %v603
        %v778 = vpop.f32.mrb[0].mxu0
        %v779 = vadd.f32 0.0, %v778
        %v780 = vpop.f32.mrb[0].mxu0
        %781 = vmatprep.mubr.f32.mxu0 0.0
        %782 = vmatmul.mubr.f32.gmra.mrb[0].mxu0 %v606
        %v783 = vpop.f32.mrb[0].mxu0
        %v784 = vadd.f32 0.0, %v783
        %v785 = vpop.f32.mrb[0].mxu0
        %786 = vmatprep.mubr.f32.mxu0 0.0
        %787 = vmatmul.mubr.f32.gmra.mrb[0].mxu0 %v609
        %v788 = vpop.f32.mrb[0].mxu0
        %v789 = vadd.f32 0.0, %v788
        %v790 = vpop.f32.mrb[0].mxu0
        %791 = vmatprep.mubr.f32.mxu0 0.0
        %792 = vmatmul.mubr.f32.gmra.mrb[0].mxu0 %v612
        %v793 = vpop.f32.mrb[0].mxu0
        %v794 = vadd.f32 0.0, %v793
        %v795 = vpop.f32.mrb[0].mxu0
        %796 = vmatprep.mubr.f32.mxu0 0.0
        %797 = vmatmul.mubr.f32.gmra.mrb[0].mxu0 %v615
        %v798 = vpop.f32.mrb[0].mxu0
        %v799 = vadd.f32 0.0, %v798
        %v800 = vpop.f32.mrb[0].mxu0
        %801 = vmatprep.mubr.f32.mxu0 0.0
        %802 = vmatmul.mubr.f32.gmra.mrb[0].mxu0 %v618
        %v803 = vpop.f32.mrb[0].mxu0
        %v804 = vadd.f32 0.0, %v803
        %v805 = vpop.f32.mrb[0].mxu0
        %806 = vmatprep.mubr.f32.mxu0 0.0
        %807 = vmatmul.mubr.f32.gmra.mrb[0].mxu0 %v621
        %v808 = vpop.f32.mrb[0].mxu0
        %v809 = vadd.f32 0.0, %v808
        %v810 = vpop.f32.mrb[0].mxu0
        %811 = vmatprep.mubr.f32.mxu0 0.0
        %812 = vmatmul.mubr.f32.gmra.mrb[0].mxu0 %v624
        %v813 = vpop.f32.mrb[0].mxu0
        %v814 = vadd.f32 0.0, %v813
        %v815 = vpop.f32.mrb[0].mxu0
        %816 = vmatprep.mubr.f32.mxu0 0.0
        %817 = vmatmul.mubr.f32.gmra.mrb[0].mxu0 %v627
        %v818 = vpop.f32.mrb[0].mxu0
        %v819 = vadd.f32 0.0, %v818
        %v820 = vpop.f32.mrb[0].mxu0
        %821 = vmatprep.mubr.f32.mxu0 0.0
        %822 = vmatmul.mubr.f32.gmra.mrb[0].mxu0 %v630
        %v823 = vpop.f32.mrb[0].mxu0
        %v824 = vadd.f32 0.0, %v823
        %v825 = vpop.f32.mrb[0].mxu0
        %826 = vmatprep.mubr.f32.mxu0 0.0
        %827 = vmatmul.mubr.f32.gmra.mrb[0].mxu0 %v633
        %v828 = vpop.f32.mrb[0].mxu0
        %v829 = vadd.f32 0.0, %v828
        %v830 = vpop.f32.mrb[0].mxu0
        %831 = vmatprep.mubr.f32.mxu0 0.0
        %832 = vmatmul.mubr.f32.gmra.mrb[0].mxu0 %v636
        %v833 = vpop.f32.mrb[0].mxu0
        %v834 = vadd.f32 0.0, %v833
        %v835 = vpop.f32.mrb[0].mxu0
        %836 = vmatprep.mubr.f32.mxu0 0.0
        %837 = vmatmul.mubr.f32.gmra.mrb[0].mxu0 %v639
        %v838 = vpop.f32.mrb[0].mxu0
        %v839 = vadd.f32 0.0, %v838
        %v840 = vpop.f32.mrb[0].mxu0
        %841 = vmatprep.mubr.f32.mxu0 0.0
        %842 = vmatmul.mubr.f32.gmra.mrb[0].mxu0 %v642
        %v843 = vpop.f32.mrb[0].mxu0
        %v844 = vadd.f32 0.0, %v843
        %v845 = vpop.f32.mrb[0].mxu0
        %846 = vmatprep.mubr.f32.mxu0 0.0
        %847 = vmatmul.mubr.f32.gmra.mrb[0].mxu0 %v645
        %v848 = vpop.f32.mrb[0].mxu0
        %v849 = vadd.f32 0.0, %v848
        %v850 = vpop.f32.mrb[0].mxu0
        %851 = vmatprep.mubr.f32.mxu0 0.0
        %852 = vmatmul.mubr.f32.gmra.mrb[0].mxu0 %v648
        %v853 = vpop.f32.mrb[0].mxu0
        %v854 = vadd.f32 0.0, %v853
        %v855 = vpop.f32.mrb[0].mxu0
        %856 = vmatprep.mubr.f32.mxu0 0.0
        %857 = vmatmul.mubr.f32.gmra.mrb[0].mxu0 %v651
        %v858 = vpop.f32.mrb[0].mxu0
        %v859 = vadd.f32 0.0, %v858
        %v860 = vpop.f32.mrb[0].mxu0
        %861 = vmatprep.mubr.f32.mxu0 0.0
        %862 = vmatmul.mubr.f32.gmra.mrb[0].mxu0 %v654
        %v863 = vpop.f32.mrb[0].mxu0
        %v864 = vadd.f32 0.0, %v863
        %v865 = vpop.f32.mrb[0].mxu0
        %866 = vmatprep.mubr.f32.mxu0 0.0
        %867 = vmatmul.mubr.f32.gmra.mrb[0].mxu0 %v657
        %v868 = vpop.f32.mrb[0].mxu0
        %v869 = vadd.f32 0.0, %v868
        %v870 = vpop.f32.mrb[0].mxu0
        %871 = vmatprep.mubr.f32.mxu0 0.0
        %872 = vmatmul.mubr.f32.gmra.mrb[0].mxu0 %v660
        %v873 = vpop.f32.mrb[0].mxu0
        %v874 = vadd.f32 0.0, %v873
        %v875 = vpop.f32.mrb[0].mxu0
        %876 = vmatprep.mubr.f32.mxu0 0.0
        %877 = vmatmul.mubr.f32.gmra.mrb[0].mxu0 %v663
        %v878 = vpop.f32.mrb[0].mxu0
        %v879 = vadd.f32 0.0, %v878
        %v880 = vpop.f32.mrb[0].mxu0
        %881 = vmatprep.mubr.f32.mxu0 0.0
        %882 = vmatmul.mubr.f32.gmra.mrb[0].mxu0 %v666
        %v883 = vpop.f32.mrb[0].mxu0
        %v884 = vadd.f32 0.0, %v883
        %v885 = vpop.f32.mrb[0].mxu0
        %886 = vmatprep.mubr.f32.mxu0 0.0
        %887 = vmatmul.mubr.f32.gmra.mrb[0].mxu0 %v669
        %v888 = vpop.f32.mrb[0].mxu0
        %v889 = vadd.f32 0.0, %v888
        %v890 = vpop.f32.mrb[0].mxu0
        %891 = vmatprep.mubr.f32.mxu0 0.0
        %892 = vmatmul.mubr.f32.gmra.mrb[0].mxu0 %v672
        %v893 = vpop.f32.mrb[0].mxu0
        %v894 = vadd.f32 0.0, %v893
        %v895 = vpop.f32.mrb[0].mxu0
        %896 = vmatprep.mubr.f32.mxu0 0.0
        %897 = vmatmul.mubr.f32.gmra.mrb[0].mxu0 %v675
        %v898 = vpop.f32.mrb[0].mxu0
        %v899 = vadd.f32 0.0, %v898
        %v900 = vpop.f32.mrb[0].mxu0
        %901 = vdwg.mxu0
        %v903 = vlaneseq
        %v904 = vshrl.u32 %v903, 7
        %v905 = vsub.s32 0, %v904
        %v906 = vrot.slane %v500, %v905
        %v908 = vmul.f32 %v744, %v906
        %v909 = vmul.f32 %v749, %v906
        %v910 = vmul.f32 %v754, %v906
        %v911 = vmul.f32 %v759, %v906
        %v912 = vmul.f32 %v764, %v906
        %v913 = vmul.f32 %v769, %v906
        %v914 = vmul.f32 %v774, %v906
        %v915 = vmul.f32 %v779, %v906
        %v916 = vmul.f32 %v784, %v906
        %v917 = vmul.f32 %v789, %v906
        %v918 = vmul.f32 %v794, %v906
        %v919 = vmul.f32 %v799, %v906
        %v920 = vmul.f32 %v804, %v906
        %v921 = vmul.f32 %v809, %v906
        %v922 = vmul.f32 %v814, %v906
        %v923 = vmul.f32 %v819, %v906
        %v924 = vmul.f32 %v824, %v906
        %v925 = vmul.f32 %v829, %v906
        %v926 = vmul.f32 %v834, %v906
        %v927 = vmul.f32 %v839, %v906
        %v928 = vmul.f32 %v844, %v906
        %v929 = vmul.f32 %v849, %v906
        %v930 = vmul.f32 %v854, %v906
        %v931 = vmul.f32 %v859, %v906
        %v932 = vmul.f32 %v864, %v906
        %v933 = vmul.f32 %v869, %v906
        %v934 = vmul.f32 %v874, %v906
        %v935 = vmul.f32 %v879, %v906
        %v936 = vmul.f32 %v884, %v906
        %v937 = vmul.f32 %v889, %v906
        %v938 = vmul.f32 %v894, %v906
        %v939 = vmul.f32 %v899, %v906
        %v941 = vlaneseq
        %v942 = vshrl.u32 %v941, 7
        %v943 = vsub.s32 0, %v942
        %v944 = vrot.slane %v501, %v943
        %v946 = vadd.f32 %v908, %v944
        %v947 = vadd.f32 %v909, %v944
        %v948 = vadd.f32 %v910, %v944
        %v949 = vadd.f32 %v911, %v944
        %v950 = vadd.f32 %v912, %v944
        %v951 = vadd.f32 %v913, %v944
        %v952 = vadd.f32 %v914, %v944
        %v953 = vadd.f32 %v915, %v944
        %v954 = vadd.f32 %v916, %v944
        %v955 = vadd.f32 %v917, %v944
        %v956 = vadd.f32 %v918, %v944
        %v957 = vadd.f32 %v919, %v944
        %v958 = vadd.f32 %v920, %v944
        %v959 = vadd.f32 %v921, %v944
        %v960 = vadd.f32 %v922, %v944
        %v961 = vadd.f32 %v923, %v944
        %v962 = vadd.f32 %v924, %v944
        %v963 = vadd.f32 %v925, %v944
        %v964 = vadd.f32 %v926, %v944
        %v965 = vadd.f32 %v927, %v944
        %v966 = vadd.f32 %v928, %v944
        %v967 = vadd.f32 %v929, %v944
        %v968 = vadd.f32 %v930, %v944
        %v969 = vadd.f32 %v931, %v944
        %v970 = vadd.f32 %v932, %v944
        %v971 = vadd.f32 %v933, %v944
        %v972 = vadd.f32 %v934, %v944
        %v973 = vadd.f32 %v935, %v944
        %v974 = vadd.f32 %v936, %v944
        %v975 = vadd.f32 %v937, %v944
        %v976 = vadd.f32 %v938, %v944
        %v977 = vadd.f32 %v939, %v944
        %v978 = vmax.f32 %v946, 0.0
        %v979 = vmax.f32 %v947, 0.0
        %v980 = vmax.f32 %v948, 0.0
        %v981 = vmax.f32 %v949, 0.0
        %v982 = vmax.f32 %v950, 0.0
        %v983 = vmax.f32 %v951, 0.0
        %v984 = vmax.f32 %v952, 0.0
        %v985 = vmax.f32 %v953, 0.0
        %v986 = vmax.f32 %v954, 0.0
        %v987 = vmax.f32 %v955, 0.0
        %v988 = vmax.f32 %v956, 0.0
        %v989 = vmax.f32 %v957, 0.0
        %v990 = vmax.f32 %v958, 0.0
        %v991 = vmax.f32 %v959, 0.0
        %v992 = vmax.f32 %v960, 0.0
        %v993 = vmax.f32 %v961, 0.0
        %v994 = vmax.f32 %v962, 0.0
        %v995 = vmax.f32 %v963, 0.0
        %v996 = vmax.f32 %v964, 0.0
        %v997 = vmax.f32 %v965, 0.0
        %v998 = vmax.f32 %v966, 0.0
        %v999 = vmax.f32 %v967, 0.0
        %v1000 = vmax.f32 %v968, 0.0
        %v1001 = vmax.f32 %v969, 0.0
        %v1002 = vmax.f32 %v970, 0.0
        %v1003 = vmax.f32 %v971, 0.0
        %v1004 = vmax.f32 %v972, 0.0
        %v1005 = vmax.f32 %v973, 0.0
        %v1006 = vmax.f32 %v974, 0.0
        %v1007 = vmax.f32 %v975, 0.0
        %v1008 = vmax.f32 %v976, 0.0
        %v1009 = vmax.f32 %v977, 0.0
        %s1010 = scalar_lea.vmem [#allocation2], 24
        %1011 = vst.msk [vmem:[%s1010 + $0x1] sm:$0xff] %vm502, %v978
        %1012 = vst.msk [vmem:[%s1010 + $0x9] sm:$0xff] %vm502, %v979
        %1013 = vst.msk [vmem:[%s1010 + $0x19] sm:$0xff] %vm502, %v980
        %1014 = vst.msk [vmem:[%s1010 + $0x21] sm:$0xff] %vm502, %v981
        %1015 = vst.msk [vmem:[%s1010 + $0x31] sm:$0xff] %vm502, %v982
        %1016 = vst.msk [vmem:[%s1010 + $0x39] sm:$0xff] %vm502, %v983
        %1017 = vst.msk [vmem:[%s1010 + $0x49] sm:$0xff] %vm502, %v984
        %1018 = vst.msk [vmem:[%s1010 + $0x51] sm:$0xff] %vm502, %v985
        %1019 = vst.msk [vmem:[%s1010 + $0x61] sm:$0xff] %vm502, %v986
        %1020 = vst.msk [vmem:[%s1010 + $0x69] sm:$0xff] %vm502, %v987
        %1021 = vst.msk [vmem:[%s1010 + $0x79] sm:$0xff] %vm502, %v988
        %1022 = vst.msk [vmem:[%s1010 + $0x81] sm:$0xff] %vm502, %v989
        %1023 = vst.msk [vmem:[%s1010 + $0x91] sm:$0xff] %vm502, %v990
        %1024 = vst.msk [vmem:[%s1010 + $0x99] sm:$0xff] %vm502, %v991
        %1025 = vst.msk [vmem:[%s1010 + $0xa9] sm:$0xff] %vm502, %v992
        %1026 = vst.msk [vmem:[%s1010 + $0xb1] sm:$0xff] %vm502, %v993
        %1027 = vst.msk [vmem:[%s1010 + $0xc1] sm:$0xff] %vm502, %v994
        %1028 = vst.msk [vmem:[%s1010 + $0xc9] sm:$0xff] %vm502, %v995
        %1029 = vst.msk [vmem:[%s1010 + $0xd9] sm:$0xff] %vm502, %v996
        %1030 = vst.msk [vmem:[%s1010 + $0xe1] sm:$0xff] %vm502, %v997
        %1031 = vst.msk [vmem:[%s1010 + $0xf1] sm:$0xff] %vm502, %v998
        %1032 = vst.msk [vmem:[%s1010 + $0xf9] sm:$0xff] %vm502, %v999
        %1033 = vst.msk [vmem:[%s1010 + $0x109] sm:$0xff] %vm502, %v1000
        %1034 = vst.msk [vmem:[%s1010 + $0x111] sm:$0xff] %vm502, %v1001
        %1035 = vst.msk [vmem:[%s1010 + $0x121] sm:$0xff] %vm502, %v1002
        %1036 = vst.msk [vmem:[%s1010 + $0x129] sm:$0xff] %vm502, %v1003
        %1037 = vst.msk [vmem:[%s1010 + $0x139] sm:$0xff] %vm502, %v1004
        %1038 = vst.msk [vmem:[%s1010 + $0x141] sm:$0xff] %vm502, %v1005
        %1039 = vst.msk [vmem:[%s1010 + $0x151] sm:$0xff] %vm502, %v1006
        %1040 = vst.msk [vmem:[%s1010 + $0x159] sm:$0xff] %vm502, %v1007
        %1041 = vst.msk [vmem:[%s1010 + $0x169] sm:$0xff] %vm502, %v1008
        %1042 = vst.msk [vmem:[%s1010 + $0x171] sm:$0xff] %vm502, %v1009
        %v1043 = vld [vmem:[#allocation2] sm:$0xff]
        %v1044 = vld [vmem:[#allocation2 + $0x8] sm:$0xff]
        %v1045 = vld [vmem:[#allocation2 + $0x18] sm:$0xff]
        %v1046 = vld [vmem:[#allocation2 + $0x20] sm:$0xff]
        %v1047 = vld [vmem:[#allocation2 + $0x30] sm:$0xff]
        %v1048 = vld [vmem:[#allocation2 + $0x38] sm:$0xff]
        %v1049 = vld [vmem:[#allocation2 + $0x48] sm:$0xff]
        %v1050 = vld [vmem:[#allocation2 + $0x50] sm:$0xff]
        %v1051 = vld [vmem:[#allocation2 + $0x60] sm:$0xff]
        %v1052 = vld [vmem:[#allocation2 + $0x68] sm:$0xff]
        %v1053 = vld [vmem:[#allocation2 + $0x78] sm:$0xff]
        %v1054 = vld [vmem:[#allocation2 + $0x80] sm:$0xff]
        %v1055 = vld [vmem:[#allocation2 + $0x90] sm:$0xff]
        %v1056 = vld [vmem:[#allocation2 + $0x98] sm:$0xff]
        %v1057 = vld [vmem:[#allocation2 + $0xa8] sm:$0xff]
        %v1058 = vld [vmem:[#allocation2 + $0xb0] sm:$0xff]
        %v1059 = vld [vmem:[#allocation2 + $0xc0] sm:$0xff]
        %v1060 = vld [vmem:[#allocation2 + $0xc8] sm:$0xff]
        %v1061 = vld [vmem:[#allocation2 + $0xd8] sm:$0xff]
        %v1062 = vld [vmem:[#allocation2 + $0xe0] sm:$0xff]
        %v1063 = vld [vmem:[#allocation2 + $0xf0] sm:$0xff]
        %v1064 = vld [vmem:[#allocation2 + $0xf8] sm:$0xff]
        %v1065 = vld [vmem:[#allocation2 + $0x108] sm:$0xff]
        %v1066 = vld [vmem:[#allocation2 + $0x110] sm:$0xff]
        %v1067 = vld [vmem:[#allocation2 + $0x120] sm:$0xff]
        %v1068 = vld [vmem:[#allocation2 + $0x128] sm:$0xff]
        %v1069 = vld [vmem:[#allocation2 + $0x138] sm:$0xff]
        %v1070 = vld [vmem:[#allocation2 + $0x140] sm:$0xff]
        %v1071 = vld [vmem:[#allocation2 + $0x150] sm:$0xff]
        %v1072 = vld [vmem:[#allocation2 + $0x158] sm:$0xff]
        %v1073 = vld [vmem:[#allocation2 + $0x168] sm:$0xff]
        %v1074 = vld [vmem:[#allocation2 + $0x170] sm:$0xff]
        %v1075 = vld [vmem:[%s4] sm:$0x1]
        %v1076 = vlaneseq
        %v1077 = vshrl.u32 %v1076, 7
        %v1078 = vsub.s32 0, %v1077
        %v1079 = vrot.slane %v1075, %v1078
        %v1080 = vmul.f32 %v1043, %v1079
        %v1081 = vmul.f32 %v1044, %v1079
        %v1082 = vmul.f32 %v1045, %v1079
        %v1083 = vmul.f32 %v1046, %v1079
        %v1084 = vmul.f32 %v1047, %v1079
        %v1085 = vmul.f32 %v1048, %v1079
        %v1086 = vmul.f32 %v1049, %v1079
        %v1087 = vmul.f32 %v1050, %v1079
        %v1088 = vmul.f32 %v1051, %v1079
        %v1089 = vmul.f32 %v1052, %v1079
        %v1090 = vmul.f32 %v1053, %v1079
        %v1091 = vmul.f32 %v1054, %v1079
        %v1092 = vmul.f32 %v1055, %v1079
        %v1093 = vmul.f32 %v1056, %v1079
        %v1094 = vmul.f32 %v1057, %v1079
        %v1095 = vmul.f32 %v1058, %v1079
        %v1096 = vmul.f32 %v1059, %v1079
        %v1097 = vmul.f32 %v1060, %v1079
        %v1098 = vmul.f32 %v1061, %v1079
        %v1099 = vmul.f32 %v1062, %v1079
        %v1100 = vmul.f32 %v1063, %v1079
        %v1101 = vmul.f32 %v1064, %v1079
        %v1102 = vmul.f32 %v1065, %v1079
        %v1103 = vmul.f32 %v1066, %v1079
        %v1104 = vmul.f32 %v1067, %v1079
        %v1105 = vmul.f32 %v1068, %v1079
        %v1106 = vmul.f32 %v1069, %v1079
        %v1107 = vmul.f32 %v1070, %v1079
        %v1108 = vmul.f32 %v1071, %v1079
        %v1109 = vmul.f32 %v1072, %v1079
        %v1110 = vmul.f32 %v1073, %v1079
        %v1111 = vmul.f32 %v1074, %v1079
        %1112 = vst.msk [vmem:[#allocation3] sm:$0xff] %vm502, %v1080
        %1113 = vst.msk [vmem:[#allocation3 + $0x8] sm:$0xff] %vm502, %v1081
        %1114 = vst.msk [vmem:[#allocation3 + $0x10] sm:$0xff] %vm502, %v1082
        %1115 = vst.msk [vmem:[#allocation3 + $0x18] sm:$0xff] %vm502, %v1083
        %1116 = vst.msk [vmem:[#allocation3 + $0x20] sm:$0xff] %vm502, %v1084
        %1117 = vst.msk [vmem:[#allocation3 + $0x28] sm:$0xff] %vm502, %v1085
        %1118 = vst.msk [vmem:[#allocation3 + $0x30] sm:$0xff] %vm502, %v1086
        %1119 = vst.msk [vmem:[#allocation3 + $0x38] sm:$0xff] %vm502, %v1087
        %1120 = vst.msk [vmem:[#allocation3 + $0x40] sm:$0xff] %vm502, %v1088
        %1121 = vst.msk [vmem:[#allocation3 + $0x48] sm:$0xff] %vm502, %v1089
        %1122 = vst.msk [vmem:[#allocation3 + $0x50] sm:$0xff] %vm502, %v1090
        %1123 = vst.msk [vmem:[#allocation3 + $0x58] sm:$0xff] %vm502, %v1091
        %1124 = vst.msk [vmem:[#allocation3 + $0x60] sm:$0xff] %vm502, %v1092
        %1125 = vst.msk [vmem:[#allocation3 + $0x68] sm:$0xff] %vm502, %v1093
        %1126 = vst.msk [vmem:[#allocation3 + $0x70] sm:$0xff] %vm502, %v1094
        %1127 = vst.msk [vmem:[#allocation3 + $0x78] sm:$0xff] %vm502, %v1095
        %1128 = vst.msk [vmem:[#allocation3 + $0x80] sm:$0xff] %vm502, %v1096
        %1129 = vst.msk [vmem:[#allocation3 + $0x88] sm:$0xff] %vm502, %v1097
        %1130 = vst.msk [vmem:[#allocation3 + $0x90] sm:$0xff] %vm502, %v1098
        %1131 = vst.msk [vmem:[#allocation3 + $0x98] sm:$0xff] %vm502, %v1099
        %1132 = vst.msk [vmem:[#allocation3 + $0xa0] sm:$0xff] %vm502, %v1100
        %1133 = vst.msk [vmem:[#allocation3 + $0xa8] sm:$0xff] %vm502, %v1101
        %1134 = vst.msk [vmem:[#allocation3 + $0xb0] sm:$0xff] %vm502, %v1102
        %1135 = vst.msk [vmem:[#allocation3 + $0xb8] sm:$0xff] %vm502, %v1103
        %1136 = vst.msk [vmem:[#allocation3 + $0xc0] sm:$0xff] %vm502, %v1104
        %1137 = vst.msk [vmem:[#allocation3 + $0xc8] sm:$0xff] %vm502, %v1105
        %1138 = vst.msk [vmem:[#allocation3 + $0xd0] sm:$0xff] %vm502, %v1106
        %1139 = vst.msk [vmem:[#allocation3 + $0xd8] sm:$0xff] %vm502, %v1107
        %1140 = vst.msk [vmem:[#allocation3 + $0xe0] sm:$0xff] %vm502, %v1108
        %1141 = vst.msk [vmem:[#allocation3 + $0xe8] sm:$0xff] %vm502, %v1109
        %1142 = vst.msk [vmem:[#allocation3 + $0xf0] sm:$0xff] %vm502, %v1110
        %1143 = vst.msk [vmem:[#allocation3 + $0xf8] sm:$0xff] %vm502, %v1111
        %v1144 = vld [vmem:[#allocation2 + $0x1] sm:$0xff]
        %v1145 = vld [vmem:[#allocation2 + $0x9] sm:$0xff]
        %v1146 = vld [vmem:[#allocation2 + $0x19] sm:$0xff]
        %v1147 = vld [vmem:[#allocation2 + $0x21] sm:$0xff]
        %v1148 = vld [vmem:[#allocation2 + $0x31] sm:$0xff]
        %v1149 = vld [vmem:[#allocation2 + $0x39] sm:$0xff]
        %v1150 = vld [vmem:[#allocation2 + $0x49] sm:$0xff]
        %v1151 = vld [vmem:[#allocation2 + $0x51] sm:$0xff]
        %v1152 = vld [vmem:[#allocation2 + $0x61] sm:$0xff]
        %v1153 = vld [vmem:[#allocation2 + $0x69] sm:$0xff]
        %v1154 = vld [vmem:[#allocation2 + $0x79] sm:$0xff]
        %v1155 = vld [vmem:[#allocation2 + $0x81] sm:$0xff]
        %v1156 = vld [vmem:[#allocation2 + $0x91] sm:$0xff]
        %v1157 = vld [vmem:[#allocation2 + $0x99] sm:$0xff]
        %v1158 = vld [vmem:[#allocation2 + $0xa9] sm:$0xff]
        %v1159 = vld [vmem:[#allocation2 + $0xb1] sm:$0xff]
        %v1160 = vld [vmem:[#allocation2 + $0xc1] sm:$0xff]
        %v1161 = vld [vmem:[#allocation2 + $0xc9] sm:$0xff]
        %v1162 = vld [vmem:[#allocation2 + $0xd9] sm:$0xff]
        %v1163 = vld [vmem:[#allocation2 + $0xe1] sm:$0xff]
        %v1164 = vld [vmem:[#allocation2 + $0xf1] sm:$0xff]
        %v1165 = vld [vmem:[#allocation2 + $0xf9] sm:$0xff]
        %v1166 = vld [vmem:[#allocation2 + $0x109] sm:$0xff]
        %v1167 = vld [vmem:[#allocation2 + $0x111] sm:$0xff]
        %v1168 = vld [vmem:[#allocation2 + $0x121] sm:$0xff]
        %v1169 = vld [vmem:[#allocation2 + $0x129] sm:$0xff]
        %v1170 = vld [vmem:[#allocation2 + $0x139] sm:$0xff]
        %v1171 = vld [vmem:[#allocation2 + $0x141] sm:$0xff]
        %v1172 = vld [vmem:[#allocation2 + $0x151] sm:$0xff]
        %v1173 = vld [vmem:[#allocation2 + $0x159] sm:$0xff]
        %v1174 = vld [vmem:[#allocation2 + $0x169] sm:$0xff]
        %v1175 = vld [vmem:[#allocation2 + $0x171] sm:$0xff]
        %v1176 = vld [vmem:[%s4 + $0x1] sm:$0x1]
        %v1177 = vld [vmem:[#allocation3] sm:$0xff]
        %v1178 = vld [vmem:[#allocation3 + $0x8] sm:$0xff]
        %v1179 = vld [vmem:[#allocation3 + $0x10] sm:$0xff]
        %v1180 = vld [vmem:[#allocation3 + $0x18] sm:$0xff]
        %v1181 = vld [vmem:[#allocation3 + $0x20] sm:$0xff]
        %v1182 = vld [vmem:[#allocation3 + $0x28] sm:$0xff]
        %v1183 = vld [vmem:[#allocation3 + $0x30] sm:$0xff]
        %v1184 = vld [vmem:[#allocation3 + $0x38] sm:$0xff]
        %v1185 = vld [vmem:[#allocation3 + $0x40] sm:$0xff]
        %v1186 = vld [vmem:[#allocation3 + $0x48] sm:$0xff]
        %v1187 = vld [vmem:[#allocation3 + $0x50] sm:$0xff]
        %v1188 = vld [vmem:[#allocation3 + $0x58] sm:$0xff]
        %v1189 = vld [vmem:[#allocation3 + $0x60] sm:$0xff]
        %v1190 = vld [vmem:[#allocation3 + $0x68] sm:$0xff]
        %v1191 = vld [vmem:[#allocation3 + $0x70] sm:$0xff]
        %v1192 = vld [vmem:[#allocation3 + $0x78] sm:$0xff]
        %v1193 = vld [vmem:[#allocation3 + $0x80] sm:$0xff]
        %v1194 = vld [vmem:[#allocation3 + $0x88] sm:$0xff]
        %v1195 = vld [vmem:[#allocation3 + $0x90] sm:$0xff]
        %v1196 = vld [vmem:[#allocation3 + $0x98] sm:$0xff]
        %v1197 = vld [vmem:[#allocation3 + $0xa0] sm:$0xff]
        %v1198 = vld [vmem:[#allocation3 + $0xa8] sm:$0xff]
        %v1199 = vld [vmem:[#allocation3 + $0xb0] sm:$0xff]
        %v1200 = vld [vmem:[#allocation3 + $0xb8] sm:$0xff]
        %v1201 = vld [vmem:[#allocation3 + $0xc0] sm:$0xff]
        %v1202 = vld [vmem:[#allocation3 + $0xc8] sm:$0xff]
        %v1203 = vld [vmem:[#allocation3 + $0xd0] sm:$0xff]
        %v1204 = vld [vmem:[#allocation3 + $0xd8] sm:$0xff]
        %v1205 = vld [vmem:[#allocation3 + $0xe0] sm:$0xff]
        %v1206 = vld [vmem:[#allocation3 + $0xe8] sm:$0xff]
        %v1207 = vld [vmem:[#allocation3 + $0xf0] sm:$0xff]
        %v1208 = vld [vmem:[#allocation3 + $0xf8] sm:$0xff]
        %v1209 = vlaneseq
        %v1210 = vshrl.u32 %v1209, 7
        %v1211 = vsub.s32 0, %v1210
        %v1212 = vrot.slane %v1176, %v1211
        %v1213 = vmul.f32 %v1144, %v1212
        %v1214 = vmul.f32 %v1145, %v1212
        %v1215 = vmul.f32 %v1146, %v1212
        %v1216 = vmul.f32 %v1147, %v1212
        %v1217 = vmul.f32 %v1148, %v1212
        %v1218 = vmul.f32 %v1149, %v1212
        %v1219 = vmul.f32 %v1150, %v1212
        %v1220 = vmul.f32 %v1151, %v1212
        %v1221 = vmul.f32 %v1152, %v1212
        %v1222 = vmul.f32 %v1153, %v1212
        %v1223 = vmul.f32 %v1154, %v1212
        %v1224 = vmul.f32 %v1155, %v1212
        %v1225 = vmul.f32 %v1156, %v1212
        %v1226 = vmul.f32 %v1157, %v1212
        %v1227 = vmul.f32 %v1158, %v1212
        %v1228 = vmul.f32 %v1159, %v1212
        %v1229 = vmul.f32 %v1160, %v1212
        %v1230 = vmul.f32 %v1161, %v1212
        %v1231 = vmul.f32 %v1162, %v1212
        %v1232 = vmul.f32 %v1163, %v1212
        %v1233 = vmul.f32 %v1164, %v1212
        %v1234 = vmul.f32 %v1165, %v1212
        %v1235 = vmul.f32 %v1166, %v1212
        %v1236 = vmul.f32 %v1167, %v1212
        %v1237 = vmul.f32 %v1168, %v1212
        %v1238 = vmul.f32 %v1169, %v1212
        %v1239 = vmul.f32 %v1170, %v1212
        %v1240 = vmul.f32 %v1171, %v1212
        %v1241 = vmul.f32 %v1172, %v1212
        %v1242 = vmul.f32 %v1173, %v1212
        %v1243 = vmul.f32 %v1174, %v1212
        %v1244 = vmul.f32 %v1175, %v1212
        %v1245 = vadd.f32 %v1177, %v1213
        %v1246 = vadd.f32 %v1178, %v1214
        %v1247 = vadd.f32 %v1179, %v1215
        %v1248 = vadd.f32 %v1180, %v1216
        %v1249 = vadd.f32 %v1181, %v1217
        %v1250 = vadd.f32 %v1182, %v1218
        %v1251 = vadd.f32 %v1183, %v1219
        %v1252 = vadd.f32 %v1184, %v1220
        %v1253 = vadd.f32 %v1185, %v1221
        %v1254 = vadd.f32 %v1186, %v1222
        %v1255 = vadd.f32 %v1187, %v1223
        %v1256 = vadd.f32 %v1188, %v1224
        %v1257 = vadd.f32 %v1189, %v1225
        %v1258 = vadd.f32 %v1190, %v1226
        %v1259 = vadd.f32 %v1191, %v1227
        %v1260 = vadd.f32 %v1192, %v1228
        %v1261 = vadd.f32 %v1193, %v1229
        %v1262 = vadd.f32 %v1194, %v1230
        %v1263 = vadd.f32 %v1195, %v1231
        %v1264 = vadd.f32 %v1196, %v1232
        %v1265 = vadd.f32 %v1197, %v1233
        %v1266 = vadd.f32 %v1198, %v1234
        %v1267 = vadd.f32 %v1199, %v1235
        %v1268 = vadd.f32 %v1200, %v1236
        %v1269 = vadd.f32 %v1201, %v1237
        %v1270 = vadd.f32 %v1202, %v1238
        %v1271 = vadd.f32 %v1203, %v1239
        %v1272 = vadd.f32 %v1204, %v1240
        %v1273 = vadd.f32 %v1205, %v1241
        %v1274 = vadd.f32 %v1206, %v1242
        %v1275 = vadd.f32 %v1207, %v1243
        %v1276 = vadd.f32 %v1208, %v1244
        %1277 = vst.msk [vmem:[#allocation3] sm:$0xff] %vm502, %v1245
        %1278 = vst.msk [vmem:[#allocation3 + $0x8] sm:$0xff] %vm502, %v1246
        %1279 = vst.msk [vmem:[#allocation3 + $0x10] sm:$0xff] %vm502, %v1247
        %1280 = vst.msk [vmem:[#allocation3 + $0x18] sm:$0xff] %vm502, %v1248
        %1281 = vst.msk [vmem:[#allocation3 + $0x20] sm:$0xff] %vm502, %v1249
        %1282 = vst.msk [vmem:[#allocation3 + $0x28] sm:$0xff] %vm502, %v1250
        %1283 = vst.msk [vmem:[#allocation3 + $0x30] sm:$0xff] %vm502, %v1251
        %1284 = vst.msk [vmem:[#allocation3 + $0x38] sm:$0xff] %vm502, %v1252
        %1285 = vst.msk [vmem:[#allocation3 + $0x40] sm:$0xff] %vm502, %v1253
        %1286 = vst.msk [vmem:[#allocation3 + $0x48] sm:$0xff] %vm502, %v1254
        %1287 = vst.msk [vmem:[#allocation3 + $0x50] sm:$0xff] %vm502, %v1255
        %1288 = vst.msk [vmem:[#allocation3 + $0x58] sm:$0xff] %vm502, %v1256
        %1289 = vst.msk [vmem:[#allocation3 + $0x60] sm:$0xff] %vm502, %v1257
        %1290 = vst.msk [vmem:[#allocation3 + $0x68] sm:$0xff] %vm502, %v1258
        %1291 = vst.msk [vmem:[#allocation3 + $0x70] sm:$0xff] %vm502, %v1259
        %1292 = vst.msk [vmem:[#allocation3 + $0x78] sm:$0xff] %vm502, %v1260
        %1293 = vst.msk [vmem:[#allocation3 + $0x80] sm:$0xff] %vm502, %v1261
        %1294 = vst.msk [vmem:[#allocation3 + $0x88] sm:$0xff] %vm502, %v1262
        %1295 = vst.msk [vmem:[#allocation3 + $0x90] sm:$0xff] %vm502, %v1263
        %1296 = vst.msk [vmem:[#allocation3 + $0x98] sm:$0xff] %vm502, %v1264
        %1297 = vst.msk [vmem:[#allocation3 + $0xa0] sm:$0xff] %vm502, %v1265
        %1298 = vst.msk [vmem:[#allocation3 + $0xa8] sm:$0xff] %vm502, %v1266
        %1299 = vst.msk [vmem:[#allocation3 + $0xb0] sm:$0xff] %vm502, %v1267
        %1300 = vst.msk [vmem:[#allocation3 + $0xb8] sm:$0xff] %vm502, %v1268
        %1301 = vst.msk [vmem:[#allocation3 + $0xc0] sm:$0xff] %vm502, %v1269
        %1302 = vst.msk [vmem:[#allocation3 + $0xc8] sm:$0xff] %vm502, %v1270
        %1303 = vst.msk [vmem:[#allocation3 + $0xd0] sm:$0xff] %vm502, %v1271
        %1304 = vst.msk [vmem:[#allocation3 + $0xd8] sm:$0xff] %vm502, %v1272
        %1305 = vst.msk [vmem:[#allocation3 + $0xe0] sm:$0xff] %vm502, %v1273
        %1306 = vst.msk [vmem:[#allocation3 + $0xe8] sm:$0xff] %vm502, %v1274
        %1307 = vst.msk [vmem:[#allocation3 + $0xf0] sm:$0xff] %vm502, %v1275
        %1308 = vst.msk [vmem:[#allocation3 + $0xf8] sm:$0xff] %vm502, %v1276
        %v1309 = vld [vmem:[#allocation2 + $0x2] sm:$0xff]
        %v1310 = vld [vmem:[#allocation2 + $0xa] sm:$0xff]
        %v1311 = vld [vmem:[#allocation2 + $0x1a] sm:$0xff]
        %v1312 = vld [vmem:[#allocation2 + $0x22] sm:$0xff]
        %v1313 = vld [vmem:[#allocation2 + $0x32] sm:$0xff]
        %v1314 = vld [vmem:[#allocation2 + $0x3a] sm:$0xff]
        %v1315 = vld [vmem:[#allocation2 + $0x4a] sm:$0xff]
        %v1316 = vld [vmem:[#allocation2 + $0x52] sm:$0xff]
        %v1317 = vld [vmem:[#allocation2 + $0x62] sm:$0xff]
        %v1318 = vld [vmem:[#allocation2 + $0x6a] sm:$0xff]
        %v1319 = vld [vmem:[#allocation2 + $0x7a] sm:$0xff]
        %v1320 = vld [vmem:[#allocation2 + $0x82] sm:$0xff]
        %v1321 = vld [vmem:[#allocation2 + $0x92] sm:$0xff]
        %v1322 = vld [vmem:[#allocation2 + $0x9a] sm:$0xff]
        %v1323 = vld [vmem:[#allocation2 + $0xaa] sm:$0xff]
        %v1324 = vld [vmem:[#allocation2 + $0xb2] sm:$0xff]
        %v1325 = vld [vmem:[#allocation2 + $0xc2] sm:$0xff]
        %v1326 = vld [vmem:[#allocation2 + $0xca] sm:$0xff]
        %v1327 = vld [vmem:[#allocation2 + $0xda] sm:$0xff]
        %v1328 = vld [vmem:[#allocation2 + $0xe2] sm:$0xff]
        %v1329 = vld [vmem:[#allocation2 + $0xf2] sm:$0xff]
        %v1330 = vld [vmem:[#allocation2 + $0xfa] sm:$0xff]
        %v1331 = vld [vmem:[#allocation2 + $0x10a] sm:$0xff]
        %v1332 = vld [vmem:[#allocation2 + $0x112] sm:$0xff]
        %v1333 = vld [vmem:[#allocation2 + $0x122] sm:$0xff]
        %v1334 = vld [vmem:[#allocation2 + $0x12a] sm:$0xff]
        %v1335 = vld [vmem:[#allocation2 + $0x13a] sm:$0xff]
        %v1336 = vld [vmem:[#allocation2 + $0x142] sm:$0xff]
        %v1337 = vld [vmem:[#allocation2 + $0x152] sm:$0xff]
        %v1338 = vld [vmem:[#allocation2 + $0x15a] sm:$0xff]
        %v1339 = vld [vmem:[#allocation2 + $0x16a] sm:$0xff]
        %v1340 = vld [vmem:[#allocation2 + $0x172] sm:$0xff]
        %v1341 = vld [vmem:[%s4 + $0x2] sm:$0x1]
        %v1342 = vld [vmem:[#allocation3] sm:$0xff]
        %v1343 = vld [vmem:[#allocation3 + $0x8] sm:$0xff]
        %v1344 = vld [vmem:[#allocation3 + $0x10] sm:$0xff]
        %v1345 = vld [vmem:[#allocation3 + $0x18] sm:$0xff]
        %v1346 = vld [vmem:[#allocation3 + $0x20] sm:$0xff]
        %v1347 = vld [vmem:[#allocation3 + $0x28] sm:$0xff]
        %v1348 = vld [vmem:[#allocation3 + $0x30] sm:$0xff]
        %v1349 = vld [vmem:[#allocation3 + $0x38] sm:$0xff]
        %v1350 = vld [vmem:[#allocation3 + $0x40] sm:$0xff]
        %v1351 = vld [vmem:[#allocation3 + $0x48] sm:$0xff]
        %v1352 = vld [vmem:[#allocation3 + $0x50] sm:$0xff]
        %v1353 = vld [vmem:[#allocation3 + $0x58] sm:$0xff]
        %v1354 = vld [vmem:[#allocation3 + $0x60] sm:$0xff]
        %v1355 = vld [vmem:[#allocation3 + $0x68] sm:$0xff]
        %v1356 = vld [vmem:[#allocation3 + $0x70] sm:$0xff]
        %v1357 = vld [vmem:[#allocation3 + $0x78] sm:$0xff]
        %v1358 = vld [vmem:[#allocation3 + $0x80] sm:$0xff]
        %v1359 = vld [vmem:[#allocation3 + $0x88] sm:$0xff]
        %v1360 = vld [vmem:[#allocation3 + $0x90] sm:$0xff]
        %v1361 = vld [vmem:[#allocation3 + $0x98] sm:$0xff]
        %v1362 = vld [vmem:[#allocation3 + $0xa0] sm:$0xff]
        %v1363 = vld [vmem:[#allocation3 + $0xa8] sm:$0xff]
        %v1364 = vld [vmem:[#allocation3 + $0xb0] sm:$0xff]
        %v1365 = vld [vmem:[#allocation3 + $0xb8] sm:$0xff]
        %v1366 = vld [vmem:[#allocation3 + $0xc0] sm:$0xff]
        %v1367 = vld [vmem:[#allocation3 + $0xc8] sm:$0xff]
        %v1368 = vld [vmem:[#allocation3 + $0xd0] sm:$0xff]
        %v1369 = vld [vmem:[#allocation3 + $0xd8] sm:$0xff]
        %v1370 = vld [vmem:[#allocation3 + $0xe0] sm:$0xff]
        %v1371 = vld [vmem:[#allocation3 + $0xe8] sm:$0xff]
        %v1372 = vld [vmem:[#allocation3 + $0xf0] sm:$0xff]
        %v1373 = vld [vmem:[#allocation3 + $0xf8] sm:$0xff]
        %v1374 = vlaneseq
        %v1375 = vshrl.u32 %v1374, 7
        %v1376 = vsub.s32 0, %v1375
        %v1377 = vrot.slane %v1341, %v1376
        %v1378 = vmul.f32 %v1309, %v1377
        %v1379 = vmul.f32 %v1310, %v1377
        %v1380 = vmul.f32 %v1311, %v1377
        %v1381 = vmul.f32 %v1312, %v1377
        %v1382 = vmul.f32 %v1313, %v1377
        %v1383 = vmul.f32 %v1314, %v1377
        %v1384 = vmul.f32 %v1315, %v1377
        %v1385 = vmul.f32 %v1316, %v1377
        %v1386 = vmul.f32 %v1317, %v1377
        %v1387 = vmul.f32 %v1318, %v1377
        %v1388 = vmul.f32 %v1319, %v1377
        %v1389 = vmul.f32 %v1320, %v1377
        %v1390 = vmul.f32 %v1321, %v1377
        %v1391 = vmul.f32 %v1322, %v1377
        %v1392 = vmul.f32 %v1323, %v1377
        %v1393 = vmul.f32 %v1324, %v1377
        %v1394 = vmul.f32 %v1325, %v1377
        %v1395 = vmul.f32 %v1326, %v1377
        %v1396 = vmul.f32 %v1327, %v1377
        %v1397 = vmul.f32 %v1328, %v1377
        %v1398 = vmul.f32 %v1329, %v1377
        %v1399 = vmul.f32 %v1330, %v1377
        %v1400 = vmul.f32 %v1331, %v1377
        %v1401 = vmul.f32 %v1332, %v1377
        %v1402 = vmul.f32 %v1333, %v1377
        %v1403 = vmul.f32 %v1334, %v1377
        %v1404 = vmul.f32 %v1335, %v1377
        %v1405 = vmul.f32 %v1336, %v1377
        %v1406 = vmul.f32 %v1337, %v1377
        %v1407 = vmul.f32 %v1338, %v1377
        %v1408 = vmul.f32 %v1339, %v1377
        %v1409 = vmul.f32 %v1340, %v1377
        %v1410 = vadd.f32 %v1342, %v1378
        %v1411 = vadd.f32 %v1343, %v1379
        %v1412 = vadd.f32 %v1344, %v1380
        %v1413 = vadd.f32 %v1345, %v1381
        %v1414 = vadd.f32 %v1346, %v1382
        %v1415 = vadd.f32 %v1347, %v1383
        %v1416 = vadd.f32 %v1348, %v1384
        %v1417 = vadd.f32 %v1349, %v1385
        %v1418 = vadd.f32 %v1350, %v1386
        %v1419 = vadd.f32 %v1351, %v1387
        %v1420 = vadd.f32 %v1352, %v1388
        %v1421 = vadd.f32 %v1353, %v1389
        %v1422 = vadd.f32 %v1354, %v1390
        %v1423 = vadd.f32 %v1355, %v1391
        %v1424 = vadd.f32 %v1356, %v1392
        %v1425 = vadd.f32 %v1357, %v1393
        %v1426 = vadd.f32 %v1358, %v1394
        %v1427 = vadd.f32 %v1359, %v1395
        %v1428 = vadd.f32 %v1360, %v1396
        %v1429 = vadd.f32 %v1361, %v1397
        %v1430 = vadd.f32 %v1362, %v1398
        %v1431 = vadd.f32 %v1363, %v1399
        %v1432 = vadd.f32 %v1364, %v1400
        %v1433 = vadd.f32 %v1365, %v1401
        %v1434 = vadd.f32 %v1366, %v1402
        %v1435 = vadd.f32 %v1367, %v1403
        %v1436 = vadd.f32 %v1368, %v1404
        %v1437 = vadd.f32 %v1369, %v1405
        %v1438 = vadd.f32 %v1370, %v1406
        %v1439 = vadd.f32 %v1371, %v1407
        %v1440 = vadd.f32 %v1372, %v1408
        %v1441 = vadd.f32 %v1373, %v1409
        %1442 = vst.msk [vmem:[#allocation3] sm:$0xff] %vm502, %v1410
        %1443 = vst.msk [vmem:[#allocation3 + $0x8] sm:$0xff] %vm502, %v1411
        %1444 = vst.msk [vmem:[#allocation3 + $0x10] sm:$0xff] %vm502, %v1412
        %1445 = vst.msk [vmem:[#allocation3 + $0x18] sm:$0xff] %vm502, %v1413
        %1446 = vst.msk [vmem:[#allocation3 + $0x20] sm:$0xff] %vm502, %v1414
        %1447 = vst.msk [vmem:[#allocation3 + $0x28] sm:$0xff] %vm502, %v1415
        %1448 = vst.msk [vmem:[#allocation3 + $0x30] sm:$0xff] %vm502, %v1416
        %1449 = vst.msk [vmem:[#allocation3 + $0x38] sm:$0xff] %vm502, %v1417
        %1450 = vst.msk [vmem:[#allocation3 + $0x40] sm:$0xff] %vm502, %v1418
        %1451 = vst.msk [vmem:[#allocation3 + $0x48] sm:$0xff] %vm502, %v1419
        %1452 = vst.msk [vmem:[#allocation3 + $0x50] sm:$0xff] %vm502, %v1420
        %1453 = vst.msk [vmem:[#allocation3 + $0x58] sm:$0xff] %vm502, %v1421
        %1454 = vst.msk [vmem:[#allocation3 + $0x60] sm:$0xff] %vm502, %v1422
        %1455 = vst.msk [vmem:[#allocation3 + $0x68] sm:$0xff] %vm502, %v1423
        %1456 = vst.msk [vmem:[#allocation3 + $0x70] sm:$0xff] %vm502, %v1424
        %1457 = vst.msk [vmem:[#allocation3 + $0x78] sm:$0xff] %vm502, %v1425
        %1458 = vst.msk [vmem:[#allocation3 + $0x80] sm:$0xff] %vm502, %v1426
        %1459 = vst.msk [vmem:[#allocation3 + $0x88] sm:$0xff] %vm502, %v1427
        %1460 = vst.msk [vmem:[#allocation3 + $0x90] sm:$0xff] %vm502, %v1428
        %1461 = vst.msk [vmem:[#allocation3 + $0x98] sm:$0xff] %vm502, %v1429
        %1462 = vst.msk [vmem:[#allocation3 + $0xa0] sm:$0xff] %vm502, %v1430
        %1463 = vst.msk [vmem:[#allocation3 + $0xa8] sm:$0xff] %vm502, %v1431
        %1464 = vst.msk [vmem:[#allocation3 + $0xb0] sm:$0xff] %vm502, %v1432
        %1465 = vst.msk [vmem:[#allocation3 + $0xb8] sm:$0xff] %vm502, %v1433
        %1466 = vst.msk [vmem:[#allocation3 + $0xc0] sm:$0xff] %vm502, %v1434
        %1467 = vst.msk [vmem:[#allocation3 + $0xc8] sm:$0xff] %vm502, %v1435
        %1468 = vst.msk [vmem:[#allocation3 + $0xd0] sm:$0xff] %vm502, %v1436
        %1469 = vst.msk [vmem:[#allocation3 + $0xd8] sm:$0xff] %vm502, %v1437
        %1470 = vst.msk [vmem:[#allocation3 + $0xe0] sm:$0xff] %vm502, %v1438
        %1471 = vst.msk [vmem:[#allocation3 + $0xe8] sm:$0xff] %vm502, %v1439
        %1472 = vst.msk [vmem:[#allocation3 + $0xf0] sm:$0xff] %vm502, %v1440
        %1473 = vst.msk [vmem:[#allocation3 + $0xf8] sm:$0xff] %vm502, %v1441
        %v1474 = vld [vmem:[%s1010] sm:$0xff]
        %v1475 = vld [vmem:[%s1010 + $0x8] sm:$0xff]
        %v1476 = vld [vmem:[%s1010 + $0x18] sm:$0xff]
        %v1477 = vld [vmem:[%s1010 + $0x20] sm:$0xff]
        %v1478 = vld [vmem:[%s1010 + $0x30] sm:$0xff]
        %v1479 = vld [vmem:[%s1010 + $0x38] sm:$0xff]
        %v1480 = vld [vmem:[%s1010 + $0x48] sm:$0xff]
        %v1481 = vld [vmem:[%s1010 + $0x50] sm:$0xff]
        %v1482 = vld [vmem:[%s1010 + $0x60] sm:$0xff]
        %v1483 = vld [vmem:[%s1010 + $0x68] sm:$0xff]
        %v1484 = vld [vmem:[%s1010 + $0x78] sm:$0xff]
        %v1485 = vld [vmem:[%s1010 + $0x80] sm:$0xff]
        %v1486 = vld [vmem:[%s1010 + $0x90] sm:$0xff]
        %v1487 = vld [vmem:[%s1010 + $0x98] sm:$0xff]
        %v1488 = vld [vmem:[%s1010 + $0xa8] sm:$0xff]
        %v1489 = vld [vmem:[%s1010 + $0xb0] sm:$0xff]
        %v1490 = vld [vmem:[%s1010 + $0xc0] sm:$0xff]
        %v1491 = vld [vmem:[%s1010 + $0xc8] sm:$0xff]
        %v1492 = vld [vmem:[%s1010 + $0xd8] sm:$0xff]
        %v1493 = vld [vmem:[%s1010 + $0xe0] sm:$0xff]
        %v1494 = vld [vmem:[%s1010 + $0xf0] sm:$0xff]
        %v1495 = vld [vmem:[%s1010 + $0xf8] sm:$0xff]
        %v1496 = vld [vmem:[%s1010 + $0x108] sm:$0xff]
        %v1497 = vld [vmem:[%s1010 + $0x110] sm:$0xff]
        %v1498 = vld [vmem:[%s1010 + $0x120] sm:$0xff]
        %v1499 = vld [vmem:[%s1010 + $0x128] sm:$0xff]
        %v1500 = vld [vmem:[%s1010 + $0x138] sm:$0xff]
        %v1501 = vld [vmem:[%s1010 + $0x140] sm:$0xff]
        %v1502 = vld [vmem:[%s1010 + $0x150] sm:$0xff]
        %v1503 = vld [vmem:[%s1010 + $0x158] sm:$0xff]
        %v1504 = vld [vmem:[%s1010 + $0x168] sm:$0xff]
        %v1505 = vld [vmem:[%s1010 + $0x170] sm:$0xff]
        %s1506 = scalar_lea.vmem %s4, 4
        %v1507 = vld [vmem:[%s1506] sm:$0x1]
        %v1508 = vld [vmem:[#allocation3] sm:$0xff]
        %v1509 = vld [vmem:[#allocation3 + $0x8] sm:$0xff]
        %v1510 = vld [vmem:[#allocation3 + $0x10] sm:$0xff]
        %v1511 = vld [vmem:[#allocation3 + $0x18] sm:$0xff]
        %v1512 = vld [vmem:[#allocation3 + $0x20] sm:$0xff]
        %v1513 = vld [vmem:[#allocation3 + $0x28] sm:$0xff]
        %v1514 = vld [vmem:[#allocation3 + $0x30] sm:$0xff]
        %v1515 = vld [vmem:[#allocation3 + $0x38] sm:$0xff]
        %v1516 = vld [vmem:[#allocation3 + $0x40] sm:$0xff]
        %v1517 = vld [vmem:[#allocation3 + $0x48] sm:$0xff]
        %v1518 = vld [vmem:[#allocation3 + $0x50] sm:$0xff]
        %v1519 = vld [vmem:[#allocation3 + $0x58] sm:$0xff]
        %v1520 = vld [vmem:[#allocation3 + $0x60] sm:$0xff]
        %v1521 = vld [vmem:[#allocation3 + $0x68] sm:$0xff]
        %v1522 = vld [vmem:[#allocation3 + $0x70] sm:$0xff]
        %v1523 = vld [vmem:[#allocation3 + $0x78] sm:$0xff]
        %v1524 = vld [vmem:[#allocation3 + $0x80] sm:$0xff]
        %v1525 = vld [vmem:[#allocation3 + $0x88] sm:$0xff]
        %v1526 = vld [vmem:[#allocation3 + $0x90] sm:$0xff]
        %v1527 = vld [vmem:[#allocation3 + $0x98] sm:$0xff]
        %v1528 = vld [vmem:[#allocation3 + $0xa0] sm:$0xff]
        %v1529 = vld [vmem:[#allocation3 + $0xa8] sm:$0xff]
        %v1530 = vld [vmem:[#allocation3 + $0xb0] sm:$0xff]
        %v1531 = vld [vmem:[#allocation3 + $0xb8] sm:$0xff]
        %v1532 = vld [vmem:[#allocation3 + $0xc0] sm:$0xff]
        %v1533 = vld [vmem:[#allocation3 + $0xc8] sm:$0xff]
        %v1534 = vld [vmem:[#allocation3 + $0xd0] sm:$0xff]
        %v1535 = vld [vmem:[#allocation3 + $0xd8] sm:$0xff]
        %v1536 = vld [vmem:[#allocation3 + $0xe0] sm:$0xff]
        %v1537 = vld [vmem:[#allocation3 + $0xe8] sm:$0xff]
        %v1538 = vld [vmem:[#allocation3 + $0xf0] sm:$0xff]
        %v1539 = vld [vmem:[#allocation3 + $0xf8] sm:$0xff]
        %v1540 = vlaneseq
        %v1541 = vshrl.u32 %v1540, 7
        %v1542 = vsub.s32 0, %v1541
        %v1543 = vrot.slane %v1507, %v1542
        %v1544 = vmul.f32 %v1474, %v1543
        %v1545 = vmul.f32 %v1475, %v1543
        %v1546 = vmul.f32 %v1476, %v1543
        %v1547 = vmul.f32 %v1477, %v1543
        %v1548 = vmul.f32 %v1478, %v1543
        %v1549 = vmul.f32 %v1479, %v1543
        %v1550 = vmul.f32 %v1480, %v1543
        %v1551 = vmul.f32 %v1481, %v1543
        %v1552 = vmul.f32 %v1482, %v1543
        %v1553 = vmul.f32 %v1483, %v1543
        %v1554 = vmul.f32 %v1484, %v1543
        %v1555 = vmul.f32 %v1485, %v1543
        %v1556 = vmul.f32 %v1486, %v1543
        %v1557 = vmul.f32 %v1487, %v1543
        %v1558 = vmul.f32 %v1488, %v1543
        %v1559 = vmul.f32 %v1489, %v1543
        %v1560 = vmul.f32 %v1490, %v1543
        %v1561 = vmul.f32 %v1491, %v1543
        %v1562 = vmul.f32 %v1492, %v1543
        %v1563 = vmul.f32 %v1493, %v1543
        %v1564 = vmul.f32 %v1494, %v1543
        %v1565 = vmul.f32 %v1495, %v1543
        %v1566 = vmul.f32 %v1496, %v1543
        %v1567 = vmul.f32 %v1497, %v1543
        %v1568 = vmul.f32 %v1498, %v1543
        %v1569 = vmul.f32 %v1499, %v1543
        %v1570 = vmul.f32 %v1500, %v1543
        %v1571 = vmul.f32 %v1501, %v1543
        %v1572 = vmul.f32 %v1502, %v1543
        %v1573 = vmul.f32 %v1503, %v1543
        %v1574 = vmul.f32 %v1504, %v1543
        %v1575 = vmul.f32 %v1505, %v1543
        %v1576 = vadd.f32 %v1508, %v1544
        %v1577 = vadd.f32 %v1509, %v1545
        %v1578 = vadd.f32 %v1510, %v1546
        %v1579 = vadd.f32 %v1511, %v1547
        %v1580 = vadd.f32 %v1512, %v1548
        %v1581 = vadd.f32 %v1513, %v1549
        %v1582 = vadd.f32 %v1514, %v1550
        %v1583 = vadd.f32 %v1515, %v1551
        %v1584 = vadd.f32 %v1516, %v1552
        %v1585 = vadd.f32 %v1517, %v1553
        %v1586 = vadd.f32 %v1518, %v1554
        %v1587 = vadd.f32 %v1519, %v1555
        %v1588 = vadd.f32 %v1520, %v1556
        %v1589 = vadd.f32 %v1521, %v1557
        %v1590 = vadd.f32 %v1522, %v1558
        %v1591 = vadd.f32 %v1523, %v1559
        %v1592 = vadd.f32 %v1524, %v1560
        %v1593 = vadd.f32 %v1525, %v1561
        %v1594 = vadd.f32 %v1526, %v1562
        %v1595 = vadd.f32 %v1527, %v1563
        %v1596 = vadd.f32 %v1528, %v1564
        %v1597 = vadd.f32 %v1529, %v1565
        %v1598 = vadd.f32 %v1530, %v1566
        %v1599 = vadd.f32 %v1531, %v1567
        %v1600 = vadd.f32 %v1532, %v1568
        %v1601 = vadd.f32 %v1533, %v1569
        %v1602 = vadd.f32 %v1534, %v1570
        %v1603 = vadd.f32 %v1535, %v1571
        %v1604 = vadd.f32 %v1536, %v1572
        %v1605 = vadd.f32 %v1537, %v1573
        %v1606 = vadd.f32 %v1538, %v1574
        %v1607 = vadd.f32 %v1539, %v1575
        %1608 = vst.msk [vmem:[#allocation3] sm:$0xff] %vm502, %v1576
        %1609 = vst.msk [vmem:[#allocation3 + $0x8] sm:$0xff] %vm502, %v1577
        %1610 = vst.msk [vmem:[#allocation3 + $0x10] sm:$0xff] %vm502, %v1578
        %1611 = vst.msk [vmem:[#allocation3 + $0x18] sm:$0xff] %vm502, %v1579
        %1612 = vst.msk [vmem:[#allocation3 + $0x20] sm:$0xff] %vm502, %v1580
        %1613 = vst.msk [vmem:[#allocation3 + $0x28] sm:$0xff] %vm502, %v1581
        %1614 = vst.msk [vmem:[#allocation3 + $0x30] sm:$0xff] %vm502, %v1582
        %1615 = vst.msk [vmem:[#allocation3 + $0x38] sm:$0xff] %vm502, %v1583
        %1616 = vst.msk [vmem:[#allocation3 + $0x40] sm:$0xff] %vm502, %v1584
        %1617 = vst.msk [vmem:[#allocation3 + $0x48] sm:$0xff] %vm502, %v1585
        %1618 = vst.msk [vmem:[#allocation3 + $0x50] sm:$0xff] %vm502, %v1586
        %1619 = vst.msk [vmem:[#allocation3 + $0x58] sm:$0xff] %vm502, %v1587
        %1620 = vst.msk [vmem:[#allocation3 + $0x60] sm:$0xff] %vm502, %v1588
        %1621 = vst.msk [vmem:[#allocation3 + $0x68] sm:$0xff] %vm502, %v1589
        %1622 = vst.msk [vmem:[#allocation3 + $0x70] sm:$0xff] %vm502, %v1590
        %1623 = vst.msk [vmem:[#allocation3 + $0x78] sm:$0xff] %vm502, %v1591
        %1624 = vst.msk [vmem:[#allocation3 + $0x80] sm:$0xff] %vm502, %v1592
        %1625 = vst.msk [vmem:[#allocation3 + $0x88] sm:$0xff] %vm502, %v1593
        %1626 = vst.msk [vmem:[#allocation3 + $0x90] sm:$0xff] %vm502, %v1594
        %1627 = vst.msk [vmem:[#allocation3 + $0x98] sm:$0xff] %vm502, %v1595
        %1628 = vst.msk [vmem:[#allocation3 + $0xa0] sm:$0xff] %vm502, %v1596
        %1629 = vst.msk [vmem:[#allocation3 + $0xa8] sm:$0xff] %vm502, %v1597
        %1630 = vst.msk [vmem:[#allocation3 + $0xb0] sm:$0xff] %vm502, %v1598
        %1631 = vst.msk [vmem:[#allocation3 + $0xb8] sm:$0xff] %vm502, %v1599
        %1632 = vst.msk [vmem:[#allocation3 + $0xc0] sm:$0xff] %vm502, %v1600
        %1633 = vst.msk [vmem:[#allocation3 + $0xc8] sm:$0xff] %vm502, %v1601
        %1634 = vst.msk [vmem:[#allocation3 + $0xd0] sm:$0xff] %vm502, %v1602
        %1635 = vst.msk [vmem:[#allocation3 + $0xd8] sm:$0xff] %vm502, %v1603
        %1636 = vst.msk [vmem:[#allocation3 + $0xe0] sm:$0xff] %vm502, %v1604
        %1637 = vst.msk [vmem:[#allocation3 + $0xe8] sm:$0xff] %vm502, %v1605
        %1638 = vst.msk [vmem:[#allocation3 + $0xf0] sm:$0xff] %vm502, %v1606
        %1639 = vst.msk [vmem:[#allocation3 + $0xf8] sm:$0xff] %vm502, %v1607
        %v1640 = vld [vmem:[%s1010 + $0x1] sm:$0xff]
        %v1641 = vld [vmem:[%s1010 + $0x9] sm:$0xff]
        %v1642 = vld [vmem:[%s1010 + $0x19] sm:$0xff]
        %v1643 = vld [vmem:[%s1010 + $0x21] sm:$0xff]
        %v1644 = vld [vmem:[%s1010 + $0x31] sm:$0xff]
        %v1645 = vld [vmem:[%s1010 + $0x39] sm:$0xff]
        %v1646 = vld [vmem:[%s1010 + $0x49] sm:$0xff]
        %v1647 = vld [vmem:[%s1010 + $0x51] sm:$0xff]
        %v1648 = vld [vmem:[%s1010 + $0x61] sm:$0xff]
        %v1649 = vld [vmem:[%s1010 + $0x69] sm:$0xff]
        %v1650 = vld [vmem:[%s1010 + $0x79] sm:$0xff]
        %v1651 = vld [vmem:[%s1010 + $0x81] sm:$0xff]
        %v1652 = vld [vmem:[%s1010 + $0x91] sm:$0xff]
        %v1653 = vld [vmem:[%s1010 + $0x99] sm:$0xff]
        %v1654 = vld [vmem:[%s1010 + $0xa9] sm:$0xff]
        %v1655 = vld [vmem:[%s1010 + $0xb1] sm:$0xff]
        %v1656 = vld [vmem:[%s1010 + $0xc1] sm:$0xff]
        %v1657 = vld [vmem:[%s1010 + $0xc9] sm:$0xff]
        %v1658 = vld [vmem:[%s1010 + $0xd9] sm:$0xff]
        %v1659 = vld [vmem:[%s1010 + $0xe1] sm:$0xff]
        %v1660 = vld [vmem:[%s1010 + $0xf1] sm:$0xff]
        %v1661 = vld [vmem:[%s1010 + $0xf9] sm:$0xff]
        %v1662 = vld [vmem:[%s1010 + $0x109] sm:$0xff]
        %v1663 = vld [vmem:[%s1010 + $0x111] sm:$0xff]
        %v1664 = vld [vmem:[%s1010 + $0x121] sm:$0xff]
        %v1665 = vld [vmem:[%s1010 + $0x129] sm:$0xff]
        %v1666 = vld [vmem:[%s1010 + $0x139] sm:$0xff]
        %v1667 = vld [vmem:[%s1010 + $0x141] sm:$0xff]
        %v1668 = vld [vmem:[%s1010 + $0x151] sm:$0xff]
        %v1669 = vld [vmem:[%s1010 + $0x159] sm:$0xff]
        %v1670 = vld [vmem:[%s1010 + $0x169] sm:$0xff]
        %v1671 = vld [vmem:[%s1010 + $0x171] sm:$0xff]
        %v1672 = vld [vmem:[%s1506 + $0x1] sm:$0x1]
        %v1673 = vld [vmem:[#allocation3] sm:$0xff]
        %v1674 = vld [vmem:[#allocation3 + $0x8] sm:$0xff]
        %v1675 = vld [vmem:[#allocation3 + $0x10] sm:$0xff]
        %v1676 = vld [vmem:[#allocation3 + $0x18] sm:$0xff]
        %v1677 = vld [vmem:[#allocation3 + $0x20] sm:$0xff]
        %v1678 = vld [vmem:[#allocation3 + $0x28] sm:$0xff]
        %v1679 = vld [vmem:[#allocation3 + $0x30] sm:$0xff]
        %v1680 = vld [vmem:[#allocation3 + $0x38] sm:$0xff]
        %v1681 = vld [vmem:[#allocation3 + $0x40] sm:$0xff]
        %v1682 = vld [vmem:[#allocation3 + $0x48] sm:$0xff]
        %v1683 = vld [vmem:[#allocation3 + $0x50] sm:$0xff]
        %v1684 = vld [vmem:[#allocation3 + $0x58] sm:$0xff]
        %v1685 = vld [vmem:[#allocation3 + $0x60] sm:$0xff]
        %v1686 = vld [vmem:[#allocation3 + $0x68] sm:$0xff]
        %v1687 = vld [vmem:[#allocation3 + $0x70] sm:$0xff]
        %v1688 = vld [vmem:[#allocation3 + $0x78] sm:$0xff]
        %v1689 = vld [vmem:[#allocation3 + $0x80] sm:$0xff]
        %v1690 = vld [vmem:[#allocation3 + $0x88] sm:$0xff]
        %v1691 = vld [vmem:[#allocation3 + $0x90] sm:$0xff]
        %v1692 = vld [vmem:[#allocation3 + $0x98] sm:$0xff]
        %v1693 = vld [vmem:[#allocation3 + $0xa0] sm:$0xff]
        %v1694 = vld [vmem:[#allocation3 + $0xa8] sm:$0xff]
        %v1695 = vld [vmem:[#allocation3 + $0xb0] sm:$0xff]
        %v1696 = vld [vmem:[#allocation3 + $0xb8] sm:$0xff]
        %v1697 = vld [vmem:[#allocation3 + $0xc0] sm:$0xff]
        %v1698 = vld [vmem:[#allocation3 + $0xc8] sm:$0xff]
        %v1699 = vld [vmem:[#allocation3 + $0xd0] sm:$0xff]
        %v1700 = vld [vmem:[#allocation3 + $0xd8] sm:$0xff]
        %v1701 = vld [vmem:[#allocation3 + $0xe0] sm:$0xff]
        %v1702 = vld [vmem:[#allocation3 + $0xe8] sm:$0xff]
        %v1703 = vld [vmem:[#allocation3 + $0xf0] sm:$0xff]
        %v1704 = vld [vmem:[#allocation3 + $0xf8] sm:$0xff]
        %v1705 = vlaneseq
        %v1706 = vshrl.u32 %v1705, 7
        %v1707 = vsub.s32 0, %v1706
        %v1708 = vrot.slane %v1672, %v1707
        %v1709 = vmul.f32 %v1640, %v1708
        %v1710 = vmul.f32 %v1641, %v1708
        %v1711 = vmul.f32 %v1642, %v1708
        %v1712 = vmul.f32 %v1643, %v1708
        %v1713 = vmul.f32 %v1644, %v1708
        %v1714 = vmul.f32 %v1645, %v1708
        %v1715 = vmul.f32 %v1646, %v1708
        %v1716 = vmul.f32 %v1647, %v1708
        %v1717 = vmul.f32 %v1648, %v1708
        %v1718 = vmul.f32 %v1649, %v1708
        %v1719 = vmul.f32 %v1650, %v1708
        %v1720 = vmul.f32 %v1651, %v1708
        %v1721 = vmul.f32 %v1652, %v1708
        %v1722 = vmul.f32 %v1653, %v1708
        %v1723 = vmul.f32 %v1654, %v1708
        %v1724 = vmul.f32 %v1655, %v1708
        %v1725 = vmul.f32 %v1656, %v1708
        %v1726 = vmul.f32 %v1657, %v1708
        %v1727 = vmul.f32 %v1658, %v1708
        %v1728 = vmul.f32 %v1659, %v1708
        %v1729 = vmul.f32 %v1660, %v1708
        %v1730 = vmul.f32 %v1661, %v1708
        %v1731 = vmul.f32 %v1662, %v1708
        %v1732 = vmul.f32 %v1663, %v1708
        %v1733 = vmul.f32 %v1664, %v1708
        %v1734 = vmul.f32 %v1665, %v1708
        %v1735 = vmul.f32 %v1666, %v1708
        %v1736 = vmul.f32 %v1667, %v1708
        %v1737 = vmul.f32 %v1668, %v1708
        %v1738 = vmul.f32 %v1669, %v1708
        %v1739 = vmul.f32 %v1670, %v1708
        %v1740 = vmul.f32 %v1671, %v1708
        %v1741 = vadd.f32 %v1673, %v1709
        %v1742 = vadd.f32 %v1674, %v1710
        %v1743 = vadd.f32 %v1675, %v1711
        %v1744 = vadd.f32 %v1676, %v1712
        %v1745 = vadd.f32 %v1677, %v1713
        %v1746 = vadd.f32 %v1678, %v1714
        %v1747 = vadd.f32 %v1679, %v1715
        %v1748 = vadd.f32 %v1680, %v1716
        %v1749 = vadd.f32 %v1681, %v1717
        %v1750 = vadd.f32 %v1682, %v1718
        %v1751 = vadd.f32 %v1683, %v1719
        %v1752 = vadd.f32 %v1684, %v1720
        %v1753 = vadd.f32 %v1685, %v1721
        %v1754 = vadd.f32 %v1686, %v1722
        %v1755 = vadd.f32 %v1687, %v1723
        %v1756 = vadd.f32 %v1688, %v1724
        %v1757 = vadd.f32 %v1689, %v1725
        %v1758 = vadd.f32 %v1690, %v1726
        %v1759 = vadd.f32 %v1691, %v1727
        %v1760 = vadd.f32 %v1692, %v1728
        %v1761 = vadd.f32 %v1693, %v1729
        %v1762 = vadd.f32 %v1694, %v1730
        %v1763 = vadd.f32 %v1695, %v1731
        %v1764 = vadd.f32 %v1696, %v1732
        %v1765 = vadd.f32 %v1697, %v1733
        %v1766 = vadd.f32 %v1698, %v1734
        %v1767 = vadd.f32 %v1699, %v1735
        %v1768 = vadd.f32 %v1700, %v1736
        %v1769 = vadd.f32 %v1701, %v1737
        %v1770 = vadd.f32 %v1702, %v1738
        %v1771 = vadd.f32 %v1703, %v1739
        %v1772 = vadd.f32 %v1704, %v1740
        %1773 = vst.msk [vmem:[#allocation3] sm:$0xff] %vm502, %v1741
        %1774 = vst.msk [vmem:[#allocation3 + $0x8] sm:$0xff] %vm502, %v1742
        %1775 = vst.msk [vmem:[#allocation3 + $0x10] sm:$0xff] %vm502, %v1743
        %1776 = vst.msk [vmem:[#allocation3 + $0x18] sm:$0xff] %vm502, %v1744
        %1777 = vst.msk [vmem:[#allocation3 + $0x20] sm:$0xff] %vm502, %v1745
        %1778 = vst.msk [vmem:[#allocation3 + $0x28] sm:$0xff] %vm502, %v1746
        %1779 = vst.msk [vmem:[#allocation3 + $0x30] sm:$0xff] %vm502, %v1747
        %1780 = vst.msk [vmem:[#allocation3 + $0x38] sm:$0xff] %vm502, %v1748
        %1781 = vst.msk [vmem:[#allocation3 + $0x40] sm:$0xff] %vm502, %v1749
        %1782 = vst.msk [vmem:[#allocation3 + $0x48] sm:$0xff] %vm502, %v1750
        %1783 = vst.msk [vmem:[#allocation3 + $0x50] sm:$0xff] %vm502, %v1751
        %1784 = vst.msk [vmem:[#allocation3 + $0x58] sm:$0xff] %vm502, %v1752
        %1785 = vst.msk [vmem:[#allocation3 + $0x60] sm:$0xff] %vm502, %v1753
        %1786 = vst.msk [vmem:[#allocation3 + $0x68] sm:$0xff] %vm502, %v1754
        %1787 = vst.msk [vmem:[#allocation3 + $0x70] sm:$0xff] %vm502, %v1755
        %1788 = vst.msk [vmem:[#allocation3 + $0x78] sm:$0xff] %vm502, %v1756
        %1789 = vst.msk [vmem:[#allocation3 + $0x80] sm:$0xff] %vm502, %v1757
        %1790 = vst.msk [vmem:[#allocation3 + $0x88] sm:$0xff] %vm502, %v1758
        %1791 = vst.msk [vmem:[#allocation3 + $0x90] sm:$0xff] %vm502, %v1759
        %1792 = vst.msk [vmem:[#allocation3 + $0x98] sm:$0xff] %vm502, %v1760
        %1793 = vst.msk [vmem:[#allocation3 + $0xa0] sm:$0xff] %vm502, %v1761
        %1794 = vst.msk [vmem:[#allocation3 + $0xa8] sm:$0xff] %vm502, %v1762
        %1795 = vst.msk [vmem:[#allocation3 + $0xb0] sm:$0xff] %vm502, %v1763
        %1796 = vst.msk [vmem:[#allocation3 + $0xb8] sm:$0xff] %vm502, %v1764
        %1797 = vst.msk [vmem:[#allocation3 + $0xc0] sm:$0xff] %vm502, %v1765
        %1798 = vst.msk [vmem:[#allocation3 + $0xc8] sm:$0xff] %vm502, %v1766
        %1799 = vst.msk [vmem:[#allocation3 + $0xd0] sm:$0xff] %vm502, %v1767
        %1800 = vst.msk [vmem:[#allocation3 + $0xd8] sm:$0xff] %vm502, %v1768
        %1801 = vst.msk [vmem:[#allocation3 + $0xe0] sm:$0xff] %vm502, %v1769
        %1802 = vst.msk [vmem:[#allocation3 + $0xe8] sm:$0xff] %vm502, %v1770
        %1803 = vst.msk [vmem:[#allocation3 + $0xf0] sm:$0xff] %vm502, %v1771
        %1804 = vst.msk [vmem:[#allocation3 + $0xf8] sm:$0xff] %vm502, %v1772
        %v1805 = vld [vmem:[%s1010 + $0x2] sm:$0xff]
        %v1806 = vld [vmem:[%s1010 + $0xa] sm:$0xff]
        %v1807 = vld [vmem:[%s1010 + $0x1a] sm:$0xff]
        %v1808 = vld [vmem:[%s1010 + $0x22] sm:$0xff]
        %v1809 = vld [vmem:[%s1010 + $0x32] sm:$0xff]
        %v1810 = vld [vmem:[%s1010 + $0x3a] sm:$0xff]
        %v1811 = vld [vmem:[%s1010 + $0x4a] sm:$0xff]
        %v1812 = vld [vmem:[%s1010 + $0x52] sm:$0xff]
        %v1813 = vld [vmem:[%s1010 + $0x62] sm:$0xff]
        %v1814 = vld [vmem:[%s1010 + $0x6a] sm:$0xff]
        %v1815 = vld [vmem:[%s1010 + $0x7a] sm:$0xff]
        %v1816 = vld [vmem:[%s1010 + $0x82] sm:$0xff]
        %v1817 = vld [vmem:[%s1010 + $0x92] sm:$0xff]
        %v1818 = vld [vmem:[%s1010 + $0x9a] sm:$0xff]
        %v1819 = vld [vmem:[%s1010 + $0xaa] sm:$0xff]
        %v1820 = vld [vmem:[%s1010 + $0xb2] sm:$0xff]
        %v1821 = vld [vmem:[%s1010 + $0xc2] sm:$0xff]
        %v1822 = vld [vmem:[%s1010 + $0xca] sm:$0xff]
        %v1823 = vld [vmem:[%s1010 + $0xda] sm:$0xff]
        %v1824 = vld [vmem:[%s1010 + $0xe2] sm:$0xff]
        %v1825 = vld [vmem:[%s1010 + $0xf2] sm:$0xff]
        %v1826 = vld [vmem:[%s1010 + $0xfa] sm:$0xff]
        %v1827 = vld [vmem:[%s1010 + $0x10a] sm:$0xff]
        %v1828 = vld [vmem:[%s1010 + $0x112] sm:$0xff]
        %v1829 = vld [vmem:[%s1010 + $0x122] sm:$0xff]
        %v1830 = vld [vmem:[%s1010 + $0x12a] sm:$0xff]
        %v1831 = vld [vmem:[%s1010 + $0x13a] sm:$0xff]
        %v1832 = vld [vmem:[%s1010 + $0x142] sm:$0xff]
        %v1833 = vld [vmem:[%s1010 + $0x152] sm:$0xff]
        %v1834 = vld [vmem:[%s1010 + $0x15a] sm:$0xff]
        %v1835 = vld [vmem:[%s1010 + $0x16a] sm:$0xff]
        %v1836 = vld [vmem:[%s1010 + $0x172] sm:$0xff]
        %v1837 = vld [vmem:[%s1506 + $0x2] sm:$0x1]
        %v1838 = vld [vmem:[#allocation3] sm:$0xff]
        %v1839 = vld [vmem:[#allocation3 + $0x8] sm:$0xff]
        %v1840 = vld [vmem:[#allocation3 + $0x10] sm:$0xff]
        %v1841 = vld [vmem:[#allocation3 + $0x18] sm:$0xff]
        %v1842 = vld [vmem:[#allocation3 + $0x20] sm:$0xff]
        %v1843 = vld [vmem:[#allocation3 + $0x28] sm:$0xff]
        %v1844 = vld [vmem:[#allocation3 + $0x30] sm:$0xff]
        %v1845 = vld [vmem:[#allocation3 + $0x38] sm:$0xff]
        %v1846 = vld [vmem:[#allocation3 + $0x40] sm:$0xff]
        %v1847 = vld [vmem:[#allocation3 + $0x48] sm:$0xff]
        %v1848 = vld [vmem:[#allocation3 + $0x50] sm:$0xff]
        %v1849 = vld [vmem:[#allocation3 + $0x58] sm:$0xff]
        %v1850 = vld [vmem:[#allocation3 + $0x60] sm:$0xff]
        %v1851 = vld [vmem:[#allocation3 + $0x68] sm:$0xff]
        %v1852 = vld [vmem:[#allocation3 + $0x70] sm:$0xff]
        %v1853 = vld [vmem:[#allocation3 + $0x78] sm:$0xff]
        %v1854 = vld [vmem:[#allocation3 + $0x80] sm:$0xff]
        %v1855 = vld [vmem:[#allocation3 + $0x88] sm:$0xff]
        %v1856 = vld [vmem:[#allocation3 + $0x90] sm:$0xff]
        %v1857 = vld [vmem:[#allocation3 + $0x98] sm:$0xff]
        %v1858 = vld [vmem:[#allocation3 + $0xa0] sm:$0xff]
        %v1859 = vld [vmem:[#allocation3 + $0xa8] sm:$0xff]
        %v1860 = vld [vmem:[#allocation3 + $0xb0] sm:$0xff]
        %v1861 = vld [vmem:[#allocation3 + $0xb8] sm:$0xff]
        %v1862 = vld [vmem:[#allocation3 + $0xc0] sm:$0xff]
        %v1863 = vld [vmem:[#allocation3 + $0xc8] sm:$0xff]
        %v1864 = vld [vmem:[#allocation3 + $0xd0] sm:$0xff]
        %v1865 = vld [vmem:[#allocation3 + $0xd8] sm:$0xff]
        %v1866 = vld [vmem:[#allocation3 + $0xe0] sm:$0xff]
        %v1867 = vld [vmem:[#allocation3 + $0xe8] sm:$0xff]
        %v1868 = vld [vmem:[#allocation3 + $0xf0] sm:$0xff]
        %v1869 = vld [vmem:[#allocation3 + $0xf8] sm:$0xff]
        %v1870 = vlaneseq
        %v1871 = vshrl.u32 %v1870, 7
        %v1872 = vsub.s32 0, %v1871
        %v1873 = vrot.slane %v1837, %v1872
        %v1874 = vmul.f32 %v1805, %v1873
        %v1875 = vmul.f32 %v1806, %v1873
        %v1876 = vmul.f32 %v1807, %v1873
        %v1877 = vmul.f32 %v1808, %v1873
        %v1878 = vmul.f32 %v1809, %v1873
        %v1879 = vmul.f32 %v1810, %v1873
        %v1880 = vmul.f32 %v1811, %v1873
        %v1881 = vmul.f32 %v1812, %v1873
        %v1882 = vmul.f32 %v1813, %v1873
        %v1883 = vmul.f32 %v1814, %v1873
        %v1884 = vmul.f32 %v1815, %v1873
        %v1885 = vmul.f32 %v1816, %v1873
        %v1886 = vmul.f32 %v1817, %v1873
        %v1887 = vmul.f32 %v1818, %v1873
        %v1888 = vmul.f32 %v1819, %v1873
        %v1889 = vmul.f32 %v1820, %v1873
        %v1890 = vmul.f32 %v1821, %v1873
        %v1891 = vmul.f32 %v1822, %v1873
        %v1892 = vmul.f32 %v1823, %v1873
        %v1893 = vmul.f32 %v1824, %v1873
        %v1894 = vmul.f32 %v1825, %v1873
        %v1895 = vmul.f32 %v1826, %v1873
        %v1896 = vmul.f32 %v1827, %v1873
        %v1897 = vmul.f32 %v1828, %v1873
        %v1898 = vmul.f32 %v1829, %v1873
        %v1899 = vmul.f32 %v1830, %v1873
        %v1900 = vmul.f32 %v1831, %v1873
        %v1901 = vmul.f32 %v1832, %v1873
        %v1902 = vmul.f32 %v1833, %v1873
        %v1903 = vmul.f32 %v1834, %v1873
        %v1904 = vmul.f32 %v1835, %v1873
        %v1905 = vmul.f32 %v1836, %v1873
        %v1906 = vadd.f32 %v1838, %v1874
        %v1907 = vadd.f32 %v1839, %v1875
        %v1908 = vadd.f32 %v1840, %v1876
        %v1909 = vadd.f32 %v1841, %v1877
        %v1910 = vadd.f32 %v1842, %v1878
        %v1911 = vadd.f32 %v1843, %v1879
        %v1912 = vadd.f32 %v1844, %v1880
        %v1913 = vadd.f32 %v1845, %v1881
        %v1914 = vadd.f32 %v1846, %v1882
        %v1915 = vadd.f32 %v1847, %v1883
        %v1916 = vadd.f32 %v1848, %v1884
        %v1917 = vadd.f32 %v1849, %v1885
        %v1918 = vadd.f32 %v1850, %v1886
        %v1919 = vadd.f32 %v1851, %v1887
        %v1920 = vadd.f32 %v1852, %v1888
        %v1921 = vadd.f32 %v1853, %v1889
        %v1922 = vadd.f32 %v1854, %v1890
        %v1923 = vadd.f32 %v1855, %v1891
        %v1924 = vadd.f32 %v1856, %v1892
        %v1925 = vadd.f32 %v1857, %v1893
        %v1926 = vadd.f32 %v1858, %v1894
        %v1927 = vadd.f32 %v1859, %v1895
        %v1928 = vadd.f32 %v1860, %v1896
        %v1929 = vadd.f32 %v1861, %v1897
        %v1930 = vadd.f32 %v1862, %v1898
        %v1931 = vadd.f32 %v1863, %v1899
        %v1932 = vadd.f32 %v1864, %v1900
        %v1933 = vadd.f32 %v1865, %v1901
        %v1934 = vadd.f32 %v1866, %v1902
        %v1935 = vadd.f32 %v1867, %v1903
        %v1936 = vadd.f32 %v1868, %v1904
        %v1937 = vadd.f32 %v1869, %v1905
        %1938 = vst.msk [vmem:[#allocation3] sm:$0xff] %vm502, %v1906
        %1939 = vst.msk [vmem:[#allocation3 + $0x8] sm:$0xff] %vm502, %v1907
        %1940 = vst.msk [vmem:[#allocation3 + $0x10] sm:$0xff] %vm502, %v1908
        %1941 = vst.msk [vmem:[#allocation3 + $0x18] sm:$0xff] %vm502, %v1909
        %1942 = vst.msk [vmem:[#allocation3 + $0x20] sm:$0xff] %vm502, %v1910
        %1943 = vst.msk [vmem:[#allocation3 + $0x28] sm:$0xff] %vm502, %v1911
        %1944 = vst.msk [vmem:[#allocation3 + $0x30] sm:$0xff] %vm502, %v1912
        %1945 = vst.msk [vmem:[#allocation3 + $0x38] sm:$0xff] %vm502, %v1913
        %1946 = vst.msk [vmem:[#allocation3 + $0x40] sm:$0xff] %vm502, %v1914
        %1947 = vst.msk [vmem:[#allocation3 + $0x48] sm:$0xff] %vm502, %v1915
        %1948 = vst.msk [vmem:[#allocation3 + $0x50] sm:$0xff] %vm502, %v1916
        %1949 = vst.msk [vmem:[#allocation3 + $0x58] sm:$0xff] %vm502, %v1917
        %1950 = vst.msk [vmem:[#allocation3 + $0x60] sm:$0xff] %vm502, %v1918
        %1951 = vst.msk [vmem:[#allocation3 + $0x68] sm:$0xff] %vm502, %v1919
        %1952 = vst.msk [vmem:[#allocation3 + $0x70] sm:$0xff] %vm502, %v1920
        %1953 = vst.msk [vmem:[#allocation3 + $0x78] sm:$0xff] %vm502, %v1921
        %1954 = vst.msk [vmem:[#allocation3 + $0x80] sm:$0xff] %vm502, %v1922
        %1955 = vst.msk [vmem:[#allocation3 + $0x88] sm:$0xff] %vm502, %v1923
        %1956 = vst.msk [vmem:[#allocation3 + $0x90] sm:$0xff] %vm502, %v1924
        %1957 = vst.msk [vmem:[#allocation3 + $0x98] sm:$0xff] %vm502, %v1925
        %1958 = vst.msk [vmem:[#allocation3 + $0xa0] sm:$0xff] %vm502, %v1926
        %1959 = vst.msk [vmem:[#allocation3 + $0xa8] sm:$0xff] %vm502, %v1927
        %1960 = vst.msk [vmem:[#allocation3 + $0xb0] sm:$0xff] %vm502, %v1928
        %1961 = vst.msk [vmem:[#allocation3 + $0xb8] sm:$0xff] %vm502, %v1929
        %1962 = vst.msk [vmem:[#allocation3 + $0xc0] sm:$0xff] %vm502, %v1930
        %1963 = vst.msk [vmem:[#allocation3 + $0xc8] sm:$0xff] %vm502, %v1931
        %1964 = vst.msk [vmem:[#allocation3 + $0xd0] sm:$0xff] %vm502, %v1932
        %1965 = vst.msk [vmem:[#allocation3 + $0xd8] sm:$0xff] %vm502, %v1933
        %1966 = vst.msk [vmem:[#allocation3 + $0xe0] sm:$0xff] %vm502, %v1934
        %1967 = vst.msk [vmem:[#allocation3 + $0xe8] sm:$0xff] %vm502, %v1935
        %1968 = vst.msk [vmem:[#allocation3 + $0xf0] sm:$0xff] %vm502, %v1936
        %1969 = vst.msk [vmem:[#allocation3 + $0xf8] sm:$0xff] %vm502, %v1937
        %s1970 = scalar_lea.vmem [#allocation2], 48
        %v1971 = vld [vmem:[%s1970] sm:$0xff]
        %v1972 = vld [vmem:[%s1970 + $0x8] sm:$0xff]
        %v1973 = vld [vmem:[%s1970 + $0x18] sm:$0xff]
        %v1974 = vld [vmem:[%s1970 + $0x20] sm:$0xff]
        %v1975 = vld [vmem:[%s1970 + $0x30] sm:$0xff]
        %v1976 = vld [vmem:[%s1970 + $0x38] sm:$0xff]
        %v1977 = vld [vmem:[%s1970 + $0x48] sm:$0xff]
        %v1978 = vld [vmem:[%s1970 + $0x50] sm:$0xff]
        %v1979 = vld [vmem:[%s1970 + $0x60] sm:$0xff]
        %v1980 = vld [vmem:[%s1970 + $0x68] sm:$0xff]
        %v1981 = vld [vmem:[%s1970 + $0x78] sm:$0xff]
        %v1982 = vld [vmem:[%s1970 + $0x80] sm:$0xff]
        %v1983 = vld [vmem:[%s1970 + $0x90] sm:$0xff]
        %v1984 = vld [vmem:[%s1970 + $0x98] sm:$0xff]
        %v1985 = vld [vmem:[%s1970 + $0xa8] sm:$0xff]
        %v1986 = vld [vmem:[%s1970 + $0xb0] sm:$0xff]
        %v1987 = vld [vmem:[%s1970 + $0xc0] sm:$0xff]
        %v1988 = vld [vmem:[%s1970 + $0xc8] sm:$0xff]
        %v1989 = vld [vmem:[%s1970 + $0xd8] sm:$0xff]
        %v1990 = vld [vmem:[%s1970 + $0xe0] sm:$0xff]
        %v1991 = vld [vmem:[%s1970 + $0xf0] sm:$0xff]
        %v1992 = vld [vmem:[%s1970 + $0xf8] sm:$0xff]
        %v1993 = vld [vmem:[%s1970 + $0x108] sm:$0xff]
        %v1994 = vld [vmem:[%s1970 + $0x110] sm:$0xff]
        %v1995 = vld [vmem:[%s1970 + $0x120] sm:$0xff]
        %v1996 = vld [vmem:[%s1970 + $0x128] sm:$0xff]
        %v1997 = vld [vmem:[%s1970 + $0x138] sm:$0xff]
        %v1998 = vld [vmem:[%s1970 + $0x140] sm:$0xff]
        %v1999 = vld [vmem:[%s1970 + $0x150] sm:$0xff]
        %v2000 = vld [vmem:[%s1970 + $0x158] sm:$0xff]
        %v2001 = vld [vmem:[%s1970 + $0x168] sm:$0xff]
        %v2002 = vld [vmem:[%s1970 + $0x170] sm:$0xff]
        %s2003 = scalar_lea.vmem %s4, 8
        %v2004 = vld [vmem:[%s2003] sm:$0x1]
        %v2005 = vld [vmem:[#allocation3] sm:$0xff]
        %v2006 = vld [vmem:[#allocation3 + $0x8] sm:$0xff]
        %v2007 = vld [vmem:[#allocation3 + $0x10] sm:$0xff]
        %v2008 = vld [vmem:[#allocation3 + $0x18] sm:$0xff]
        %v2009 = vld [vmem:[#allocation3 + $0x20] sm:$0xff]
        %v2010 = vld [vmem:[#allocation3 + $0x28] sm:$0xff]
        %v2011 = vld [vmem:[#allocation3 + $0x30] sm:$0xff]
        %v2012 = vld [vmem:[#allocation3 + $0x38] sm:$0xff]
        %v2013 = vld [vmem:[#allocation3 + $0x40] sm:$0xff]
        %v2014 = vld [vmem:[#allocation3 + $0x48] sm:$0xff]
        %v2015 = vld [vmem:[#allocation3 + $0x50] sm:$0xff]
        %v2016 = vld [vmem:[#allocation3 + $0x58] sm:$0xff]
        %v2017 = vld [vmem:[#allocation3 + $0x60] sm:$0xff]
        %v2018 = vld [vmem:[#allocation3 + $0x68] sm:$0xff]
        %v2019 = vld [vmem:[#allocation3 + $0x70] sm:$0xff]
        %v2020 = vld [vmem:[#allocation3 + $0x78] sm:$0xff]
        %v2021 = vld [vmem:[#allocation3 + $0x80] sm:$0xff]
        %v2022 = vld [vmem:[#allocation3 + $0x88] sm:$0xff]
        %v2023 = vld [vmem:[#allocation3 + $0x90] sm:$0xff]
        %v2024 = vld [vmem:[#allocation3 + $0x98] sm:$0xff]
        %v2025 = vld [vmem:[#allocation3 + $0xa0] sm:$0xff]
        %v2026 = vld [vmem:[#allocation3 + $0xa8] sm:$0xff]
        %v2027 = vld [vmem:[#allocation3 + $0xb0] sm:$0xff]
        %v2028 = vld [vmem:[#allocation3 + $0xb8] sm:$0xff]
        %v2029 = vld [vmem:[#allocation3 + $0xc0] sm:$0xff]
        %v2030 = vld [vmem:[#allocation3 + $0xc8] sm:$0xff]
        %v2031 = vld [vmem:[#allocation3 + $0xd0] sm:$0xff]
        %v2032 = vld [vmem:[#allocation3 + $0xd8] sm:$0xff]
        %v2033 = vld [vmem:[#allocation3 + $0xe0] sm:$0xff]
        %v2034 = vld [vmem:[#allocation3 + $0xe8] sm:$0xff]
        %v2035 = vld [vmem:[#allocation3 + $0xf0] sm:$0xff]
        %v2036 = vld [vmem:[#allocation3 + $0xf8] sm:$0xff]
        %v2037 = vlaneseq
        %v2038 = vshrl.u32 %v2037, 7
        %v2039 = vsub.s32 0, %v2038
        %v2040 = vrot.slane %v2004, %v2039
        %v2041 = vmul.f32 %v1971, %v2040
        %v2042 = vmul.f32 %v1972, %v2040
        %v2043 = vmul.f32 %v1973, %v2040
        %v2044 = vmul.f32 %v1974, %v2040
        %v2045 = vmul.f32 %v1975, %v2040
        %v2046 = vmul.f32 %v1976, %v2040
        %v2047 = vmul.f32 %v1977, %v2040
        %v2048 = vmul.f32 %v1978, %v2040
        %v2049 = vmul.f32 %v1979, %v2040
        %v2050 = vmul.f32 %v1980, %v2040
        %v2051 = vmul.f32 %v1981, %v2040
        %v2052 = vmul.f32 %v1982, %v2040
        %v2053 = vmul.f32 %v1983, %v2040
        %v2054 = vmul.f32 %v1984, %v2040
        %v2055 = vmul.f32 %v1985, %v2040
        %v2056 = vmul.f32 %v1986, %v2040
        %v2057 = vmul.f32 %v1987, %v2040
        %v2058 = vmul.f32 %v1988, %v2040
        %v2059 = vmul.f32 %v1989, %v2040
        %v2060 = vmul.f32 %v1990, %v2040
        %v2061 = vmul.f32 %v1991, %v2040
        %v2062 = vmul.f32 %v1992, %v2040
        %v2063 = vmul.f32 %v1993, %v2040
        %v2064 = vmul.f32 %v1994, %v2040
        %v2065 = vmul.f32 %v1995, %v2040
        %v2066 = vmul.f32 %v1996, %v2040
        %v2067 = vmul.f32 %v1997, %v2040
        %v2068 = vmul.f32 %v1998, %v2040
        %v2069 = vmul.f32 %v1999, %v2040
        %v2070 = vmul.f32 %v2000, %v2040
        %v2071 = vmul.f32 %v2001, %v2040
        %v2072 = vmul.f32 %v2002, %v2040
        %v2073 = vadd.f32 %v2005, %v2041
        %v2074 = vadd.f32 %v2006, %v2042
        %v2075 = vadd.f32 %v2007, %v2043
        %v2076 = vadd.f32 %v2008, %v2044
        %v2077 = vadd.f32 %v2009, %v2045
        %v2078 = vadd.f32 %v2010, %v2046
        %v2079 = vadd.f32 %v2011, %v2047
        %v2080 = vadd.f32 %v2012, %v2048
        %v2081 = vadd.f32 %v2013, %v2049
        %v2082 = vadd.f32 %v2014, %v2050
        %v2083 = vadd.f32 %v2015, %v2051
        %v2084 = vadd.f32 %v2016, %v2052
        %v2085 = vadd.f32 %v2017, %v2053
        %v2086 = vadd.f32 %v2018, %v2054
        %v2087 = vadd.f32 %v2019, %v2055
        %v2088 = vadd.f32 %v2020, %v2056
        %v2089 = vadd.f32 %v2021, %v2057
        %v2090 = vadd.f32 %v2022, %v2058
        %v2091 = vadd.f32 %v2023, %v2059
        %v2092 = vadd.f32 %v2024, %v2060
        %v2093 = vadd.f32 %v2025, %v2061
        %v2094 = vadd.f32 %v2026, %v2062
        %v2095 = vadd.f32 %v2027, %v2063
        %v2096 = vadd.f32 %v2028, %v2064
        %v2097 = vadd.f32 %v2029, %v2065
        %v2098 = vadd.f32 %v2030, %v2066
        %v2099 = vadd.f32 %v2031, %v2067
        %v2100 = vadd.f32 %v2032, %v2068
        %v2101 = vadd.f32 %v2033, %v2069
        %v2102 = vadd.f32 %v2034, %v2070
        %v2103 = vadd.f32 %v2035, %v2071
        %v2104 = vadd.f32 %v2036, %v2072
        %2105 = vst.msk [vmem:[#allocation3] sm:$0xff] %vm502, %v2073
        %2106 = vst.msk [vmem:[#allocation3 + $0x8] sm:$0xff] %vm502, %v2074
        %2107 = vst.msk [vmem:[#allocation3 + $0x10] sm:$0xff] %vm502, %v2075
        %2108 = vst.msk [vmem:[#allocation3 + $0x18] sm:$0xff] %vm502, %v2076
        %2109 = vst.msk [vmem:[#allocation3 + $0x20] sm:$0xff] %vm502, %v2077
        %2110 = vst.msk [vmem:[#allocation3 + $0x28] sm:$0xff] %vm502, %v2078
        %2111 = vst.msk [vmem:[#allocation3 + $0x30] sm:$0xff] %vm502, %v2079
        %2112 = vst.msk [vmem:[#allocation3 + $0x38] sm:$0xff] %vm502, %v2080
        %2113 = vst.msk [vmem:[#allocation3 + $0x40] sm:$0xff] %vm502, %v2081
        %2114 = vst.msk [vmem:[#allocation3 + $0x48] sm:$0xff] %vm502, %v2082
        %2115 = vst.msk [vmem:[#allocation3 + $0x50] sm:$0xff] %vm502, %v2083
        %2116 = vst.msk [vmem:[#allocation3 + $0x58] sm:$0xff] %vm502, %v2084
        %2117 = vst.msk [vmem:[#allocation3 + $0x60] sm:$0xff] %vm502, %v2085
        %2118 = vst.msk [vmem:[#allocation3 + $0x68] sm:$0xff] %vm502, %v2086
        %2119 = vst.msk [vmem:[#allocation3 + $0x70] sm:$0xff] %vm502, %v2087
        %2120 = vst.msk [vmem:[#allocation3 + $0x78] sm:$0xff] %vm502, %v2088
        %2121 = vst.msk [vmem:[#allocation3 + $0x80] sm:$0xff] %vm502, %v2089
        %2122 = vst.msk [vmem:[#allocation3 + $0x88] sm:$0xff] %vm502, %v2090
        %2123 = vst.msk [vmem:[#allocation3 + $0x90] sm:$0xff] %vm502, %v2091
        %2124 = vst.msk [vmem:[#allocation3 + $0x98] sm:$0xff] %vm502, %v2092
        %2125 = vst.msk [vmem:[#allocation3 + $0xa0] sm:$0xff] %vm502, %v2093
        %2126 = vst.msk [vmem:[#allocation3 + $0xa8] sm:$0xff] %vm502, %v2094
        %2127 = vst.msk [vmem:[#allocation3 + $0xb0] sm:$0xff] %vm502, %v2095
        %2128 = vst.msk [vmem:[#allocation3 + $0xb8] sm:$0xff] %vm502, %v2096
        %2129 = vst.msk [vmem:[#allocation3 + $0xc0] sm:$0xff] %vm502, %v2097
        %2130 = vst.msk [vmem:[#allocation3 + $0xc8] sm:$0xff] %vm502, %v2098
        %2131 = vst.msk [vmem:[#allocation3 + $0xd0] sm:$0xff] %vm502, %v2099
        %2132 = vst.msk [vmem:[#allocation3 + $0xd8] sm:$0xff] %vm502, %v2100
        %2133 = vst.msk [vmem:[#allocation3 + $0xe0] sm:$0xff] %vm502, %v2101
        %2134 = vst.msk [vmem:[#allocation3 + $0xe8] sm:$0xff] %vm502, %v2102
        %2135 = vst.msk [vmem:[#allocation3 + $0xf0] sm:$0xff] %vm502, %v2103
        %2136 = vst.msk [vmem:[#allocation3 + $0xf8] sm:$0xff] %vm502, %v2104
        %v2137 = vld [vmem:[%s1970 + $0x1] sm:$0xff]
        %v2138 = vld [vmem:[%s1970 + $0x9] sm:$0xff]
        %v2139 = vld [vmem:[%s1970 + $0x19] sm:$0xff]
        %v2140 = vld [vmem:[%s1970 + $0x21] sm:$0xff]
        %v2141 = vld [vmem:[%s1970 + $0x31] sm:$0xff]
        %v2142 = vld [vmem:[%s1970 + $0x39] sm:$0xff]
        %v2143 = vld [vmem:[%s1970 + $0x49] sm:$0xff]
        %v2144 = vld [vmem:[%s1970 + $0x51] sm:$0xff]
        %v2145 = vld [vmem:[%s1970 + $0x61] sm:$0xff]
        %v2146 = vld [vmem:[%s1970 + $0x69] sm:$0xff]
        %v2147 = vld [vmem:[%s1970 + $0x79] sm:$0xff]
        %v2148 = vld [vmem:[%s1970 + $0x81] sm:$0xff]
        %v2149 = vld [vmem:[%s1970 + $0x91] sm:$0xff]
        %v2150 = vld [vmem:[%s1970 + $0x99] sm:$0xff]
        %v2151 = vld [vmem:[%s1970 + $0xa9] sm:$0xff]
        %v2152 = vld [vmem:[%s1970 + $0xb1] sm:$0xff]
        %v2153 = vld [vmem:[%s1970 + $0xc1] sm:$0xff]
        %v2154 = vld [vmem:[%s1970 + $0xc9] sm:$0xff]
        %v2155 = vld [vmem:[%s1970 + $0xd9] sm:$0xff]
        %v2156 = vld [vmem:[%s1970 + $0xe1] sm:$0xff]
        %v2157 = vld [vmem:[%s1970 + $0xf1] sm:$0xff]
        %v2158 = vld [vmem:[%s1970 + $0xf9] sm:$0xff]
        %v2159 = vld [vmem:[%s1970 + $0x109] sm:$0xff]
        %v2160 = vld [vmem:[%s1970 + $0x111] sm:$0xff]
        %v2161 = vld [vmem:[%s1970 + $0x121] sm:$0xff]
        %v2162 = vld [vmem:[%s1970 + $0x129] sm:$0xff]
        %v2163 = vld [vmem:[%s1970 + $0x139] sm:$0xff]
        %v2164 = vld [vmem:[%s1970 + $0x141] sm:$0xff]
        %v2165 = vld [vmem:[%s1970 + $0x151] sm:$0xff]
        %v2166 = vld [vmem:[%s1970 + $0x159] sm:$0xff]
        %v2167 = vld [vmem:[%s1970 + $0x169] sm:$0xff]
        %v2168 = vld [vmem:[%s1970 + $0x171] sm:$0xff]
        %v2169 = vld [vmem:[%s2003 + $0x1] sm:$0x1]
        %v2170 = vld [vmem:[#allocation3] sm:$0xff]
        %v2171 = vld [vmem:[#allocation3 + $0x8] sm:$0xff]
        %v2172 = vld [vmem:[#allocation3 + $0x10] sm:$0xff]
        %v2173 = vld [vmem:[#allocation3 + $0x18] sm:$0xff]
        %v2174 = vld [vmem:[#allocation3 + $0x20] sm:$0xff]
        %v2175 = vld [vmem:[#allocation3 + $0x28] sm:$0xff]
        %v2176 = vld [vmem:[#allocation3 + $0x30] sm:$0xff]
        %v2177 = vld [vmem:[#allocation3 + $0x38] sm:$0xff]
        %v2178 = vld [vmem:[#allocation3 + $0x40] sm:$0xff]
        %v2179 = vld [vmem:[#allocation3 + $0x48] sm:$0xff]
        %v2180 = vld [vmem:[#allocation3 + $0x50] sm:$0xff]
        %v2181 = vld [vmem:[#allocation3 + $0x58] sm:$0xff]
        %v2182 = vld [vmem:[#allocation3 + $0x60] sm:$0xff]
        %v2183 = vld [vmem:[#allocation3 + $0x68] sm:$0xff]
        %v2184 = vld [vmem:[#allocation3 + $0x70] sm:$0xff]
        %v2185 = vld [vmem:[#allocation3 + $0x78] sm:$0xff]
        %v2186 = vld [vmem:[#allocation3 + $0x80] sm:$0xff]
        %v2187 = vld [vmem:[#allocation3 + $0x88] sm:$0xff]
        %v2188 = vld [vmem:[#allocation3 + $0x90] sm:$0xff]
        %v2189 = vld [vmem:[#allocation3 + $0x98] sm:$0xff]
        %v2190 = vld [vmem:[#allocation3 + $0xa0] sm:$0xff]
        %v2191 = vld [vmem:[#allocation3 + $0xa8] sm:$0xff]
        %v2192 = vld [vmem:[#allocation3 + $0xb0] sm:$0xff]
        %v2193 = vld [vmem:[#allocation3 + $0xb8] sm:$0xff]
        %v2194 = vld [vmem:[#allocation3 + $0xc0] sm:$0xff]
        %v2195 = vld [vmem:[#allocation3 + $0xc8] sm:$0xff]
        %v2196 = vld [vmem:[#allocation3 + $0xd0] sm:$0xff]
        %v2197 = vld [vmem:[#allocation3 + $0xd8] sm:$0xff]
        %v2198 = vld [vmem:[#allocation3 + $0xe0] sm:$0xff]
        %v2199 = vld [vmem:[#allocation3 + $0xe8] sm:$0xff]
        %v2200 = vld [vmem:[#allocation3 + $0xf0] sm:$0xff]
        %v2201 = vld [vmem:[#allocation3 + $0xf8] sm:$0xff]
        %v2202 = vlaneseq
        %v2203 = vshrl.u32 %v2202, 7
        %v2204 = vsub.s32 0, %v2203
        %v2205 = vrot.slane %v2169, %v2204
        %v2206 = vmul.f32 %v2137, %v2205
        %v2207 = vmul.f32 %v2138, %v2205
        %v2208 = vmul.f32 %v2139, %v2205
        %v2209 = vmul.f32 %v2140, %v2205
        %v2210 = vmul.f32 %v2141, %v2205
        %v2211 = vmul.f32 %v2142, %v2205
        %v2212 = vmul.f32 %v2143, %v2205
        %v2213 = vmul.f32 %v2144, %v2205
        %v2214 = vmul.f32 %v2145, %v2205
        %v2215 = vmul.f32 %v2146, %v2205
        %v2216 = vmul.f32 %v2147, %v2205
        %v2217 = vmul.f32 %v2148, %v2205
        %v2218 = vmul.f32 %v2149, %v2205
        %v2219 = vmul.f32 %v2150, %v2205
        %v2220 = vmul.f32 %v2151, %v2205
        %v2221 = vmul.f32 %v2152, %v2205
        %v2222 = vmul.f32 %v2153, %v2205
        %v2223 = vmul.f32 %v2154, %v2205
        %v2224 = vmul.f32 %v2155, %v2205
        %v2225 = vmul.f32 %v2156, %v2205
        %v2226 = vmul.f32 %v2157, %v2205
        %v2227 = vmul.f32 %v2158, %v2205
        %v2228 = vmul.f32 %v2159, %v2205
        %v2229 = vmul.f32 %v2160, %v2205
        %v2230 = vmul.f32 %v2161, %v2205
        %v2231 = vmul.f32 %v2162, %v2205
        %v2232 = vmul.f32 %v2163, %v2205
        %v2233 = vmul.f32 %v2164, %v2205
        %v2234 = vmul.f32 %v2165, %v2205
        %v2235 = vmul.f32 %v2166, %v2205
        %v2236 = vmul.f32 %v2167, %v2205
        %v2237 = vmul.f32 %v2168, %v2205
        %v2238 = vadd.f32 %v2170, %v2206
        %v2239 = vadd.f32 %v2171, %v2207
        %v2240 = vadd.f32 %v2172, %v2208
        %v2241 = vadd.f32 %v2173, %v2209
        %v2242 = vadd.f32 %v2174, %v2210
        %v2243 = vadd.f32 %v2175, %v2211
        %v2244 = vadd.f32 %v2176, %v2212
        %v2245 = vadd.f32 %v2177, %v2213
        %v2246 = vadd.f32 %v2178, %v2214
        %v2247 = vadd.f32 %v2179, %v2215
        %v2248 = vadd.f32 %v2180, %v2216
        %v2249 = vadd.f32 %v2181, %v2217
        %v2250 = vadd.f32 %v2182, %v2218
        %v2251 = vadd.f32 %v2183, %v2219
        %v2252 = vadd.f32 %v2184, %v2220
        %v2253 = vadd.f32 %v2185, %v2221
        %v2254 = vadd.f32 %v2186, %v2222
        %v2255 = vadd.f32 %v2187, %v2223
        %v2256 = vadd.f32 %v2188, %v2224
        %v2257 = vadd.f32 %v2189, %v2225
        %v2258 = vadd.f32 %v2190, %v2226
        %v2259 = vadd.f32 %v2191, %v2227
        %v2260 = vadd.f32 %v2192, %v2228
        %v2261 = vadd.f32 %v2193, %v2229
        %v2262 = vadd.f32 %v2194, %v2230
        %v2263 = vadd.f32 %v2195, %v2231
        %v2264 = vadd.f32 %v2196, %v2232
        %v2265 = vadd.f32 %v2197, %v2233
        %v2266 = vadd.f32 %v2198, %v2234
        %v2267 = vadd.f32 %v2199, %v2235
        %v2268 = vadd.f32 %v2200, %v2236
        %v2269 = vadd.f32 %v2201, %v2237
        %2270 = vst.msk [vmem:[#allocation3] sm:$0xff] %vm502, %v2238
        %2271 = vst.msk [vmem:[#allocation3 + $0x8] sm:$0xff] %vm502, %v2239
        %2272 = vst.msk [vmem:[#allocation3 + $0x10] sm:$0xff] %vm502, %v2240
        %2273 = vst.msk [vmem:[#allocation3 + $0x18] sm:$0xff] %vm502, %v2241
        %2274 = vst.msk [vmem:[#allocation3 + $0x20] sm:$0xff] %vm502, %v2242
        %2275 = vst.msk [vmem:[#allocation3 + $0x28] sm:$0xff] %vm502, %v2243
        %2276 = vst.msk [vmem:[#allocation3 + $0x30] sm:$0xff] %vm502, %v2244
        %2277 = vst.msk [vmem:[#allocation3 + $0x38] sm:$0xff] %vm502, %v2245
        %2278 = vst.msk [vmem:[#allocation3 + $0x40] sm:$0xff] %vm502, %v2246
        %2279 = vst.msk [vmem:[#allocation3 + $0x48] sm:$0xff] %vm502, %v2247
        %2280 = vst.msk [vmem:[#allocation3 + $0x50] sm:$0xff] %vm502, %v2248
        %2281 = vst.msk [vmem:[#allocation3 + $0x58] sm:$0xff] %vm502, %v2249
        %2282 = vst.msk [vmem:[#allocation3 + $0x60] sm:$0xff] %vm502, %v2250
        %2283 = vst.msk [vmem:[#allocation3 + $0x68] sm:$0xff] %vm502, %v2251
        %2284 = vst.msk [vmem:[#allocation3 + $0x70] sm:$0xff] %vm502, %v2252
        %2285 = vst.msk [vmem:[#allocation3 + $0x78] sm:$0xff] %vm502, %v2253
        %2286 = vst.msk [vmem:[#allocation3 + $0x80] sm:$0xff] %vm502, %v2254
        %2287 = vst.msk [vmem:[#allocation3 + $0x88] sm:$0xff] %vm502, %v2255
        %2288 = vst.msk [vmem:[#allocation3 + $0x90] sm:$0xff] %vm502, %v2256
        %2289 = vst.msk [vmem:[#allocation3 + $0x98] sm:$0xff] %vm502, %v2257
        %2290 = vst.msk [vmem:[#allocation3 + $0xa0] sm:$0xff] %vm502, %v2258
        %2291 = vst.msk [vmem:[#allocation3 + $0xa8] sm:$0xff] %vm502, %v2259
        %2292 = vst.msk [vmem:[#allocation3 + $0xb0] sm:$0xff] %vm502, %v2260
        %2293 = vst.msk [vmem:[#allocation3 + $0xb8] sm:$0xff] %vm502, %v2261
        %2294 = vst.msk [vmem:[#allocation3 + $0xc0] sm:$0xff] %vm502, %v2262
        %2295 = vst.msk [vmem:[#allocation3 + $0xc8] sm:$0xff] %vm502, %v2263
        %2296 = vst.msk [vmem:[#allocation3 + $0xd0] sm:$0xff] %vm502, %v2264
        %2297 = vst.msk [vmem:[#allocation3 + $0xd8] sm:$0xff] %vm502, %v2265
        %2298 = vst.msk [vmem:[#allocation3 + $0xe0] sm:$0xff] %vm502, %v2266
        %2299 = vst.msk [vmem:[#allocation3 + $0xe8] sm:$0xff] %vm502, %v2267
        %2300 = vst.msk [vmem:[#allocation3 + $0xf0] sm:$0xff] %vm502, %v2268
        %2301 = vst.msk [vmem:[#allocation3 + $0xf8] sm:$0xff] %vm502, %v2269
        %v2302 = vld [vmem:[%s1970 + $0x2] sm:$0xff]
        %v2303 = vld [vmem:[%s1970 + $0xa] sm:$0xff]
        %v2304 = vld [vmem:[%s1970 + $0x1a] sm:$0xff]
        %v2305 = vld [vmem:[%s1970 + $0x22] sm:$0xff]
        %v2306 = vld [vmem:[%s1970 + $0x32] sm:$0xff]
        %v2307 = vld [vmem:[%s1970 + $0x3a] sm:$0xff]
        %v2308 = vld [vmem:[%s1970 + $0x4a] sm:$0xff]
        %v2309 = vld [vmem:[%s1970 + $0x52] sm:$0xff]
        %v2310 = vld [vmem:[%s1970 + $0x62] sm:$0xff]
        %v2311 = vld [vmem:[%s1970 + $0x6a] sm:$0xff]
        %v2312 = vld [vmem:[%s1970 + $0x7a] sm:$0xff]
        %v2313 = vld [vmem:[%s1970 + $0x82] sm:$0xff]
        %v2314 = vld [vmem:[%s1970 + $0x92] sm:$0xff]
        %v2315 = vld [vmem:[%s1970 + $0x9a] sm:$0xff]
        %v2316 = vld [vmem:[%s1970 + $0xaa] sm:$0xff]
        %v2317 = vld [vmem:[%s1970 + $0xb2] sm:$0xff]
        %v2318 = vld [vmem:[%s1970 + $0xc2] sm:$0xff]
        %v2319 = vld [vmem:[%s1970 + $0xca] sm:$0xff]
        %v2320 = vld [vmem:[%s1970 + $0xda] sm:$0xff]
        %v2321 = vld [vmem:[%s1970 + $0xe2] sm:$0xff]
        %v2322 = vld [vmem:[%s1970 + $0xf2] sm:$0xff]
        %v2323 = vld [vmem:[%s1970 + $0xfa] sm:$0xff]
        %v2324 = vld [vmem:[%s1970 + $0x10a] sm:$0xff]
        %v2325 = vld [vmem:[%s1970 + $0x112] sm:$0xff]
        %v2326 = vld [vmem:[%s1970 + $0x122] sm:$0xff]
        %v2327 = vld [vmem:[%s1970 + $0x12a] sm:$0xff]
        %v2328 = vld [vmem:[%s1970 + $0x13a] sm:$0xff]
        %v2329 = vld [vmem:[%s1970 + $0x142] sm:$0xff]
        %v2330 = vld [vmem:[%s1970 + $0x152] sm:$0xff]
        %v2331 = vld [vmem:[%s1970 + $0x15a] sm:$0xff]
        %v2332 = vld [vmem:[%s1970 + $0x16a] sm:$0xff]
        %v2333 = vld [vmem:[%s1970 + $0x172] sm:$0xff]
        %v2334 = vld [vmem:[%s2003 + $0x2] sm:$0x1]
        %v2335 = vld [vmem:[#allocation3] sm:$0xff]
        %v2336 = vld [vmem:[#allocation3 + $0x8] sm:$0xff]
        %v2337 = vld [vmem:[#allocation3 + $0x10] sm:$0xff]
        %v2338 = vld [vmem:[#allocation3 + $0x18] sm:$0xff]
        %v2339 = vld [vmem:[#allocation3 + $0x20] sm:$0xff]
        %v2340 = vld [vmem:[#allocation3 + $0x28] sm:$0xff]
        %v2341 = vld [vmem:[#allocation3 + $0x30] sm:$0xff]
        %v2342 = vld [vmem:[#allocation3 + $0x38] sm:$0xff]
        %v2343 = vld [vmem:[#allocation3 + $0x40] sm:$0xff]
        %v2344 = vld [vmem:[#allocation3 + $0x48] sm:$0xff]
        %v2345 = vld [vmem:[#allocation3 + $0x50] sm:$0xff]
        %v2346 = vld [vmem:[#allocation3 + $0x58] sm:$0xff]
        %v2347 = vld [vmem:[#allocation3 + $0x60] sm:$0xff]
        %v2348 = vld [vmem:[#allocation3 + $0x68] sm:$0xff]
        %v2349 = vld [vmem:[#allocation3 + $0x70] sm:$0xff]
        %v2350 = vld [vmem:[#allocation3 + $0x78] sm:$0xff]
        %v2351 = vld [vmem:[#allocation3 + $0x80] sm:$0xff]
        %v2352 = vld [vmem:[#allocation3 + $0x88] sm:$0xff]
        %v2353 = vld [vmem:[#allocation3 + $0x90] sm:$0xff]
        %v2354 = vld [vmem:[#allocation3 + $0x98] sm:$0xff]
        %v2355 = vld [vmem:[#allocation3 + $0xa0] sm:$0xff]
        %v2356 = vld [vmem:[#allocation3 + $0xa8] sm:$0xff]
        %v2357 = vld [vmem:[#allocation3 + $0xb0] sm:$0xff]
        %v2358 = vld [vmem:[#allocation3 + $0xb8] sm:$0xff]
        %v2359 = vld [vmem:[#allocation3 + $0xc0] sm:$0xff]
        %v2360 = vld [vmem:[#allocation3 + $0xc8] sm:$0xff]
        %v2361 = vld [vmem:[#allocation3 + $0xd0] sm:$0xff]
        %v2362 = vld [vmem:[#allocation3 + $0xd8] sm:$0xff]
        %v2363 = vld [vmem:[#allocation3 + $0xe0] sm:$0xff]
        %v2364 = vld [vmem:[#allocation3 + $0xe8] sm:$0xff]
        %v2365 = vld [vmem:[#allocation3 + $0xf0] sm:$0xff]
        %v2366 = vld [vmem:[#allocation3 + $0xf8] sm:$0xff]
        %v2367 = vlaneseq
        %v2368 = vshrl.u32 %v2367, 7
        %v2369 = vsub.s32 0, %v2368
        %v2370 = vrot.slane %v2334, %v2369
        %v2371 = vmul.f32 %v2302, %v2370
        %v2372 = vmul.f32 %v2303, %v2370
        %v2373 = vmul.f32 %v2304, %v2370
        %v2374 = vmul.f32 %v2305, %v2370
        %v2375 = vmul.f32 %v2306, %v2370
        %v2376 = vmul.f32 %v2307, %v2370
        %v2377 = vmul.f32 %v2308, %v2370
        %v2378 = vmul.f32 %v2309, %v2370
        %v2379 = vmul.f32 %v2310, %v2370
        %v2380 = vmul.f32 %v2311, %v2370
        %v2381 = vmul.f32 %v2312, %v2370
        %v2382 = vmul.f32 %v2313, %v2370
        %v2383 = vmul.f32 %v2314, %v2370
        %v2384 = vmul.f32 %v2315, %v2370
        %v2385 = vmul.f32 %v2316, %v2370
        %v2386 = vmul.f32 %v2317, %v2370
        %v2387 = vmul.f32 %v2318, %v2370
        %v2388 = vmul.f32 %v2319, %v2370
        %v2389 = vmul.f32 %v2320, %v2370
        %v2390 = vmul.f32 %v2321, %v2370
        %v2391 = vmul.f32 %v2322, %v2370
        %v2392 = vmul.f32 %v2323, %v2370
        %v2393 = vmul.f32 %v2324, %v2370
        %v2394 = vmul.f32 %v2325, %v2370
        %v2395 = vmul.f32 %v2326, %v2370
        %v2396 = vmul.f32 %v2327, %v2370
        %v2397 = vmul.f32 %v2328, %v2370
        %v2398 = vmul.f32 %v2329, %v2370
        %v2399 = vmul.f32 %v2330, %v2370
        %v2400 = vmul.f32 %v2331, %v2370
        %v2401 = vmul.f32 %v2332, %v2370
        %v2402 = vmul.f32 %v2333, %v2370
        %v2403 = vadd.f32 %v2335, %v2371
        %v2404 = vadd.f32 %v2336, %v2372
        %v2405 = vadd.f32 %v2337, %v2373
        %v2406 = vadd.f32 %v2338, %v2374
        %v2407 = vadd.f32 %v2339, %v2375
        %v2408 = vadd.f32 %v2340, %v2376
        %v2409 = vadd.f32 %v2341, %v2377
        %v2410 = vadd.f32 %v2342, %v2378
        %v2411 = vadd.f32 %v2343, %v2379
        %v2412 = vadd.f32 %v2344, %v2380
        %v2413 = vadd.f32 %v2345, %v2381
        %v2414 = vadd.f32 %v2346, %v2382
        %v2415 = vadd.f32 %v2347, %v2383
        %v2416 = vadd.f32 %v2348, %v2384
        %v2417 = vadd.f32 %v2349, %v2385
        %v2418 = vadd.f32 %v2350, %v2386
        %v2419 = vadd.f32 %v2351, %v2387
        %v2420 = vadd.f32 %v2352, %v2388
        %v2421 = vadd.f32 %v2353, %v2389
        %v2422 = vadd.f32 %v2354, %v2390
        %v2423 = vadd.f32 %v2355, %v2391
        %v2424 = vadd.f32 %v2356, %v2392
        %v2425 = vadd.f32 %v2357, %v2393
        %v2426 = vadd.f32 %v2358, %v2394
        %v2427 = vadd.f32 %v2359, %v2395
        %v2428 = vadd.f32 %v2360, %v2396
        %v2429 = vadd.f32 %v2361, %v2397
        %v2430 = vadd.f32 %v2362, %v2398
        %v2431 = vadd.f32 %v2363, %v2399
        %v2432 = vadd.f32 %v2364, %v2400
        %v2433 = vadd.f32 %v2365, %v2401
        %v2434 = vadd.f32 %v2366, %v2402
        %2435 = vst.msk [vmem:[#allocation3] sm:$0xff] %vm502, %v2403
        %2436 = vst.msk [vmem:[#allocation3 + $0x8] sm:$0xff] %vm502, %v2404
        %2437 = vst.msk [vmem:[#allocation3 + $0x10] sm:$0xff] %vm502, %v2405
        %2438 = vst.msk [vmem:[#allocation3 + $0x18] sm:$0xff] %vm502, %v2406
        %2439 = vst.msk [vmem:[#allocation3 + $0x20] sm:$0xff] %vm502, %v2407
        %2440 = vst.msk [vmem:[#allocation3 + $0x28] sm:$0xff] %vm502, %v2408
        %2441 = vst.msk [vmem:[#allocation3 + $0x30] sm:$0xff] %vm502, %v2409
        %2442 = vst.msk [vmem:[#allocation3 + $0x38] sm:$0xff] %vm502, %v2410
        %2443 = vst.msk [vmem:[#allocation3 + $0x40] sm:$0xff] %vm502, %v2411
        %2444 = vst.msk [vmem:[#allocation3 + $0x48] sm:$0xff] %vm502, %v2412
        %2445 = vst.msk [vmem:[#allocation3 + $0x50] sm:$0xff] %vm502, %v2413
        %2446 = vst.msk [vmem:[#allocation3 + $0x58] sm:$0xff] %vm502, %v2414
        %2447 = vst.msk [vmem:[#allocation3 + $0x60] sm:$0xff] %vm502, %v2415
        %2448 = vst.msk [vmem:[#allocation3 + $0x68] sm:$0xff] %vm502, %v2416
        %2449 = vst.msk [vmem:[#allocation3 + $0x70] sm:$0xff] %vm502, %v2417
        %2450 = vst.msk [vmem:[#allocation3 + $0x78] sm:$0xff] %vm502, %v2418
        %2451 = vst.msk [vmem:[#allocation3 + $0x80] sm:$0xff] %vm502, %v2419
        %2452 = vst.msk [vmem:[#allocation3 + $0x88] sm:$0xff] %vm502, %v2420
        %2453 = vst.msk [vmem:[#allocation3 + $0x90] sm:$0xff] %vm502, %v2421
        %2454 = vst.msk [vmem:[#allocation3 + $0x98] sm:$0xff] %vm502, %v2422
        %2455 = vst.msk [vmem:[#allocation3 + $0xa0] sm:$0xff] %vm502, %v2423
        %2456 = vst.msk [vmem:[#allocation3 + $0xa8] sm:$0xff] %vm502, %v2424
        %2457 = vst.msk [vmem:[#allocation3 + $0xb0] sm:$0xff] %vm502, %v2425
        %2458 = vst.msk [vmem:[#allocation3 + $0xb8] sm:$0xff] %vm502, %v2426
        %2459 = vst.msk [vmem:[#allocation3 + $0xc0] sm:$0xff] %vm502, %v2427
        %2460 = vst.msk [vmem:[#allocation3 + $0xc8] sm:$0xff] %vm502, %v2428
        %2461 = vst.msk [vmem:[#allocation3 + $0xd0] sm:$0xff] %vm502, %v2429
        %2462 = vst.msk [vmem:[#allocation3 + $0xd8] sm:$0xff] %vm502, %v2430
        %2463 = vst.msk [vmem:[#allocation3 + $0xe0] sm:$0xff] %vm502, %v2431
        %2464 = vst.msk [vmem:[#allocation3 + $0xe8] sm:$0xff] %vm502, %v2432
        %2465 = vst.msk [vmem:[#allocation3 + $0xf0] sm:$0xff] %vm502, %v2433
        %2466 = vst.msk [vmem:[#allocation3 + $0xf8] sm:$0xff] %vm502, %v2434
        %v2467 = vld [vmem:[#allocation3] sm:$0xff]
        %v2468 = vld [vmem:[#allocation3 + $0x8] sm:$0xff]
        %v2469 = vld [vmem:[#allocation3 + $0x10] sm:$0xff]
        %v2470 = vld [vmem:[#allocation3 + $0x18] sm:$0xff]
        %v2471 = vld [vmem:[#allocation3 + $0x20] sm:$0xff]
        %v2472 = vld [vmem:[#allocation3 + $0x28] sm:$0xff]
        %v2473 = vld [vmem:[#allocation3 + $0x30] sm:$0xff]
        %v2474 = vld [vmem:[#allocation3 + $0x38] sm:$0xff]
        %v2475 = vld [vmem:[#allocation3 + $0x40] sm:$0xff]
        %v2476 = vld [vmem:[#allocation3 + $0x48] sm:$0xff]
        %v2477 = vld [vmem:[#allocation3 + $0x50] sm:$0xff]
        %v2478 = vld [vmem:[#allocation3 + $0x58] sm:$0xff]
        %v2479 = vld [vmem:[#allocation3 + $0x60] sm:$0xff]
        %v2480 = vld [vmem:[#allocation3 + $0x68] sm:$0xff]
        %v2481 = vld [vmem:[#allocation3 + $0x70] sm:$0xff]
        %v2482 = vld [vmem:[#allocation3 + $0x78] sm:$0xff]
        %v2483 = vld [vmem:[#allocation3 + $0x80] sm:$0xff]
        %v2484 = vld [vmem:[#allocation3 + $0x88] sm:$0xff]
        %v2485 = vld [vmem:[#allocation3 + $0x90] sm:$0xff]
        %v2486 = vld [vmem:[#allocation3 + $0x98] sm:$0xff]
        %v2487 = vld [vmem:[#allocation3 + $0xa0] sm:$0xff]
        %v2488 = vld [vmem:[#allocation3 + $0xa8] sm:$0xff]
        %v2489 = vld [vmem:[#allocation3 + $0xb0] sm:$0xff]
        %v2490 = vld [vmem:[#allocation3 + $0xb8] sm:$0xff]
        %v2491 = vld [vmem:[#allocation3 + $0xc0] sm:$0xff]
        %v2492 = vld [vmem:[#allocation3 + $0xc8] sm:$0xff]
        %v2493 = vld [vmem:[#allocation3 + $0xd0] sm:$0xff]
        %v2494 = vld [vmem:[#allocation3 + $0xd8] sm:$0xff]
        %v2495 = vld [vmem:[#allocation3 + $0xe0] sm:$0xff]
        %v2496 = vld [vmem:[#allocation3 + $0xe8] sm:$0xff]
        %v2497 = vld [vmem:[#allocation3 + $0xf0] sm:$0xff]
        %v2498 = vld [vmem:[#allocation3 + $0xf8] sm:$0xff]
        %v2500 = vlaneseq
        %v2501 = vshrl.u32 %v2500, 7
        %v2502 = vsub.s32 0, %v2501
        %v2503 = vrot.slane %v486, %v2502
        %v2505 = vmul.f32 %v2467, %v2503
        %v2506 = vmul.f32 %v2468, %v2503
        %v2507 = vmul.f32 %v2469, %v2503
        %v2508 = vmul.f32 %v2470, %v2503
        %v2509 = vmul.f32 %v2471, %v2503
        %v2510 = vmul.f32 %v2472, %v2503
        %v2511 = vmul.f32 %v2473, %v2503
        %v2512 = vmul.f32 %v2474, %v2503
        %v2513 = vmul.f32 %v2475, %v2503
        %v2514 = vmul.f32 %v2476, %v2503
        %v2515 = vmul.f32 %v2477, %v2503
        %v2516 = vmul.f32 %v2478, %v2503
        %v2517 = vmul.f32 %v2479, %v2503
        %v2518 = vmul.f32 %v2480, %v2503
        %v2519 = vmul.f32 %v2481, %v2503
        %v2520 = vmul.f32 %v2482, %v2503
        %v2521 = vmul.f32 %v2483, %v2503
        %v2522 = vmul.f32 %v2484, %v2503
        %v2523 = vmul.f32 %v2485, %v2503
        %v2524 = vmul.f32 %v2486, %v2503
        %v2525 = vmul.f32 %v2487, %v2503
        %v2526 = vmul.f32 %v2488, %v2503
        %v2527 = vmul.f32 %v2489, %v2503
        %v2528 = vmul.f32 %v2490, %v2503
        %v2529 = vmul.f32 %v2491, %v2503
        %v2530 = vmul.f32 %v2492, %v2503
        %v2531 = vmul.f32 %v2493, %v2503
        %v2532 = vmul.f32 %v2494, %v2503
        %v2533 = vmul.f32 %v2495, %v2503
        %v2534 = vmul.f32 %v2496, %v2503
        %v2535 = vmul.f32 %v2497, %v2503
        %v2536 = vmul.f32 %v2498, %v2503
        %v2538 = vlaneseq
        %v2539 = vshrl.u32 %v2538, 7
        %v2540 = vsub.s32 0, %v2539
        %v2541 = vrot.slane %v487, %v2540
        %v2543 = vadd.f32 %v2505, %v2541
        %v2544 = vadd.f32 %v2506, %v2541
        %v2545 = vadd.f32 %v2507, %v2541
        %v2546 = vadd.f32 %v2508, %v2541
        %v2547 = vadd.f32 %v2509, %v2541
        %v2548 = vadd.f32 %v2510, %v2541
        %v2549 = vadd.f32 %v2511, %v2541
        %v2550 = vadd.f32 %v2512, %v2541
        %v2551 = vadd.f32 %v2513, %v2541
        %v2552 = vadd.f32 %v2514, %v2541
        %v2553 = vadd.f32 %v2515, %v2541
        %v2554 = vadd.f32 %v2516, %v2541
        %v2555 = vadd.f32 %v2517, %v2541
        %v2556 = vadd.f32 %v2518, %v2541
        %v2557 = vadd.f32 %v2519, %v2541
        %v2558 = vadd.f32 %v2520, %v2541
        %v2559 = vadd.f32 %v2521, %v2541
        %v2560 = vadd.f32 %v2522, %v2541
        %v2561 = vadd.f32 %v2523, %v2541
        %v2562 = vadd.f32 %v2524, %v2541
        %v2563 = vadd.f32 %v2525, %v2541
        %v2564 = vadd.f32 %v2526, %v2541
        %v2565 = vadd.f32 %v2527, %v2541
        %v2566 = vadd.f32 %v2528, %v2541
        %v2567 = vadd.f32 %v2529, %v2541
        %v2568 = vadd.f32 %v2530, %v2541
        %v2569 = vadd.f32 %v2531, %v2541
        %v2570 = vadd.f32 %v2532, %v2541
        %v2571 = vadd.f32 %v2533, %v2541
        %v2572 = vadd.f32 %v2534, %v2541
        %v2573 = vadd.f32 %v2535, %v2541
        %v2574 = vadd.f32 %v2536, %v2541
        %v2575 = vmax.f32 %v2543, 0.0
        %v2576 = vmax.f32 %v2544, 0.0
        %v2577 = vmax.f32 %v2545, 0.0
        %v2578 = vmax.f32 %v2546, 0.0
        %v2579 = vmax.f32 %v2547, 0.0
        %v2580 = vmax.f32 %v2548, 0.0
        %v2581 = vmax.f32 %v2549, 0.0
        %v2582 = vmax.f32 %v2550, 0.0
        %v2583 = vmax.f32 %v2551, 0.0
        %v2584 = vmax.f32 %v2552, 0.0
        %v2585 = vmax.f32 %v2553, 0.0
        %v2586 = vmax.f32 %v2554, 0.0
        %v2587 = vmax.f32 %v2555, 0.0
        %v2588 = vmax.f32 %v2556, 0.0
        %v2589 = vmax.f32 %v2557, 0.0
        %v2590 = vmax.f32 %v2558, 0.0
        %v2591 = vmax.f32 %v2559, 0.0
        %v2592 = vmax.f32 %v2560, 0.0
        %v2593 = vmax.f32 %v2561, 0.0
        %v2594 = vmax.f32 %v2562, 0.0
        %v2595 = vmax.f32 %v2563, 0.0
        %v2596 = vmax.f32 %v2564, 0.0
        %v2597 = vmax.f32 %v2565, 0.0
        %v2598 = vmax.f32 %v2566, 0.0
        %v2599 = vmax.f32 %v2567, 0.0
        %v2600 = vmax.f32 %v2568, 0.0
        %v2601 = vmax.f32 %v2569, 0.0
        %v2602 = vmax.f32 %v2570, 0.0
        %v2603 = vmax.f32 %v2571, 0.0
        %v2604 = vmax.f32 %v2572, 0.0
        %v2605 = vmax.f32 %v2573, 0.0
        %v2606 = vmax.f32 %v2574, 0.0
        %v2607 = vsel %vm502, %v2575, 0.0
        %v2608 = vsel %vm502, %v2576, 0.0
        %v2609 = vadd.f32 %v2607, %v2608
        %v2610 = vsel %vm502, %v2577, 0.0
        %v2611 = vadd.f32 %v2609, %v2610
        %v2612 = vsel %vm502, %v2578, 0.0
        %v2613 = vadd.f32 %v2611, %v2612
        %v2614 = vsel %vm502, %v2579, 0.0
        %v2615 = vadd.f32 %v2613, %v2614
        %v2616 = vsel %vm502, %v2580, 0.0
        %v2617 = vadd.f32 %v2615, %v2616
        %v2618 = vsel %vm502, %v2581, 0.0
        %v2619 = vadd.f32 %v2617, %v2618
        %v2620 = vsel %vm502, %v2582, 0.0
        %v2621 = vadd.f32 %v2619, %v2620
        %v2622 = vsel %vm502, %v2583, 0.0
        %v2623 = vadd.f32 %v2621, %v2622
        %v2624 = vsel %vm502, %v2584, 0.0
        %v2625 = vadd.f32 %v2623, %v2624
        %v2626 = vsel %vm502, %v2585, 0.0
        %v2627 = vadd.f32 %v2625, %v2626
        %v2628 = vsel %vm502, %v2586, 0.0
        %v2629 = vadd.f32 %v2627, %v2628
        %v2630 = vsel %vm502, %v2587, 0.0
        %v2631 = vadd.f32 %v2629, %v2630
        %v2632 = vsel %vm502, %v2588, 0.0
        %v2633 = vadd.f32 %v2631, %v2632
        %v2634 = vsel %vm502, %v2589, 0.0
        %v2635 = vadd.f32 %v2633, %v2634
        %v2636 = vsel %vm502, %v2590, 0.0
        %v2637 = vadd.f32 %v2635, %v2636
        %v2638 = vsel %vm502, %v2591, 0.0
        %v2639 = vadd.f32 %v2637, %v2638
        %v2640 = vsel %vm502, %v2592, 0.0
        %v2641 = vadd.f32 %v2639, %v2640
        %v2642 = vsel %vm502, %v2593, 0.0
        %v2643 = vadd.f32 %v2641, %v2642
        %v2644 = vsel %vm502, %v2594, 0.0
        %v2645 = vadd.f32 %v2643, %v2644
        %v2646 = vsel %vm502, %v2595, 0.0
        %v2647 = vadd.f32 %v2645, %v2646
        %v2648 = vsel %vm502, %v2596, 0.0
        %v2649 = vadd.f32 %v2647, %v2648
        %v2650 = vsel %vm502, %v2597, 0.0
        %v2651 = vadd.f32 %v2649, %v2650
        %v2652 = vsel %vm502, %v2598, 0.0
        %v2653 = vadd.f32 %v2651, %v2652
        %v2654 = vsel %vm502, %v2599, 0.0
        %v2655 = vadd.f32 %v2653, %v2654
        %v2656 = vsel %vm502, %v2600, 0.0
        %v2657 = vadd.f32 %v2655, %v2656
        %v2658 = vsel %vm502, %v2601, 0.0
        %v2659 = vadd.f32 %v2657, %v2658
        %v2660 = vsel %vm502, %v2602, 0.0
        %v2661 = vadd.f32 %v2659, %v2660
        %v2662 = vsel %vm502, %v2603, 0.0
        %v2663 = vadd.f32 %v2661, %v2662
        %v2664 = vsel %vm502, %v2604, 0.0
        %v2665 = vadd.f32 %v2663, %v2664
        %v2666 = vsel %vm502, %v2605, 0.0
        %v2667 = vadd.f32 %v2665, %v2666
        %v2668 = vsel %vm502, %v2606, 0.0
        %v2669 = vadd.f32 %v2667, %v2668
        %v2670 = vrot.slane %v2669, 4
        %v2671 = vadd.f32 %v2669, %v2670
        %v2672 = vrot.slane %v2671, 2
        %v2673 = vadd.f32 %v2671, %v2672
        %v2674 = vrot.slane %v2673, 1
        %v2675 = vadd.f32 %v2673, %v2674
        %v2676 = vadd.f32 %v2675, 0.0
        %v2677 = vmul.f32 %v2676, 0.00390625
        %v2678 = vld [vmem:[%s7] sm:$0xff]
        %v2679 = vld [vmem:[%s7 + $0x8] sm:$0xff]
        %v2680 = vld [vmem:[%s7 + $0x10] sm:$0xff]
        %v2681 = vld [vmem:[%s7 + $0x18] sm:$0xff]
        %v2682 = vld [vmem:[%s7 + $0x20] sm:$0xff]
        %v2683 = vld [vmem:[%s7 + $0x28] sm:$0xff]
        %v2684 = vld [vmem:[%s7 + $0x30] sm:$0xff]
        %v2685 = vld [vmem:[%s7 + $0x38] sm:$0xff]
        %v2686 = vld [vmem:[%s8] sm:$0x1]
        %v2688 = vsel %vm502, %v2677, 0
        %2690 = vmatprep.subr.mxu0 0.0
        %2691 = vmatpush1.msra.mxu0 %v2678
        %2692 = vmatprep.subr.mxu0 0.0
        %2693 = vmatpush1.msra.mxu0 %v2679
        %2694 = vmatprep.subr.mxu0 0.0
        %2695 = vmatpush1.msra.mxu0 %v2680
        %2696 = vmatprep.subr.mxu0 0.0
        %2697 = vmatpush1.msra.mxu0 %v2681
        %2698 = vmatprep.subr.mxu0 0.0
        %2699 = vmatpush1.msra.mxu0 %v2682
        %2700 = vmatprep.subr.mxu0 0.0
        %2701 = vmatpush1.msra.mxu0 %v2683
        %2702 = vmatprep.subr.mxu0 0.0
        %2703 = vmatpush1.msra.mxu0 %v2684
        %2704 = vmatprep.subr.mxu0 0.0
        %2705 = vmatpush1.msra.mxu0 %v2685
        %2706 = vmatprep.subr.mxu0 0.0
        %2707 = vmatpush1.msra.mxu0 0.0
        %2708 = vmatprep.subr.mxu0 0.0
        %2709 = vmatpush1.msra.mxu0 0.0
        %2710 = vmatprep.subr.mxu0 0.0
        %2711 = vmatpush1.msra.mxu0 0.0
        %2712 = vmatprep.subr.mxu0 0.0
        %2713 = vmatpush1.msra.mxu0 0.0
        %2714 = vmatprep.subr.mxu0 0.0
        %2715 = vmatpush1.msra.mxu0 0.0
        %2716 = vmatprep.subr.mxu0 0.0
        %2717 = vmatpush1.msra.mxu0 0.0
        %2718 = vmatprep.subr.mxu0 0.0
        %2719 = vmatpush1.msra.mxu0 0.0
        %2720 = vmatprep.subr.mxu0 0.0
        %2721 = vmatpush1.msra.mxu0 0.0
        %2722 = vmatprep.subr.mxu0 0.0
        %2723 = vmatpush1.msra.mxu0 0.0
        %2724 = vmatprep.subr.mxu0 0.0
        %2725 = vmatpush1.msra.mxu0 0.0
        %2726 = vmatprep.subr.mxu0 0.0
        %2727 = vmatpush1.msra.mxu0 0.0
        %2728 = vmatprep.subr.mxu0 0.0
        %2729 = vmatpush1.msra.mxu0 0.0
        %2730 = vmatprep.subr.mxu0 0.0
        %2731 = vmatpush1.msra.mxu0 0.0
        %2732 = vmatprep.subr.mxu0 0.0
        %2733 = vmatpush1.msra.mxu0 0.0
        %2734 = vmatprep.subr.mxu0 0.0
        %2735 = vmatpush1.msra.mxu0 0.0
        %2736 = vmatprep.subr.mxu0 0.0
        %2737 = vmatpush1.msra.mxu0 0.0
        %2738 = vmatprep.subr.mxu0 0.0
        %2739 = vmatpush1.msra.mxu0 0.0
        %2740 = vmatprep.subr.mxu0 0.0
        %2741 = vmatpush1.msra.mxu0 0.0
        %2742 = vmatprep.subr.mxu0 0.0
        %2743 = vmatpush1.msra.mxu0 0.0
        %2744 = vmatprep.subr.mxu0 0.0
        %2745 = vmatpush1.msra.mxu0 0.0
        %2746 = vmatprep.subr.mxu0 0.0
        %2747 = vmatpush1.msra.mxu0 0.0
        %2748 = vmatprep.subr.mxu0 0.0
        %2749 = vmatpush1.msra.mxu0 0.0
        %2750 = vmatprep.subr.mxu0 0.0
        %2751 = vmatpush1.msra.mxu0 0.0
        %2752 = vmatprep.subr.mxu0 0.0
        %2753 = vmatpush1.msra.mxu0 0.0
        %2754 = vmatprep.mubr.f32.mxu0 0.0
        %2755 = vmatmul.mubr.f32.gmra.mrb[0].mxu0 %v2688
        %v2756 = vpop.f32.mrb[0].mxu0
        %v2757 = vadd.f32 %v2686, %v2756
        %v2758 = vpop.f32.mrb[0].mxu0
        %2759 = vdwg.mxu0
        %v2760 = vmax.f32 %v2757, 0.0
        %v2761 = vld [vmem:[%s9] sm:$0xf]
        %v2762 = vld [vmem:[%s10] sm:$0x1]
        %vm2763 = vcmask 31744
        %v2765 = vsel %vm2763, %v2760, 0
        %vm2767 = vcmask 1043456
        %v2769 = vsel %vm2767, %v2761, 0
        %2771 = vmatprep.subr.mxu0 0.0
        %2772 = vmatpush1.msra.mxu0 %v2769
        %2773 = vmatprep.subr.mxu0 0.0
        %2774 = vmatpush1.msra.mxu0 0.0
        %2775 = vmatprep.subr.mxu0 0.0
        %2776 = vmatpush1.msra.mxu0 0.0
        %2777 = vmatprep.subr.mxu0 0.0
        %2778 = vmatpush1.msra.mxu0 0.0
        %2779 = vmatprep.subr.mxu0 0.0
        %2780 = vmatpush1.msra.mxu0 0.0
        %2781 = vmatprep.subr.mxu0 0.0
        %2782 = vmatpush1.msra.mxu0 0.0
        %2783 = vmatprep.subr.mxu0 0.0
        %2784 = vmatpush1.msra.mxu0 0.0
        %2785 = vmatprep.subr.mxu0 0.0
        %2786 = vmatpush1.msra.mxu0 0.0
        %2787 = vmatprep.subr.mxu0 0.0
        %2788 = vmatpush1.msra.mxu0 0.0
        %2789 = vmatprep.subr.mxu0 0.0
        %2790 = vmatpush1.msra.mxu0 0.0
        %2791 = vmatprep.subr.mxu0 0.0
        %2792 = vmatpush1.msra.mxu0 0.0
        %2793 = vmatprep.subr.mxu0 0.0
        %2794 = vmatpush1.msra.mxu0 0.0
        %2795 = vmatprep.subr.mxu0 0.0
        %2796 = vmatpush1.msra.mxu0 0.0
        %2797 = vmatprep.subr.mxu0 0.0
        %2798 = vmatpush1.msra.mxu0 0.0
        %2799 = vmatprep.subr.mxu0 0.0
        %2800 = vmatpush1.msra.mxu0 0.0
        %2801 = vmatprep.subr.mxu0 0.0
        %2802 = vmatpush1.msra.mxu0 0.0
        %2803 = vmatprep.subr.mxu0 0.0
        %2804 = vmatpush1.msra.mxu0 0.0
        %2805 = vmatprep.subr.mxu0 0.0
        %2806 = vmatpush1.msra.mxu0 0.0
        %2807 = vmatprep.subr.mxu0 0.0
        %2808 = vmatpush1.msra.mxu0 0.0
        %2809 = vmatprep.subr.mxu0 0.0
        %2810 = vmatpush1.msra.mxu0 0.0
        %2811 = vmatprep.subr.mxu0 0.0
        %2812 = vmatpush1.msra.mxu0 0.0
        %2813 = vmatprep.subr.mxu0 0.0
        %2814 = vmatpush1.msra.mxu0 0.0
        %2815 = vmatprep.subr.mxu0 0.0
        %2816 = vmatpush1.msra.mxu0 0.0
        %2817 = vmatprep.subr.mxu0 0.0
        %2818 = vmatpush1.msra.mxu0 0.0
        %2819 = vmatprep.subr.mxu0 0.0
        %2820 = vmatpush1.msra.mxu0 0.0
        %2821 = vmatprep.subr.mxu0 0.0
        %2822 = vmatpush1.msra.mxu0 0.0
        %2823 = vmatprep.subr.mxu0 0.0
        %2824 = vmatpush1.msra.mxu0 0.0
        %2825 = vmatprep.subr.mxu0 0.0
        %2826 = vmatpush1.msra.mxu0 0.0
        %2827 = vmatprep.subr.mxu0 0.0
        %2828 = vmatpush1.msra.mxu0 0.0
        %2829 = vmatprep.subr.mxu0 0.0
        %2830 = vmatpush1.msra.mxu0 0.0
        %2831 = vmatprep.subr.mxu0 0.0
        %2832 = vmatpush1.msra.mxu0 0.0
        %2833 = vmatprep.subr.mxu0 0.0
        %2834 = vmatpush1.msra.mxu0 0.0
        %2835 = vmatprep.mubr.f32.mxu0 0.0
        %2836 = vmatmul.mubr.f32.gmra.mrb[0].mxu0 %v2765
        %v2837 = vpop.f32.mrb[0].mxu0
        %v2838 = vadd.f32 %v2762, %v2837
        %v2839 = vpop.f32.mrb[0].mxu0
        %2840 = vdwg.mxu0
        %v2841 = vxor.u32 %v2838, 2147483648
        %v2842 = vmul.f32 %v2841, 1.442695
        %v2843 = vpow.pop %v2842
        %v2844 = vadd.f32 %v2843, 1.0
        %v2845 = vrcp.pop %v2844
        %v2846 = vmul.f32 1.0, %v2845
        %v2847 = vlaneseq
        %v2848 = vshrl.u32 %v2847, 7
        %v2849 = vsub.s32 0, %v2848
        %v2850 = vrot.slane %v2846, %v2849
        %v2851 = vmul.f32 %v2575, %v2850
        %v2852 = vmul.f32 %v2576, %v2850
        %v2853 = vmul.f32 %v2577, %v2850
        %v2854 = vmul.f32 %v2578, %v2850
        %v2855 = vmul.f32 %v2579, %v2850
        %v2856 = vmul.f32 %v2580, %v2850
        %v2857 = vmul.f32 %v2581, %v2850
        %v2858 = vmul.f32 %v2582, %v2850
        %v2859 = vmul.f32 %v2583, %v2850
        %v2860 = vmul.f32 %v2584, %v2850
        %v2861 = vmul.f32 %v2585, %v2850
        %v2862 = vmul.f32 %v2586, %v2850
        %v2863 = vmul.f32 %v2587, %v2850
        %v2864 = vmul.f32 %v2588, %v2850
        %v2865 = vmul.f32 %v2589, %v2850
        %v2866 = vmul.f32 %v2590, %v2850
        %v2867 = vmul.f32 %v2591, %v2850
        %v2868 = vmul.f32 %v2592, %v2850
        %v2869 = vmul.f32 %v2593, %v2850
        %v2870 = vmul.f32 %v2594, %v2850
        %v2871 = vmul.f32 %v2595, %v2850
        %v2872 = vmul.f32 %v2596, %v2850
        %v2873 = vmul.f32 %v2597, %v2850
        %v2874 = vmul.f32 %v2598, %v2850
        %v2875 = vmul.f32 %v2599, %v2850
        %v2876 = vmul.f32 %v2600, %v2850
        %v2877 = vmul.f32 %v2601, %v2850
        %v2878 = vmul.f32 %v2602, %v2850
        %v2879 = vmul.f32 %v2603, %v2850
        %v2880 = vmul.f32 %v2604, %v2850
        %v2881 = vmul.f32 %v2605, %v2850
        %v2882 = vmul.f32 %v2606, %v2850
        %v2884 = vsel %vm502, %v2851, 0
        %v2887 = vsel %vm502, %v2852, 0
        %v2890 = vsel %vm502, %v2853, 0
        %v2893 = vsel %vm502, %v2854, 0
        %v2896 = vsel %vm502, %v2855, 0
        %v2899 = vsel %vm502, %v2856, 0
        %v2902 = vsel %vm502, %v2857, 0
        %v2905 = vsel %vm502, %v2858, 0
        %v2908 = vsel %vm502, %v2859, 0
        %v2911 = vsel %vm502, %v2860, 0
        %v2914 = vsel %vm502, %v2861, 0
        %v2917 = vsel %vm502, %v2862, 0
        %v2920 = vsel %vm502, %v2863, 0
        %v2923 = vsel %vm502, %v2864, 0
        %v2926 = vsel %vm502, %v2865, 0
        %v2929 = vsel %vm502, %v2866, 0
        %v2932 = vsel %vm502, %v2867, 0
        %v2935 = vsel %vm502, %v2868, 0
        %v2938 = vsel %vm502, %v2869, 0
        %v2941 = vsel %vm502, %v2870, 0
        %v2944 = vsel %vm502, %v2871, 0
        %v2947 = vsel %vm502, %v2872, 0
        %v2950 = vsel %vm502, %v2873, 0
        %v2953 = vsel %vm502, %v2874, 0
        %v2956 = vsel %vm502, %v2875, 0
        %v2959 = vsel %vm502, %v2876, 0
        %v2962 = vsel %vm502, %v2877, 0
        %v2965 = vsel %vm502, %v2878, 0
        %v2968 = vsel %vm502, %v2879, 0
        %v2971 = vsel %vm502, %v2880, 0
        %v2974 = vsel %vm502, %v2881, 0
        %v2977 = vsel %vm502, %v2882, 0
        %2979 = vmatprep.subr.mxu0 0.0
        %2980 = vmatpush1.msra.mxu0 %v490
        %2981 = vmatprep.subr.mxu0 0.0
        %2982 = vmatpush1.msra.mxu0 %v491
        %2983 = vmatprep.subr.mxu0 0.0
        %2984 = vmatpush1.msra.mxu0 %v492
        %2985 = vmatprep.subr.mxu0 0.0
        %2986 = vmatpush1.msra.mxu0 %v493
        %2987 = vmatprep.subr.mxu0 0.0
        %2988 = vmatpush1.msra.mxu0 %v494
        %2989 = vmatprep.subr.mxu0 0.0
        %2990 = vmatpush1.msra.mxu0 %v495
        %2991 = vmatprep.subr.mxu0 0.0
        %2992 = vmatpush1.msra.mxu0 %v496
        %2993 = vmatprep.subr.mxu0 0.0
        %2994 = vmatpush1.msra.mxu0 %v497
        %2995 = vmatprep.subr.mxu0 0.0
        %2996 = vmatpush1.msra.mxu0 0.0
        %2997 = vmatprep.subr.mxu0 0.0
        %2998 = vmatpush1.msra.mxu0 0.0
        %2999 = vmatprep.subr.mxu0 0.0
        %3000 = vmatpush1.msra.mxu0 0.0
        %3001 = vmatprep.subr.mxu0 0.0
        %3002 = vmatpush1.msra.mxu0 0.0
        %3003 = vmatprep.subr.mxu0 0.0
        %3004 = vmatpush1.msra.mxu0 0.0
        %3005 = vmatprep.subr.mxu0 0.0
        %3006 = vmatpush1.msra.mxu0 0.0
        %3007 = vmatprep.subr.mxu0 0.0
        %3008 = vmatpush1.msra.mxu0 0.0
        %3009 = vmatprep.subr.mxu0 0.0
        %3010 = vmatpush1.msra.mxu0 0.0
        %3011 = vmatprep.subr.mxu0 0.0
        %3012 = vmatpush1.msra.mxu0 0.0
        %3013 = vmatprep.subr.mxu0 0.0
        %3014 = vmatpush1.msra.mxu0 0.0
        %3015 = vmatprep.subr.mxu0 0.0
        %3016 = vmatpush1.msra.mxu0 0.0
        %3017 = vmatprep.subr.mxu0 0.0
        %3018 = vmatpush1.msra.mxu0 0.0
        %3019 = vmatprep.subr.mxu0 0.0
        %3020 = vmatpush1.msra.mxu0 0.0
        %3021 = vmatprep.subr.mxu0 0.0
        %3022 = vmatpush1.msra.mxu0 0.0
        %3023 = vmatprep.subr.mxu0 0.0
        %3024 = vmatpush1.msra.mxu0 0.0
        %3025 = vmatprep.subr.mxu0 0.0
        %3026 = vmatpush1.msra.mxu0 0.0
        %3027 = vmatprep.subr.mxu0 0.0
        %3028 = vmatpush1.msra.mxu0 0.0
        %3029 = vmatprep.subr.mxu0 0.0
        %3030 = vmatpush1.msra.mxu0 0.0
        %3031 = vmatprep.subr.mxu0 0.0
        %3032 = vmatpush1.msra.mxu0 0.0
        %3033 = vmatprep.subr.mxu0 0.0
        %3034 = vmatpush1.msra.mxu0 0.0
        %3035 = vmatprep.subr.mxu0 0.0
        %3036 = vmatpush1.msra.mxu0 0.0
        %3037 = vmatprep.subr.mxu0 0.0
        %3038 = vmatpush1.msra.mxu0 0.0
        %3039 = vmatprep.subr.mxu0 0.0
        %3040 = vmatpush1.msra.mxu0 0.0
        %3041 = vmatprep.subr.mxu0 0.0
        %3042 = vmatpush1.msra.mxu0 0.0
        %3043 = vmatprep.mubr.f32.mxu0 0.0
        %3044 = vmatmul.mubr.f32.gmra.mrb[0].mxu0 %v2884
        %v3045 = vpop.f32.mrb[0].mxu0
        %v3046 = vadd.f32 0.0, %v3045
        %v3047 = vpop.f32.mrb[0].mxu0
        %3048 = vmatprep.mubr.f32.mxu0 0.0
        %3049 = vmatmul.mubr.f32.gmra.mrb[0].mxu0 %v2887
        %v3050 = vpop.f32.mrb[0].mxu0
        %v3051 = vadd.f32 0.0, %v3050
        %v3052 = vpop.f32.mrb[0].mxu0
        %3053 = vmatprep.mubr.f32.mxu0 0.0
        %3054 = vmatmul.mubr.f32.gmra.mrb[0].mxu0 %v2890
        %v3055 = vpop.f32.mrb[0].mxu0
        %v3056 = vadd.f32 0.0, %v3055
        %v3057 = vpop.f32.mrb[0].mxu0
        %3058 = vmatprep.mubr.f32.mxu0 0.0
        %3059 = vmatmul.mubr.f32.gmra.mrb[0].mxu0 %v2893
        %v3060 = vpop.f32.mrb[0].mxu0
        %v3061 = vadd.f32 0.0, %v3060
        %v3062 = vpop.f32.mrb[0].mxu0
        %3063 = vmatprep.mubr.f32.mxu0 0.0
        %3064 = vmatmul.mubr.f32.gmra.mrb[0].mxu0 %v2896
        %v3065 = vpop.f32.mrb[0].mxu0
        %v3066 = vadd.f32 0.0, %v3065
        %v3067 = vpop.f32.mrb[0].mxu0
        %3068 = vmatprep.mubr.f32.mxu0 0.0
        %3069 = vmatmul.mubr.f32.gmra.mrb[0].mxu0 %v2899
        %v3070 = vpop.f32.mrb[0].mxu0
        %v3071 = vadd.f32 0.0, %v3070
        %v3072 = vpop.f32.mrb[0].mxu0
        %3073 = vmatprep.mubr.f32.mxu0 0.0
        %3074 = vmatmul.mubr.f32.gmra.mrb[0].mxu0 %v2902
        %v3075 = vpop.f32.mrb[0].mxu0
        %v3076 = vadd.f32 0.0, %v3075
        %v3077 = vpop.f32.mrb[0].mxu0
        %3078 = vmatprep.mubr.f32.mxu0 0.0
        %3079 = vmatmul.mubr.f32.gmra.mrb[0].mxu0 %v2905
        %v3080 = vpop.f32.mrb[0].mxu0
        %v3081 = vadd.f32 0.0, %v3080
        %v3082 = vpop.f32.mrb[0].mxu0
        %3083 = vmatprep.mubr.f32.mxu0 0.0
        %3084 = vmatmul.mubr.f32.gmra.mrb[0].mxu0 %v2908
        %v3085 = vpop.f32.mrb[0].mxu0
        %v3086 = vadd.f32 0.0, %v3085
        %v3087 = vpop.f32.mrb[0].mxu0
        %3088 = vmatprep.mubr.f32.mxu0 0.0
        %3089 = vmatmul.mubr.f32.gmra.mrb[0].mxu0 %v2911
        %v3090 = vpop.f32.mrb[0].mxu0
        %v3091 = vadd.f32 0.0, %v3090
        %v3092 = vpop.f32.mrb[0].mxu0
        %3093 = vmatprep.mubr.f32.mxu0 0.0
        %3094 = vmatmul.mubr.f32.gmra.mrb[0].mxu0 %v2914
        %v3095 = vpop.f32.mrb[0].mxu0
        %v3096 = vadd.f32 0.0, %v3095
        %v3097 = vpop.f32.mrb[0].mxu0
        %3098 = vmatprep.mubr.f32.mxu0 0.0
        %3099 = vmatmul.mubr.f32.gmra.mrb[0].mxu0 %v2917
        %v3100 = vpop.f32.mrb[0].mxu0
        %v3101 = vadd.f32 0.0, %v3100
        %v3102 = vpop.f32.mrb[0].mxu0
        %3103 = vmatprep.mubr.f32.mxu0 0.0
        %3104 = vmatmul.mubr.f32.gmra.mrb[0].mxu0 %v2920
        %v3105 = vpop.f32.mrb[0].mxu0
        %v3106 = vadd.f32 0.0, %v3105
        %v3107 = vpop.f32.mrb[0].mxu0
        %3108 = vmatprep.mubr.f32.mxu0 0.0
        %3109 = vmatmul.mubr.f32.gmra.mrb[0].mxu0 %v2923
        %v3110 = vpop.f32.mrb[0].mxu0
        %v3111 = vadd.f32 0.0, %v3110
        %v3112 = vpop.f32.mrb[0].mxu0
        %3113 = vmatprep.mubr.f32.mxu0 0.0
        %3114 = vmatmul.mubr.f32.gmra.mrb[0].mxu0 %v2926
        %v3115 = vpop.f32.mrb[0].mxu0
        %v3116 = vadd.f32 0.0, %v3115
        %v3117 = vpop.f32.mrb[0].mxu0
        %3118 = vmatprep.mubr.f32.mxu0 0.0
        %3119 = vmatmul.mubr.f32.gmra.mrb[0].mxu0 %v2929
        %v3120 = vpop.f32.mrb[0].mxu0
        %v3121 = vadd.f32 0.0, %v3120
        %v3122 = vpop.f32.mrb[0].mxu0
        %3123 = vmatprep.mubr.f32.mxu0 0.0
        %3124 = vmatmul.mubr.f32.gmra.mrb[0].mxu0 %v2932
        %v3125 = vpop.f32.mrb[0].mxu0
        %v3126 = vadd.f32 0.0, %v3125
        %v3127 = vpop.f32.mrb[0].mxu0
        %3128 = vmatprep.mubr.f32.mxu0 0.0
        %3129 = vmatmul.mubr.f32.gmra.mrb[0].mxu0 %v2935
        %v3130 = vpop.f32.mrb[0].mxu0
        %v3131 = vadd.f32 0.0, %v3130
        %v3132 = vpop.f32.mrb[0].mxu0
        %3133 = vmatprep.mubr.f32.mxu0 0.0
        %3134 = vmatmul.mubr.f32.gmra.mrb[0].mxu0 %v2938
        %v3135 = vpop.f32.mrb[0].mxu0
        %v3136 = vadd.f32 0.0, %v3135
        %v3137 = vpop.f32.mrb[0].mxu0
        %3138 = vmatprep.mubr.f32.mxu0 0.0
        %3139 = vmatmul.mubr.f32.gmra.mrb[0].mxu0 %v2941
        %v3140 = vpop.f32.mrb[0].mxu0
        %v3141 = vadd.f32 0.0, %v3140
        %v3142 = vpop.f32.mrb[0].mxu0
        %3143 = vmatprep.mubr.f32.mxu0 0.0
        %3144 = vmatmul.mubr.f32.gmra.mrb[0].mxu0 %v2944
        %v3145 = vpop.f32.mrb[0].mxu0
        %v3146 = vadd.f32 0.0, %v3145
        %v3147 = vpop.f32.mrb[0].mxu0
        %3148 = vmatprep.mubr.f32.mxu0 0.0
        %3149 = vmatmul.mubr.f32.gmra.mrb[0].mxu0 %v2947
        %v3150 = vpop.f32.mrb[0].mxu0
        %v3151 = vadd.f32 0.0, %v3150
        %v3152 = vpop.f32.mrb[0].mxu0
        %3153 = vmatprep.mubr.f32.mxu0 0.0
        %3154 = vmatmul.mubr.f32.gmra.mrb[0].mxu0 %v2950
        %v3155 = vpop.f32.mrb[0].mxu0
        %v3156 = vadd.f32 0.0, %v3155
        %v3157 = vpop.f32.mrb[0].mxu0
        %3158 = vmatprep.mubr.f32.mxu0 0.0
        %3159 = vmatmul.mubr.f32.gmra.mrb[0].mxu0 %v2953
        %v3160 = vpop.f32.mrb[0].mxu0
        %v3161 = vadd.f32 0.0, %v3160
        %v3162 = vpop.f32.mrb[0].mxu0
        %3163 = vmatprep.mubr.f32.mxu0 0.0
        %3164 = vmatmul.mubr.f32.gmra.mrb[0].mxu0 %v2956
        %v3165 = vpop.f32.mrb[0].mxu0
        %v3166 = vadd.f32 0.0, %v3165
        %v3167 = vpop.f32.mrb[0].mxu0
        %3168 = vmatprep.mubr.f32.mxu0 0.0
        %3169 = vmatmul.mubr.f32.gmra.mrb[0].mxu0 %v2959
        %v3170 = vpop.f32.mrb[0].mxu0
        %v3171 = vadd.f32 0.0, %v3170
        %v3172 = vpop.f32.mrb[0].mxu0
        %3173 = vmatprep.mubr.f32.mxu0 0.0
        %3174 = vmatmul.mubr.f32.gmra.mrb[0].mxu0 %v2962
        %v3175 = vpop.f32.mrb[0].mxu0
        %v3176 = vadd.f32 0.0, %v3175
        %v3177 = vpop.f32.mrb[0].mxu0
        %3178 = vmatprep.mubr.f32.mxu0 0.0
        %3179 = vmatmul.mubr.f32.gmra.mrb[0].mxu0 %v2965
        %v3180 = vpop.f32.mrb[0].mxu0
        %v3181 = vadd.f32 0.0, %v3180
        %v3182 = vpop.f32.mrb[0].mxu0
        %3183 = vmatprep.mubr.f32.mxu0 0.0
        %3184 = vmatmul.mubr.f32.gmra.mrb[0].mxu0 %v2968
        %v3185 = vpop.f32.mrb[0].mxu0
        %v3186 = vadd.f32 0.0, %v3185
        %v3187 = vpop.f32.mrb[0].mxu0
        %3188 = vmatprep.mubr.f32.mxu0 0.0
        %3189 = vmatmul.mubr.f32.gmra.mrb[0].mxu0 %v2971
        %v3190 = vpop.f32.mrb[0].mxu0
        %v3191 = vadd.f32 0.0, %v3190
        %v3192 = vpop.f32.mrb[0].mxu0
        %3193 = vmatprep.mubr.f32.mxu0 0.0
        %3194 = vmatmul.mubr.f32.gmra.mrb[0].mxu0 %v2974
        %v3195 = vpop.f32.mrb[0].mxu0
        %v3196 = vadd.f32 0.0, %v3195
        %v3197 = vpop.f32.mrb[0].mxu0
        %3198 = vmatprep.mubr.f32.mxu0 0.0
        %3199 = vmatmul.mubr.f32.gmra.mrb[0].mxu0 %v2977
        %v3200 = vpop.f32.mrb[0].mxu0
        %v3201 = vadd.f32 0.0, %v3200
        %v3202 = vpop.f32.mrb[0].mxu0
        %3203 = vdwg.mxu0
        %v3205 = vlaneseq
        %v3206 = vshrl.u32 %v3205, 7
        %v3207 = vsub.s32 0, %v3206
        %v3208 = vrot.slane %v488, %v3207
        %v3210 = vmul.f32 %v3046, %v3208
        %v3211 = vmul.f32 %v3051, %v3208
        %v3212 = vmul.f32 %v3056, %v3208
        %v3213 = vmul.f32 %v3061, %v3208
        %v3214 = vmul.f32 %v3066, %v3208
        %v3215 = vmul.f32 %v3071, %v3208
        %v3216 = vmul.f32 %v3076, %v3208
        %v3217 = vmul.f32 %v3081, %v3208
        %v3218 = vmul.f32 %v3086, %v3208
        %v3219 = vmul.f32 %v3091, %v3208
        %v3220 = vmul.f32 %v3096, %v3208
        %v3221 = vmul.f32 %v3101, %v3208
        %v3222 = vmul.f32 %v3106, %v3208
        %v3223 = vmul.f32 %v3111, %v3208
        %v3224 = vmul.f32 %v3116, %v3208
        %v3225 = vmul.f32 %v3121, %v3208
        %v3226 = vmul.f32 %v3126, %v3208
        %v3227 = vmul.f32 %v3131, %v3208
        %v3228 = vmul.f32 %v3136, %v3208
        %v3229 = vmul.f32 %v3141, %v3208
        %v3230 = vmul.f32 %v3146, %v3208
        %v3231 = vmul.f32 %v3151, %v3208
        %v3232 = vmul.f32 %v3156, %v3208
        %v3233 = vmul.f32 %v3161, %v3208
        %v3234 = vmul.f32 %v3166, %v3208
        %v3235 = vmul.f32 %v3171, %v3208
        %v3236 = vmul.f32 %v3176, %v3208
        %v3237 = vmul.f32 %v3181, %v3208
        %v3238 = vmul.f32 %v3186, %v3208
        %v3239 = vmul.f32 %v3191, %v3208
        %v3240 = vmul.f32 %v3196, %v3208
        %v3241 = vmul.f32 %v3201, %v3208
        %v3243 = vlaneseq
        %v3244 = vshrl.u32 %v3243, 7
        %v3245 = vsub.s32 0, %v3244
        %v3246 = vrot.slane %v489, %v3245
        %v3248 = vadd.f32 %v3210, %v3246
        %v3249 = vadd.f32 %v3211, %v3246
        %v3250 = vadd.f32 %v3212, %v3246
        %v3251 = vadd.f32 %v3213, %v3246
        %v3252 = vadd.f32 %v3214, %v3246
        %v3253 = vadd.f32 %v3215, %v3246
        %v3254 = vadd.f32 %v3216, %v3246
        %v3255 = vadd.f32 %v3217, %v3246
        %v3256 = vadd.f32 %v3218, %v3246
        %v3257 = vadd.f32 %v3219, %v3246
        %v3258 = vadd.f32 %v3220, %v3246
        %v3259 = vadd.f32 %v3221, %v3246
        %v3260 = vadd.f32 %v3222, %v3246
        %v3261 = vadd.f32 %v3223, %v3246
        %v3262 = vadd.f32 %v3224, %v3246
        %v3263 = vadd.f32 %v3225, %v3246
        %v3264 = vadd.f32 %v3226, %v3246
        %v3265 = vadd.f32 %v3227, %v3246
        %v3266 = vadd.f32 %v3228, %v3246
        %v3267 = vadd.f32 %v3229, %v3246
        %v3268 = vadd.f32 %v3230, %v3246
        %v3269 = vadd.f32 %v3231, %v3246
        %v3270 = vadd.f32 %v3232, %v3246
        %v3271 = vadd.f32 %v3233, %v3246
        %v3272 = vadd.f32 %v3234, %v3246
        %v3273 = vadd.f32 %v3235, %v3246
        %v3274 = vadd.f32 %v3236, %v3246
        %v3275 = vadd.f32 %v3237, %v3246
        %v3276 = vadd.f32 %v3238, %v3246
        %v3277 = vadd.f32 %v3239, %v3246
        %v3278 = vadd.f32 %v3240, %v3246
        %v3279 = vadd.f32 %v3241, %v3246
        %v3280 = vld [vmem:[%s441] sm:$0xff]
        %v3281 = vld [vmem:[%s441 + $0x8] sm:$0xff]
        %v3282 = vld [vmem:[%s441 + $0x10] sm:$0xff]
        %v3283 = vld [vmem:[%s441 + $0x18] sm:$0xff]
        %v3284 = vld [vmem:[%s441 + $0x20] sm:$0xff]
        %v3285 = vld [vmem:[%s441 + $0x28] sm:$0xff]
        %v3286 = vld [vmem:[%s441 + $0x30] sm:$0xff]
        %v3287 = vld [vmem:[%s441 + $0x38] sm:$0xff]
        %v3288 = vld [vmem:[%s441 + $0x40] sm:$0xff]
        %v3289 = vld [vmem:[%s441 + $0x48] sm:$0xff]
        %v3290 = vld [vmem:[%s441 + $0x50] sm:$0xff]
        %v3291 = vld [vmem:[%s441 + $0x58] sm:$0xff]
        %v3292 = vld [vmem:[%s441 + $0x60] sm:$0xff]
        %v3293 = vld [vmem:[%s441 + $0x68] sm:$0xff]
        %v3294 = vld [vmem:[%s441 + $0x70] sm:$0xff]
        %v3295 = vld [vmem:[%s441 + $0x78] sm:$0xff]
        %v3296 = vld [vmem:[%s441 + $0x80] sm:$0xff]
        %v3297 = vld [vmem:[%s441 + $0x88] sm:$0xff]
        %v3298 = vld [vmem:[%s441 + $0x90] sm:$0xff]
        %v3299 = vld [vmem:[%s441 + $0x98] sm:$0xff]
        %v3300 = vld [vmem:[%s441 + $0xa0] sm:$0xff]
        %v3301 = vld [vmem:[%s441 + $0xa8] sm:$0xff]
        %v3302 = vld [vmem:[%s441 + $0xb0] sm:$0xff]
        %v3303 = vld [vmem:[%s441 + $0xb8] sm:$0xff]
        %v3304 = vld [vmem:[%s441 + $0xc0] sm:$0xff]
        %v3305 = vld [vmem:[%s441 + $0xc8] sm:$0xff]
        %v3306 = vld [vmem:[%s441 + $0xd0] sm:$0xff]
        %v3307 = vld [vmem:[%s441 + $0xd8] sm:$0xff]
        %v3308 = vld [vmem:[%s441 + $0xe0] sm:$0xff]
        %v3309 = vld [vmem:[%s441 + $0xe8] sm:$0xff]
        %v3310 = vld [vmem:[%s441 + $0xf0] sm:$0xff]
        %v3311 = vld [vmem:[%s441 + $0xf8] sm:$0xff]
        %v3312 = vadd.f32 %v3248, %v3280
        %v3313 = vadd.f32 %v3249, %v3281
        %v3314 = vadd.f32 %v3250, %v3282
        %v3315 = vadd.f32 %v3251, %v3283
        %v3316 = vadd.f32 %v3252, %v3284
        %v3317 = vadd.f32 %v3253, %v3285
        %v3318 = vadd.f32 %v3254, %v3286
        %v3319 = vadd.f32 %v3255, %v3287
        %v3320 = vadd.f32 %v3256, %v3288
        %v3321 = vadd.f32 %v3257, %v3289
        %v3322 = vadd.f32 %v3258, %v3290
        %v3323 = vadd.f32 %v3259, %v3291
        %v3324 = vadd.f32 %v3260, %v3292
        %v3325 = vadd.f32 %v3261, %v3293
        %v3326 = vadd.f32 %v3262, %v3294
        %v3327 = vadd.f32 %v3263, %v3295
        %v3328 = vadd.f32 %v3264, %v3296
        %v3329 = vadd.f32 %v3265, %v3297
        %v3330 = vadd.f32 %v3266, %v3298
        %v3331 = vadd.f32 %v3267, %v3299
        %v3332 = vadd.f32 %v3268, %v3300
        %v3333 = vadd.f32 %v3269, %v3301
        %v3334 = vadd.f32 %v3270, %v3302
        %v3335 = vadd.f32 %v3271, %v3303
        %v3336 = vadd.f32 %v3272, %v3304
        %v3337 = vadd.f32 %v3273, %v3305
        %v3338 = vadd.f32 %v3274, %v3306
        %v3339 = vadd.f32 %v3275, %v3307
        %v3340 = vadd.f32 %v3276, %v3308
        %v3341 = vadd.f32 %v3277, %v3309
        %v3342 = vadd.f32 %v3278, %v3310
        %v3343 = vadd.f32 %v3279, %v3311
        %3344 = vst.msk [vmem:[%s485] sm:$0xff] %vm580, %v3312
        %3345 = vst.msk [vmem:[%s485 + $0x8] sm:$0xff] %vm580, %v3313
        %3346 = vst.msk [vmem:[%s485 + $0x10] sm:$0xff] %vm580, %v3314
        %3347 = vst.msk [vmem:[%s485 + $0x18] sm:$0xff] %vm580, %v3315
        %3348 = vst.msk [vmem:[%s485 + $0x20] sm:$0xff] %vm580, %v3316
        %3349 = vst.msk [vmem:[%s485 + $0x28] sm:$0xff] %vm580, %v3317
        %3350 = vst.msk [vmem:[%s485 + $0x30] sm:$0xff] %vm580, %v3318
        %3351 = vst.msk [vmem:[%s485 + $0x38] sm:$0xff] %vm580, %v3319
        %3352 = vst.msk [vmem:[%s485 + $0x40] sm:$0xff] %vm580, %v3320
        %3353 = vst.msk [vmem:[%s485 + $0x48] sm:$0xff] %vm580, %v3321
        %3354 = vst.msk [vmem:[%s485 + $0x50] sm:$0xff] %vm580, %v3322
        %3355 = vst.msk [vmem:[%s485 + $0x58] sm:$0xff] %vm580, %v3323
        %3356 = vst.msk [vmem:[%s485 + $0x60] sm:$0xff] %vm580, %v3324
        %3357 = vst.msk [vmem:[%s485 + $0x68] sm:$0xff] %vm580, %v3325
        %3358 = vst.msk [vmem:[%s485 + $0x70] sm:$0xff] %vm580, %v3326
        %3359 = vst.msk [vmem:[%s485 + $0x78] sm:$0xff] %vm580, %v3327
        %3360 = vst.msk [vmem:[%s485 + $0x80] sm:$0xff] %vm580, %v3328
        %3361 = vst.msk [vmem:[%s485 + $0x88] sm:$0xff] %vm580, %v3329
        %3362 = vst.msk [vmem:[%s485 + $0x90] sm:$0xff] %vm580, %v3330
        %3363 = vst.msk [vmem:[%s485 + $0x98] sm:$0xff] %vm580, %v3331
        %3364 = vst.msk [vmem:[%s485 + $0xa0] sm:$0xff] %vm580, %v3332
        %3365 = vst.msk [vmem:[%s485 + $0xa8] sm:$0xff] %vm580, %v3333
        %3366 = vst.msk [vmem:[%s485 + $0xb0] sm:$0xff] %vm580, %v3334
        %3367 = vst.msk [vmem:[%s485 + $0xb8] sm:$0xff] %vm580, %v3335
        %3368 = vst.msk [vmem:[%s485 + $0xc0] sm:$0xff] %vm580, %v3336
        %3369 = vst.msk [vmem:[%s485 + $0xc8] sm:$0xff] %vm580, %v3337
        %3370 = vst.msk [vmem:[%s485 + $0xd0] sm:$0xff] %vm580, %v3338
        %3371 = vst.msk [vmem:[%s485 + $0xd8] sm:$0xff] %vm580, %v3339
        %3372 = vst.msk [vmem:[%s485 + $0xe0] sm:$0xff] %vm580, %v3340
        %3373 = vst.msk [vmem:[%s485 + $0xe8] sm:$0xff] %vm580, %v3341
        %3374 = vst.msk [vmem:[%s485 + $0xf0] sm:$0xff] %vm580, %v3342
        %3375 = vst.msk [vmem:[%s485 + $0xf8] sm:$0xff] %vm580, %v3343
        %s3376 = sand.u32 %s338, 1
        %s3377 = scalar_lea.sflag [#allocation6], %s3376
        %s3378 = sand.u32 %s338, 1
        %s3379 = smul.addr %s3378, 256
        %s3380 = scalar_lea.vmem [#allocation7], %s3379
        // Predicated region
        $region81: #{tpu_custom_call.1} parent=75 // pred_check
          %p3381 = pneg %p348
        $region82: #{tpu_custom_call.1} parent=75 // pred_check_branch
          %3383 = sbr.rel (%p3381) target = $region84
        $region83: #{tpu_custom_call.1} parent=75 // pred_region
          %s3385 = ssub.s32 4096, 4096
          %3386 = vsyncadd %s3377, %s3385
          %s3387 = smul.addr %s31, 32
          %s3388 = smul.addr %s3387, 128
          %s3389 = scalar_lea.hbm %s14, %s3388
          %s3390 = sshll.u32 %s3380, 4
          %s3391 = int_to_ptr.vmem [resolvable:$true] %s3390
          %3396 = dma.vmem_to_hbm [thread:$0]  %s3391, 4096, %s3389, %s3377, 128, 128, 8
        $region84: #{tpu_custom_call.1} parent=75 // pred_fallthru
          _
      $region76: #{tpu_custom_call.1} parent=5 // pred_fallthru
        _
      %p3397 = scmp.le.s32.totalorder 2, %s26
      // Predicated region
      $region85: #{tpu_custom_call.1} parent=5 // pred_check
        %p3398 = pneg %p3397
      $region86: #{tpu_custom_call.1} parent=5 // pred_check_branch
        %3400 = sbr.rel (%p3398) target = $region88
      $region87: #{tpu_custom_call.1} parent=5 // pred_region
        %s3401 = ssub.s32 %s26, 2
        // Predicated region
        $region89: #{tpu_custom_call.1} parent=87 // pred_check
          %p3402 = pneg %p354
        $region90: #{tpu_custom_call.1} parent=87 // pred_check_branch
          %3404 = sbr.rel (%p3402) target = $region92
        $region91: #{tpu_custom_call.1} parent=87 // pred_region
          %s3405 = sand.u32 %s339, 1
          %s3406 = scalar_lea.sflag [#allocation6], %s3405
          %s3407 = sand.u32 %s339, 1
          %s3408 = smul.addr %s3407, 256
          %s3409 = scalar_lea.vmem [#allocation7], %s3408
          %3410 = dma.done %s3406, 4096
        $region92: #{tpu_custom_call.1} parent=87 // pred_fallthru
          _
      $region88: #{tpu_custom_call.1} parent=5 // pred_fallthru
        _
    $region6: #{tpu_custom_call.1} parent=1 // loop_footer
      %s30 = sadd.s32 1, %s26
    $region7: #{tpu_custom_call.1} parent=1 // loop_footer_branch
      %25 = sbr.rel target = $region3
    $region8: #{tpu_custom_call.1} parent=1 // loop_exit
      _
    %3411 = vsyncpa [#allocation5], 1
    %s3412 = scalar_lea.sflag [#allocation5], 1
    %3413 = vsyncpa %s3412, 1
    %3414 = vsyncpa [#allocation6], 1
    %s3415 = scalar_lea.sflag [#allocation6], 1
    %3416 = vsyncpa %s3415, 1

</llo_original>
